<compile_context>
chip_gen: v7x
topology: tpu7x:2x2x1
jax: 0.10.0
libtpu: 0.0.40
codegen_flags: <defaults>
</compile_context>

<pallas_src>
import functools
import math

import jax
import jax.numpy as jnp
from jax.experimental import pallas as pl
from jax.experimental.pallas import tpu as pltpu

_SELU_ALPHA = 1.6732632423543772
_SELU_SCALE = 1.0507009873554805
_CB = 128                      # lane-dense channel block


def _selu(x):
    # clamp the exp argument so the unselected branch never overflows
    return _SELU_SCALE * jnp.where(
        x > 0, x, _SELU_ALPHA * (jnp.exp(jnp.minimum(x, 0.0)) - 1.0))


def _round_up(x, m):
    return ((x + m - 1) // m) * m


@functools.cache
def _pltpu_roll_sign():
    """Resolve pltpu.roll's shift-sign convention once (+1 == jnp.roll semantics)."""
    def probe(x_ref, o_ref):
        o_ref[...] = pltpu.roll(x_ref[...], 1, axis=1)

    x = jnp.broadcast_to(jnp.arange(8, dtype=jnp.float32)[None, :, None], (1, 8, 128))
    try:
        y = pl.pallas_call(
            probe, out_shape=jax.ShapeDtypeStruct((1, 8, 128), jnp.float32))(x)
        return 1 if float(y[0, 0, 0]) == 7.0 else -1
    except Exception:            # conservative fallback: assume jnp.roll convention
        return 1


# --------------------------------------------------------------------- fused kernel

def _convmodule_kernel(x_ref, w_ref, o_ref, xz_ref, *, d, H, W, roll_sign):
    """One (batch, channel-block) grid step, fully fused ConvModule.

    x_ref : (1, H, W, CB)   unpadded input block
    w_ref : (4, 3, CB)      packed taps [conv1 (1,3), conv1 (3,1), conv2 (3,1), conv2 (1,3)]
    o_ref : (1, H, W, CB)
    xz_ref: (Hf, Wf, CB)    VMEM scratch, Hf = H+4d, Wf = round_up(W+2d, 8)
    """
    Wf = xz_ref.shape[1]

    # Build the zero-padded frame in VMEM (interior at rows [2d, 2d+H), cols [d, d+W)).
    # Padding is done here instead of in HBM; the margins act as the convs' zero padding.
    xz_ref[...] = jnp.zeros(xz_ref.shape, xz_ref.dtype)
    xz_ref[2 * d:2 * d + H, d:d + W, :] = x_ref[0]
    xz = xz_ref[...]

    w = w_ref[...]                                       # (4, 3, CB)

    def roll_w(t, k):                                    # XLU rotate along W (sublane axis)
        return pltpu.roll(t, (roll_sign * k) % Wf, axis=1)

    def conv_w(t, taps):                                 # dilated (1,3): same width, valid cols [d, d+W)
        return taps[0] * roll_w(t, d) + taps[1] * t + taps[2] * roll_w(t, -d)

    def conv_h(t, taps, out_rows):                       # dilated (3,1): leading-dim slices, narrows 2d
        return (taps[0] * t[0:out_rows]
                + taps[1] * t[d:d + out_rows]
                + taps[2] * t[2 * d:2 * d + out_rows])

    # conv1: (1,3) + SELU, then (3,1) + SELU.  x1e rows cover original coords [-d, H+d).
    t1 = _selu(conv_w(xz, w[0]))                         # (Hf,   Wf, CB)
    x1e = _selu(conv_h(t1, w[1], H + 2 * d))             # (H+2d, Wf, CB)

    # conv2 convolves x1 with ZERO padding (PyTorch pads x1 itself), so zero x1e's halo with
    # a tiny (rows, Wf, 1) f32 mask broadcast along the 128 lanes.
    rows = H + 2 * d
    r = jax.lax.broadcasted_iota(jnp.int32, (rows, Wf, 1), 0)
    c = jax.lax.broadcasted_iota(jnp.int32, (rows, Wf, 1), 1)
    inside = ((r >= d) & (r < d + H) & (c >= d) & (c < d + W)).astype(jnp.float32)
    x1m = x1e * inside                                   # == x1 zero-padded by d

    # conv2: (3,1) + SELU, then (1,3) with no activation.
    t2 = _selu(conv_h(x1m, w[2], H))                     # (H, Wf, CB)
    x2 = conv_w(t2, w[3])                                # (H, Wf, CB), valid cols [d, d+W)

    # Tail: x2 + x1 + residual, SELU.  Dropout(p=0.25) is identity in eval mode.
    s = x2 + x1e[d:d + H]                                # (H, Wf, CB)
    s = roll_w(s, -d)[:, 0:W, :]                         # aligned extraction of cols [d, d+W)
    o_ref[0] = _selu(s + x_ref[0]).astype(o_ref.dtype)   # residual from the aligned raw block


# --------------------------------------------------------------------- wrappers

def conv_module_forward_nhwc(x_nhwc, w_packed, *, dilation):
    """Fused ConvModule forward (eval), NHWC in / NHWC out — the fast path (no layout ops)."""
    d = int(dilation)
    N, H, W, C = x_nhwc.shape
    Cp = _round_up(C, _CB)
    Hf, Wf = H + 4 * d, _round_up(W + 2 * d, 8)

    x = x_nhwc.astype(jnp.float32)
    w = w_packed.astype(jnp.float32)
    if Cp != C:                  # lane-dense: pad channels to a multiple of 128 (fuses away)
        x = jnp.pad(x, ((0, 0), (0, 0), (0, 0), (0, Cp - C)))
        w = jnp.pad(w, ((0, 0), (0, 0), (0, Cp - C)))

    out = pl.pallas_call(
        functools.partial(_convmodule_kernel, d=d, H=H, W=W,
                          roll_sign=_pltpu_roll_sign()),
        out_shape=jax.ShapeDtypeStruct((N, H, W, Cp), jnp.float32),
        grid=(N, Cp // _CB),
        in_specs=[
            pl.BlockSpec((1, H, W, _CB), lambda n, c: (n, 0, 0, c)),
            pl.BlockSpec((4, 3, _CB), lambda n, c: (0, 0, c)),
        ],
        out_specs=pl.BlockSpec((1, H, W, _CB), lambda n, c: (n, 0, 0, c)),
        scratch_shapes=[pltpu.VMEM((Hf, Wf, _CB), jnp.float32)],
        compiler_params=pltpu.CompilerParams(
            dimension_semantics=("parallel", "parallel")),
    )(x, w)
    return out[..., :C] if Cp != C else out


def conv_module_forward(x_nchw, w_packed, *, dilation):
    """NCHW (PyTorch-layout) entry point.

    The NCHW<->NHWC transposes here are pure layout plumbing to match the PyTorch interface
    (the channel pad/slice fuse into them).  Keep the surrounding model NHWC end-to-end and
    call conv_module_forward_nhwc directly to drop them entirely.
    """
    x = jnp.transpose(x_nchw, (0, 2, 3, 1))
    y = conv_module_forward_nhwc(x, w_packed, dilation=dilation)
    return jnp.transpose(y, (0, 3, 1, 2))


# --------------------------------------------------------------------- parameters

def build_params(key, channels):
    """Depthwise weights packed as ONE (4, 3, C) tap table (transposes hoisted out of forward).

    index 0: conv1 (1,3) taps along W   index 1: conv1 (3,1) taps along H
    index 2: conv2 (3,1) taps along H   index 3: conv2 (1,3) taps along W
    """
    std = math.sqrt(2.0 / 3.0)                           # kaiming-like for a 3-tap depthwise conv
    return jax.random.normal(key, (4, 3, channels), jnp.float32) * std


# --------------------------------------------------------------------- pure-JAX reference

def _reference_convmodule(x_nchw, w_packed, dilation):
    d = int(dilation)
    x = jnp.transpose(x_nchw, (0, 2, 3, 1)).astype(jnp.float32)
    w = w_packed.astype(jnp.float32)

    def dw_w(t, taps, act):
        Wd = t.shape[2]
        tp = jnp.pad(t, ((0, 0), (0, 0), (d, d), (0, 0)))
        y = sum(tp[:, :, j * d:j * d + Wd, :] * taps[j] for j in range(3))
        return _selu(y) if act else y

    def dw_h(t, taps, act):
        Hd = t.shape[1]
        tp = jnp.pad(t, ((0, 0), (d, d), (0, 0), (0, 0)))
        y = sum(tp[:, j * d:j * d + Hd, :, :] * taps[j] for j in range(3))
        return _selu(y) if act else y

    residual = x
    x1 = dw_h(dw_w(x, w[0], True), w[1], True)
    x2 = dw_w(dw_h(x1, w[2], True), w[3], False)
    out = _selu(x2 + x1 + residual)
    return jnp.transpose(out, (0, 3, 1, 2))


# --------------------------------------------------------------------- main

if __name__ == "__main__":
    key = jax.random.PRNGKey(0)

    # (N, C, H, W, dilation): the MiniNet-like primary config, plus two configs covering the
    # review's untested paths (C a multiple of 128 -> multi channel-block grid; widths that
    # are not multiples of 8; other dilations; C that needs lane padding).
    configs = [
        (2, 96, 16, 16, 2),
        (1, 256, 12, 20, 1),
        (2, 64, 8, 24, 3),
    ]
    for i, (N, C, H, W, dilation) in enumerate(configs):
        k_params, k_x = jax.random.split(jax.random.fold_in(key, i))
        w_packed = build_params(k_params, C)
        x = jax.random.normal(k_x, (N, C, H, W), jnp.float32)   # NCHW like the PyTorch module

        fwd = jax.jit(functools.partial(conv_module_forward, dilation=dilation))
        out = jax.block_until_ready(fwd(x, w_packed))

        assert out.shape == (N, C, H, W), (out.shape, (N, C, H, W))
        assert bool(jnp.all(jnp.isfinite(out)))

        ref = jax.block_until_ready(_reference_convmodule(x, w_packed, dilation))
        err = float(jnp.max(jnp.abs(out - ref)))
        tol = 1e-3 + 1e-3 * float(jnp.max(jnp.abs(ref)))
        assert err < tol, (i, err, tol)

    print("KERNEL_OK")
</pallas_src>

<mosaic_0001>
module attributes {stable_mosaic.version = 11 : i64} {
  func.func @_convmodule_kernel(%arg0: i32, %arg1: i32, %arg2: memref<1x16x16x128xf32, #tpu.memory_space<vmem>>, %arg3: memref<4x3x128xf32, #tpu.memory_space<vmem>>, %arg4: memref<1x16x16x128xf32, #tpu.memory_space<vmem>>, %arg5: memref<24x24x128xf32, #tpu.memory_space<vmem>>) attributes {dimension_semantics = [#tpu.dimension_semantics<parallel>, #tpu.dimension_semantics<parallel>], iteration_bounds = array<i64: 2, 1>, scalar_prefetch = 0 : i64, scratch_operands = 1 : i64, tpu.core_type = #tpu.core_type<tc>, window_params = [{transform_indices = @transform_0, window_bounds = array<i64: 1, 16, 16, 128>}, {transform_indices = @transform_1, window_bounds = array<i64: 4, 3, 128>}, {transform_indices = @transform_2, window_bounds = array<i64: 1, 16, 16, 128>}]} {
    %cst = arith.constant 0.000000e+00 : f32
    %0 = vector.broadcast %cst : f32 to vector<24x24x128xf32>
    %c0 = arith.constant 0 : index
    %c0_0 = arith.constant 0 : index
    %c0_1 = arith.constant 0 : index
    %1 = vector.load %arg5[%c0, %c0_0, %c0_1] : memref<24x24x128xf32, #tpu.memory_space<vmem>>, vector<24x24x128xf32>
    tpu.vector_store %arg5[%c0, %c0_0, %c0_1], %0 {strides = array<i32>} : memref<24x24x128xf32, #tpu.memory_space<vmem>>, vector<24x24x128xf32>,
    %c0_2 = arith.constant 0 : index
    %c0_3 = arith.constant 0 : index
    %c0_4 = arith.constant 0 : index
    %c0_5 = arith.constant 0 : index
    %2 = vector.load %arg2[%c0_2, %c0_3, %c0_4, %c0_5] : memref<1x16x16x128xf32, #tpu.memory_space<vmem>>, vector<1x16x16x128xf32>
    %3 = vector.shape_cast %2 : vector<1x16x16x128xf32> to vector<16x16x128xf32>
    %c4 = arith.constant 4 : index
    %c2 = arith.constant 2 : index
    %c0_6 = arith.constant 0 : index
    %4 = vector.load %arg5[%c4, %c2, %c0_6] : memref<24x24x128xf32, #tpu.memory_space<vmem>>, vector<16x16x128xf32>
    tpu.vector_store %arg5[%c4, %c2, %c0_6], %3 {strides = array<i32>} : memref<24x24x128xf32, #tpu.memory_space<vmem>>, vector<16x16x128xf32>,
    %c0_7 = arith.constant 0 : index
    %c0_8 = arith.constant 0 : index
    %c0_9 = arith.constant 0 : index
    %5 = vector.load %arg5[%c0_7, %c0_8, %c0_9] : memref<24x24x128xf32, #tpu.memory_space<vmem>>, vector<24x24x128xf32>
    %c0_10 = arith.constant 0 : index
    %c0_11 = arith.constant 0 : index
    %c0_12 = arith.constant 0 : index
    %6 = vector.load %arg3[%c0_10, %c0_11, %c0_12] : memref<4x3x128xf32, #tpu.memory_space<vmem>>, vector<4x3x128xf32>
    %7 = vector.extract_strided_slice %6 {offsets = [0, 0, 0], sizes = [1, 3, 128], strides = [1, 1, 1]} : vector<4x3x128xf32> to vector<1x3x128xf32>
    %8 = vector.shape_cast %7 : vector<1x3x128xf32> to vector<3x128xf32>
    %9 = vector.extract_strided_slice %8 {offsets = [0, 0], sizes = [1, 128], strides = [1, 1]} : vector<3x128xf32> to vector<1x128xf32>
    %10 = vector.shape_cast %9 : vector<1x128xf32> to vector<128xf32>
    %c2_i32 = arith.constant 2 : i32
    %11 = tpu.dynamic_rotate %5 by %c2_i32 dim 1 : vector<24x24x128xf32>, i32 -> vector<24x24x128xf32>
    %12 = vector.shape_cast %10 : vector<128xf32> to vector<1x1x128xf32>
    %13 = vector.broadcast %12 : vector<1x1x128xf32> to vector<24x24x128xf32>
    %14 = arith.mulf %13, %11 : vector<24x24x128xf32>
    %15 = vector.extract_strided_slice %8 {offsets = [1, 0], sizes = [1, 128], strides = [1, 1]} : vector<3x128xf32> to vector<1x128xf32>
    %16 = vector.shape_cast %15 : vector<1x128xf32> to vector<128xf32>
    %17 = vector.shape_cast %16 : vector<128xf32> to vector<1x1x128xf32>
    %18 = vector.broadcast %17 : vector<1x1x128xf32> to vector<24x24x128xf32>
    %19 = arith.mulf %18, %5 : vector<24x24x128xf32>
    %20 = arith.addf %14, %19 : vector<24x24x128xf32>
    %21 = vector.extract_strided_slice %8 {offsets = [2, 0], sizes = [1, 128], strides = [1, 1]} : vector<3x128xf32> to vector<1x128xf32>
    %22 = vector.shape_cast %21 : vector<1x128xf32> to vector<128xf32>
    %c22_i32 = arith.constant 22 : i32
    %23 = tpu.dynamic_rotate %5 by %c22_i32 dim 1 : vector<24x24x128xf32>, i32 -> vector<24x24x128xf32>
    %24 = vector.shape_cast %22 : vector<128xf32> to vector<1x1x128xf32>
    %25 = vector.broadcast %24 : vector<1x1x128xf32> to vector<24x24x128xf32>
    %26 = arith.mulf %25, %23 : vector<24x24x128xf32>
    %27 = arith.addf %20, %26 : vector<24x24x128xf32>
    %cst_13 = arith.constant 0.000000e+00 : f32
    %28 = vector.broadcast %cst_13 : f32 to vector<24x24x128xf32>
    %29 = arith.cmpf ogt, %27, %28 : vector<24x24x128xf32>
    %cst_14 = arith.constant 0.000000e+00 : f32
    %30 = vector.broadcast %cst_14 : f32 to vector<24x24x128xf32>
    %31 = arith.minimumf %27, %30 : vector<24x24x128xf32>
    %32 = math.exp %31 : vector<24x24x128xf32>
    %cst_15 = arith.constant 1.000000e+00 : f32
    %33 = vector.broadcast %cst_15 : f32 to vector<24x24x128xf32>
    %34 = arith.subf %32, %33 : vector<24x24x128xf32>
    %cst_16 = arith.constant 1.67326319 : f32
    %35 = vector.broadcast %cst_16 : f32 to vector<24x24x128xf32>
    %36 = arith.mulf %35, %34 : vector<24x24x128xf32>
    %37 = arith.select %29, %27, %36 : vector<24x24x128xi1>, vector<24x24x128xf32>
    %cst_17 = arith.constant 1.05070102 : f32
    %38 = vector.broadcast %cst_17 : f32 to vector<24x24x128xf32>
    %39 = arith.mulf %38, %37 : vector<24x24x128xf32>
    %40 = vector.extract_strided_slice %6 {offsets = [1, 0, 0], sizes = [1, 3, 128], strides = [1, 1, 1]} : vector<4x3x128xf32> to vector<1x3x128xf32>
    %41 = vector.shape_cast %40 : vector<1x3x128xf32> to vector<3x128xf32>
    %42 = vector.extract_strided_slice %41 {offsets = [0, 0], sizes = [1, 128], strides = [1, 1]} : vector<3x128xf32> to vector<1x128xf32>
    %43 = vector.shape_cast %42 : vector<1x128xf32> to vector<128xf32>
    %44 = vector.extract_strided_slice %39 {offsets = [0, 0, 0], sizes = [20, 24, 128], strides = [1, 1, 1]} : vector<24x24x128xf32> to vector<20x24x128xf32>
    %45 = vector.shape_cast %43 : vector<128xf32> to vector<1x1x128xf32>
    %46 = vector.broadcast %45 : vector<1x1x128xf32> to vector<20x24x128xf32>
    %47 = arith.mulf %46, %44 : vector<20x24x128xf32>
    %48 = vector.extract_strided_slice %41 {offsets = [1, 0], sizes = [1, 128], strides = [1, 1]} : vector<3x128xf32> to vector<1x128xf32>
    %49 = vector.shape_cast %48 : vector<1x128xf32> to vector<128xf32>
    %50 = vector.extract_strided_slice %39 {offsets = [2, 0, 0], sizes = [20, 24, 128], strides = [1, 1, 1]} : vector<24x24x128xf32> to vector<20x24x128xf32>
    %51 = vector.shape_cast %49 : vector<128xf32> to vector<1x1x128xf32>
    %52 = vector.broadcast %51 : vector<1x1x128xf32> to vector<20x24x128xf32>
    %53 = arith.mulf %52, %50 : vector<20x24x128xf32>
    %54 = arith.addf %47, %53 : vector<20x24x128xf32>
    %55 = vector.extract_strided_slice %41 {offsets = [2, 0], sizes = [1, 128], strides = [1, 1]} : vector<3x128xf32> to vector<1x128xf32>
    %56 = vector.shape_cast %55 : vector<1x128xf32> to vector<128xf32>
    %57 = vector.extract_strided_slice %39 {offsets = [4, 0, 0], sizes = [20, 24, 128], strides = [1, 1, 1]} : vector<24x24x128xf32> to vector<20x24x128xf32>
    %58 = vector.shape_cast %56 : vector<128xf32> to vector<1x1x128xf32>
    %59 = vector.broadcast %58 : vector<1x1x128xf32> to vector<20x24x128xf32>
    %60 = arith.mulf %59, %57 : vector<20x24x128xf32>
    %61 = arith.addf %54, %60 : vector<20x24x128xf32>
    %cst_18 = arith.constant 0.000000e+00 : f32
    %62 = vector.broadcast %cst_18 : f32 to vector<20x24x128xf32>
    %63 = arith.cmpf ogt, %61, %62 : vector<20x24x128xf32>
    %cst_19 = arith.constant 0.000000e+00 : f32
    %64 = vector.broadcast %cst_19 : f32 to vector<20x24x128xf32>
    %65 = arith.minimumf %61, %64 : vector<20x24x128xf32>
    %66 = math.exp %65 : vector<20x24x128xf32>
    %cst_20 = arith.constant 1.000000e+00 : f32
    %67 = vector.broadcast %cst_20 : f32 to vector<20x24x128xf32>
    %68 = arith.subf %66, %67 : vector<20x24x128xf32>
    %cst_21 = arith.constant 1.67326319 : f32
    %69 = vector.broadcast %cst_21 : f32 to vector<20x24x128xf32>
    %70 = arith.mulf %69, %68 : vector<20x24x128xf32>
    %71 = arith.select %63, %61, %70 : vector<20x24x128xi1>, vector<20x24x128xf32>
    %cst_22 = arith.constant 1.05070102 : f32
    %72 = vector.broadcast %cst_22 : f32 to vector<20x24x128xf32>
    %73 = arith.mulf %72, %71 : vector<20x24x128xf32>
    %74 = tpu.iota {dimensions = array<i32: 0>} : vector<20x24x1xi32>
    %75 = tpu.iota {dimensions = array<i32: 1>} : vector<20x24x1xi32>
    %c2_i32_23 = arith.constant 2 : i32
    %76 = vector.broadcast %c2_i32_23 : i32 to vector<20x24x1xi32>
    %77 = arith.cmpi sge, %74, %76 : vector<20x24x1xi32>
    %c18_i32 = arith.constant 18 : i32
    %78 = vector.broadcast %c18_i32 : i32 to vector<20x24x1xi32>
    %79 = arith.cmpi slt, %74, %78 : vector<20x24x1xi32>
    %80 = arith.andi %77, %79 : vector<20x24x1xi1>
    %c2_i32_24 = arith.constant 2 : i32
    %81 = vector.broadcast %c2_i32_24 : i32 to vector<20x24x1xi32>
    %82 = arith.cmpi sge, %75, %81 : vector<20x24x1xi32>
    %83 = arith.andi %80, %82 : vector<20x24x1xi1>
    %c18_i32_25 = arith.constant 18 : i32
    %84 = vector.broadcast %c18_i32_25 : i32 to vector<20x24x1xi32>
    %85 = arith.cmpi slt, %75, %84 : vector<20x24x1xi32>
    %86 = arith.andi %83, %85 : vector<20x24x1xi1>
    %87 = arith.extui %86 : vector<20x24x1xi1> to vector<20x24x1xi32>
    %88 = arith.sitofp %87 : vector<20x24x1xi32> to vector<20x24x1xf32>
    %89 = vector.broadcast %88 : vector<20x24x1xf32> to vector<20x24x128xf32>
    %90 = arith.mulf %73, %89 : vector<20x24x128xf32>
    %91 = vector.extract_strided_slice %6 {offsets = [2, 0, 0], sizes = [1, 3, 128], strides = [1, 1, 1]} : vector<4x3x128xf32> to vector<1x3x128xf32>
    %92 = vector.shape_cast %91 : vector<1x3x128xf32> to vector<3x128xf32>
    %93 = vector.extract_strided_slice %92 {offsets = [0, 0], sizes = [1, 128], strides = [1, 1]} : vector<3x128xf32> to vector<1x128xf32>
    %94 = vector.shape_cast %93 : vector<1x128xf32> to vector<128xf32>
    %95 = vector.extract_strided_slice %90 {offsets = [0, 0, 0], sizes = [16, 24, 128], strides = [1, 1, 1]} : vector<20x24x128xf32> to vector<16x24x128xf32>
    %96 = vector.shape_cast %94 : vector<128xf32> to vector<1x1x128xf32>
    %97 = vector.broadcast %96 : vector<1x1x128xf32> to vector<16x24x128xf32>
    %98 = arith.mulf %97, %95 : vector<16x24x128xf32>
    %99 = vector.extract_strided_slice %92 {offsets = [1, 0], sizes = [1, 128], strides = [1, 1]} : vector<3x128xf32> to vector<1x128xf32>
    %100 = vector.shape_cast %99 : vector<1x128xf32> to vector<128xf32>
    %101 = vector.extract_strided_slice %90 {offsets = [2, 0, 0], sizes = [16, 24, 128], strides = [1, 1, 1]} : vector<20x24x128xf32> to vector<16x24x128xf32>
    %102 = vector.shape_cast %100 : vector<128xf32> to vector<1x1x128xf32>
    %103 = vector.broadcast %102 : vector<1x1x128xf32> to vector<16x24x128xf32>
    %104 = arith.mulf %103, %101 : vector<16x24x128xf32>
    %105 = arith.addf %98, %104 : vector<16x24x128xf32>
    %106 = vector.extract_strided_slice %92 {offsets = [2, 0], sizes = [1, 128], strides = [1, 1]} : vector<3x128xf32> to vector<1x128xf32>
    %107 = vector.shape_cast %106 : vector<1x128xf32> to vector<128xf32>
    %108 = vector.extract_strided_slice %90 {offsets = [4, 0, 0], sizes = [16, 24, 128], strides = [1, 1, 1]} : vector<20x24x128xf32> to vector<16x24x128xf32>
    %109 = vector.shape_cast %107 : vector<128xf32> to vector<1x1x128xf32>
    %110 = vector.broadcast %109 : vector<1x1x128xf32> to vector<16x24x128xf32>
    %111 = arith.mulf %110, %108 : vector<16x24x128xf32>
    %112 = arith.addf %105, %111 : vector<16x24x128xf32>
    %cst_26 = arith.constant 0.000000e+00 : f32
    %113 = vector.broadcast %cst_26 : f32 to vector<16x24x128xf32>
    %114 = arith.cmpf ogt, %112, %113 : vector<16x24x128xf32>
    %cst_27 = arith.constant 0.000000e+00 : f32
    %115 = vector.broadcast %cst_27 : f32 to vector<16x24x128xf32>
    %116 = arith.minimumf %112, %115 : vector<16x24x128xf32>
    %117 = math.exp %116 : vector<16x24x128xf32>
    %cst_28 = arith.constant 1.000000e+00 : f32
    %118 = vector.broadcast %cst_28 : f32 to vector<16x24x128xf32>
    %119 = arith.subf %117, %118 : vector<16x24x128xf32>
    %cst_29 = arith.constant 1.67326319 : f32
    %120 = vector.broadcast %cst_29 : f32 to vector<16x24x128xf32>
    %121 = arith.mulf %120, %119 : vector<16x24x128xf32>
    %122 = arith.select %114, %112, %121 : vector<16x24x128xi1>, vector<16x24x128xf32>
    %cst_30 = arith.constant 1.05070102 : f32
    %123 = vector.broadcast %cst_30 : f32 to vector<16x24x128xf32>
    %124 = arith.mulf %123, %122 : vector<16x24x128xf32>
    %125 = vector.extract_strided_slice %6 {offsets = [3, 0, 0], sizes = [1, 3, 128], strides = [1, 1, 1]} : vector<4x3x128xf32> to vector<1x3x128xf32>
    %126 = vector.shape_cast %125 : vector<1x3x128xf32> to vector<3x128xf32>
    %127 = vector.extract_strided_slice %126 {offsets = [0, 0], sizes = [1, 128], strides = [1, 1]} : vector<3x128xf32> to vector<1x128xf32>
    %128 = vector.shape_cast %127 : vector<1x128xf32> to vector<128xf32>
    %c2_i32_31 = arith.constant 2 : i32
    %129 = tpu.dynamic_rotate %124 by %c2_i32_31 dim 1 : vector<16x24x128xf32>, i32 -> vector<16x24x128xf32>
    %130 = vector.shape_cast %128 : vector<128xf32> to vector<1x1x128xf32>
    %131 = vector.broadcast %130 : vector<1x1x128xf32> to vector<16x24x128xf32>
    %132 = arith.mulf %131, %129 : vector<16x24x128xf32>
    %133 = vector.extract_strided_slice %126 {offsets = [1, 0], sizes = [1, 128], strides = [1, 1]} : vector<3x128xf32> to vector<1x128xf32>
    %134 = vector.shape_cast %133 : vector<1x128xf32> to vector<128xf32>
    %135 = vector.shape_cast %134 : vector<128xf32> to vector<1x1x128xf32>
    %136 = vector.broadcast %135 : vector<1x1x128xf32> to vector<16x24x128xf32>
    %137 = arith.mulf %136, %124 : vector<16x24x128xf32>
    %138 = arith.addf %132, %137 : vector<16x24x128xf32>
    %139 = vector.extract_strided_slice %126 {offsets = [2, 0], sizes = [1, 128], strides = [1, 1]} : vector<3x128xf32> to vector<1x128xf32>
    %140 = vector.shape_cast %139 : vector<1x128xf32> to vector<128xf32>
    %c22_i32_32 = arith.constant 22 : i32
    %141 = tpu.dynamic_rotate %124 by %c22_i32_32 dim 1 : vector<16x24x128xf32>, i32 -> vector<16x24x128xf32>
    %142 = vector.shape_cast %140 : vector<128xf32> to vector<1x1x128xf32>
    %143 = vector.broadcast %142 : vector<1x1x128xf32> to vector<16x24x128xf32>
    %144 = arith.mulf %143, %141 : vector<16x24x128xf32>
    %145 = arith.addf %138, %144 : vector<16x24x128xf32>
    %146 = vector.extract_strided_slice %73 {offsets = [2, 0, 0], sizes = [16, 24, 128], strides = [1, 1, 1]} : vector<20x24x128xf32> to vector<16x24x128xf32>
    %147 = arith.addf %145, %146 : vector<16x24x128xf32>
    %c22_i32_33 = arith.constant 22 : i32
    %148 = tpu.dynamic_rotate %147 by %c22_i32_33 dim 1 : vector<16x24x128xf32>, i32 -> vector<16x24x128xf32>
    %149 = vector.extract_strided_slice %148 {offsets = [0, 0, 0], sizes = [16, 16, 128], strides = [1, 1, 1]} : vector<16x24x128xf32> to vector<16x16x128xf32>
    %c0_34 = arith.constant 0 : index
    %c0_35 = arith.constant 0 : index
    %c0_36 = arith.constant 0 : index
    %c0_37 = arith.constant 0 : index
    %150 = vector.load %arg2[%c0_34, %c0_35, %c0_36, %c0_37] : memref<1x16x16x128xf32, #tpu.memory_space<vmem>>, vector<1x16x16x128xf32>
    %151 = vector.shape_cast %150 : vector<1x16x16x128xf32> to vector<16x16x128xf32>
    %152 = arith.addf %149, %151 : vector<16x16x128xf32>
    %cst_38 = arith.constant 0.000000e+00 : f32
    %153 = vector.broadcast %cst_38 : f32 to vector<16x16x128xf32>
    %154 = arith.cmpf ogt, %152, %153 : vector<16x16x128xf32>
    %cst_39 = arith.constant 0.000000e+00 : f32
    %155 = vector.broadcast %cst_39 : f32 to vector<16x16x128xf32>
    %156 = arith.minimumf %152, %155 : vector<16x16x128xf32>
    %157 = math.exp %156 : vector<16x16x128xf32>
    %cst_40 = arith.constant 1.000000e+00 : f32
    %158 = vector.broadcast %cst_40 : f32 to vector<16x16x128xf32>
    %159 = arith.subf %157, %158 : vector<16x16x128xf32>
    %cst_41 = arith.constant 1.67326319 : f32
    %160 = vector.broadcast %cst_41 : f32 to vector<16x16x128xf32>
    %161 = arith.mulf %160, %159 : vector<16x16x128xf32>
    %162 = arith.select %154, %152, %161 : vector<16x16x128xi1>, vector<16x16x128xf32>
    %cst_42 = arith.constant 1.05070102 : f32
    %163 = vector.broadcast %cst_42 : f32 to vector<16x16x128xf32>
    %164 = arith.mulf %163, %162 : vector<16x16x128xf32>
    %c0_43 = arith.constant 0 : index
    %c0_44 = arith.constant 0 : index
    %c0_45 = arith.constant 0 : index
    %c0_46 = arith.constant 0 : index
    %165 = vector.load %arg4[%c0_43, %c0_44, %c0_45, %c0_46] : memref<1x16x16x128xf32, #tpu.memory_space<vmem>>, vector<1x16x16x128xf32>
    %166 = vector.shape_cast %165 : vector<1x16x16x128xf32> to vector<16x16x128xf32>
    %167 = vector.shape_cast %164 : vector<16x16x128xf32> to vector<1x16x16x128xf32>
    tpu.vector_store %arg4[%c0_43, %c0_44, %c0_45, %c0_46], %167 {strides = array<i32>} : memref<1x16x16x128xf32, #tpu.memory_space<vmem>>, vector<1x16x16x128xf32>,
    return
  }
  func.func @transform_0(%arg0: i32, %arg1: i32) -> (i32, i32, i32, i32) {
    %c0_i32 = arith.constant 0 : i32
    %c0_i32_0 = arith.constant 0 : i32
    %c0_i32_1 = arith.constant 0 : i32
    return %arg0, %c0_i32, %c0_i32_0, %arg1 : i32, i32, i32, i32
  }
  func.func @transform_1(%arg0: i32, %arg1: i32) -> (i32, i32, i32) {
    %c0_i32 = arith.constant 0 : i32
    %c0_i32_0 = arith.constant 0 : i32
    %c0_i32_1 = arith.constant 0 : i32
    return %c0_i32, %c0_i32_0, %arg1 : i32, i32, i32
  }
  func.func @transform_2(%arg0: i32, %arg1: i32) -> (i32, i32, i32, i32) {
    %c0_i32 = arith.constant 0 : i32
    %c0_i32_0 = arith.constant 0 : i32
    %c0_i32_1 = arith.constant 0 : i32
    return %arg0, %c0_i32, %c0_i32_0, %arg1 : i32, i32, i32, i32
  }
}

</mosaic_0001>

<llo_original>
// kernel: conv_module_forward.1
$region0: #{conv_module_forward.1}
  #allocation0 [shape = 'u32[]', space=smem, size = 0x4, offset = 0x4, fixed_abs, tag = 'smem constant byte address 0x4 - core index']
  #allocation1 [shape = 'u32[144,128]{1,0:T(1,128)}', space=vmem, size = 0x12000, scoped, tag = 'internal scratch']
  #allocation2 [shape = 'f32[24,24,128]{2,1,0:T(8,128)}', space=vmem, size = 0x48000, scoped, tag = 'scratch operand']
  %s0 = inlined_call_operand.vmem [shape: f32[2,16,16,128], index: 0, kind: input, shape index: {}]
  %s1 = inlined_call_operand.vmem [shape: f32[4,3,128], index: 1, kind: input, shape index: {}]
  %s2 = inlined_call_operand.vmem [shape: f32[2,16,16,128], index: 2, kind: output, shape index: {}]
  %s3 = sld [smem:[#allocation0]]
  $region41: #{conv_module_forward.1} parent=0
    _
  %s5 = ssub.s32 1, %s3
  %s6 = scalar_select 0, %s5, %s3
  loop: start=0, step=1, limit=4
  $region2: #{conv_module_forward.1} parent=0 // loop_pre_header
    _
  $region3: #{conv_module_forward.1} parent=0 // loop_header
    %s8 = sphi 0, %s12
    %p9 = scmp.ge.s32.totalorder %s8, 4
    %s15 = sphi 0, %s27
    %s16 = sphi 0, %s23
    %s17 = sphi 0, %s15
    %s18 = sphi 0, %s16
    %s19 = sphi 0, %s17
    %s20 = sphi 0, %s18
    %s32 = sphi 0, %s34
    %s35 = sphi 0, %s32
    %s36 = sphi 0, %s35
    %s52 = sphi 0, %s36
    %s58 = sphi 0, %s60
    %s61 = sphi 0, %s58
    %s62 = sphi 0, %s61
    %s78 = sphi 0, %s62
    %s86 = sphi 0, %s88
    %s89 = sphi 0, %s86
    %s90 = sphi 0, %s89
    %s106 = sphi 0, %s90
  $region4: #{conv_module_forward.1} parent=0 // loop_header_branch
    %11 = sbr.rel (%p9) target = $region8
  $region5: #{conv_module_forward.1} parent=0 // loop_body
    %s13 = ssub.s32 %s8, 1
    %s14 = ssub.s32 %s8, 2
    %s21 = sadd.s32 1, %s16
    %p22 = scmp.ge.s32.totalorder %s21, 1
    %s23 = scalar_select %p22, 0, %s21
    %s24 = sadd.s32 1, %s15
    %s25 = scalar_select %p22, %s24, %s15
    %p26 = scmp.ge.s32.totalorder %s25, 2
    %s27 = scalar_select %p26, 0, %s25
    %s28 = ssub.s32 %s15, %s27
    %s29 = ssub.s32 %s16, %s23
    %s30 = sor.u32 %s28, %s29
    %p31 = scmp.eq.s32.totalorder %s30, 0
    %s33 = sadd.s32 %s32, 1
    %s34 = scalar_select %p31, %s32, %s33
    %p37 = pneg %p31
    %p38 = scmp.eq.s32.totalorder %s8, 1
    %p39 = por %p37, %p38
    %p40 = scmp.ne.s32.totalorder %s32, %s35
    %p41 = scmp.eq.s32.totalorder %s8, 0
    %p42 = por %p40, %p41
    %p43 = scmp.ne.s32.totalorder %s32, %s35
    %p44 = scmp.eq.s32.totalorder %s13, 1
    %p45 = por %p43, %p44
    %p46 = scmp.ne.s32.totalorder %s35, %s36
    %p47 = scmp.eq.s32.totalorder %s13, 0
    %p48 = por %p46, %p47
    %p49 = scmp.ne.s32.totalorder %s35, %s36
    %p50 = scmp.eq.s32.totalorder %s14, 1
    %p51 = por %p49, %p50
    %p53 = scmp.ne.s32.totalorder %s36, %s52
    %p54 = scmp.eq.s32.totalorder %s14, 0
    %p55 = por %p53, %p54
    %s56 = ssub.s32 %s16, %s23
    %p57 = scmp.eq.s32.totalorder %s56, 0
    %s59 = sadd.s32 %s58, 1
    %s60 = scalar_select %p57, %s58, %s59
    %p63 = pneg %p57
    %p64 = scmp.eq.s32.totalorder %s8, 1
    %p65 = por %p63, %p64
    %p66 = scmp.ne.s32.totalorder %s58, %s61
    %p67 = scmp.eq.s32.totalorder %s8, 0
    %p68 = por %p66, %p67
    %p69 = scmp.ne.s32.totalorder %s58, %s61
    %p70 = scmp.eq.s32.totalorder %s13, 1
    %p71 = por %p69, %p70
    %p72 = scmp.ne.s32.totalorder %s61, %s62
    %p73 = scmp.eq.s32.totalorder %s13, 0
    %p74 = por %p72, %p73
    %p75 = scmp.ne.s32.totalorder %s61, %s62
    %p76 = scmp.eq.s32.totalorder %s14, 1
    %p77 = por %p75, %p76
    %p79 = scmp.ne.s32.totalorder %s62, %s78
    %p80 = scmp.eq.s32.totalorder %s14, 0
    %p81 = por %p79, %p80
    %s82 = ssub.s32 %s15, %s27
    %s83 = ssub.s32 %s16, %s23
    %s84 = sor.u32 %s82, %s83
    %p85 = scmp.eq.s32.totalorder %s84, 0
    %s87 = sadd.s32 %s86, 1
    %s88 = scalar_select %p85, %s86, %s87
    %p91 = pneg %p85
    %p92 = scmp.eq.s32.totalorder %s8, 1
    %p93 = por %p91, %p92
    %p94 = scmp.ne.s32.totalorder %s86, %s89
    %p95 = scmp.eq.s32.totalorder %s8, 0
    %p96 = por %p94, %p95
    %p97 = scmp.ne.s32.totalorder %s86, %s89
    %p98 = scmp.eq.s32.totalorder %s13, 1
    %p99 = por %p97, %p98
    %p100 = scmp.ne.s32.totalorder %s89, %s90
    %p101 = scmp.eq.s32.totalorder %s13, 0
    %p102 = por %p100, %p101
    %p103 = scmp.ne.s32.totalorder %s89, %s90
    %p104 = scmp.eq.s32.totalorder %s14, 1
    %p105 = por %p103, %p104
    %p107 = scmp.ne.s32.totalorder %s90, %s106
    %p108 = scmp.eq.s32.totalorder %s14, 0
    %p109 = por %p107, %p108
    %p110 = scmp.le.s32.totalorder 1, %s8
    %p111 = scmp.lt.s32.totalorder %s8, 3
    %p112 = pnand %p110, %p111
    %p113 = pneg %p112
    // Predicated region
    $region9: #{conv_module_forward.1} parent=5 // pred_check
      _
    $region10: #{conv_module_forward.1} parent=5 // pred_check_branch
      %115 = sbr.rel (%p112) target = $region12
    $region11: #{conv_module_forward.1} parent=5 // pred_region
      %s116 = ssub.s32 %s8, 1
      // Predicated region
      $region13: #{conv_module_forward.1} parent=11 // pred_check
        %p117 = pneg %p74
      $region14: #{conv_module_forward.1} parent=11 // pred_check_branch
        %119 = sbr.rel (%p117) target = $region16
      $region15: #{conv_module_forward.1} parent=11 // pred_region
        %p120 = scmp.lt.s32.totalorder %s18, 0
        %s121 = scalar_select %p120, %s18, 0
        %s122 = smul.addr %s121, 4
        %s123 = scalar_lea.vmem %s1, %s122
      $region16: #{conv_module_forward.1} parent=11 // pred_fallthru
        _
    $region12: #{conv_module_forward.1} parent=5 // pred_fallthru
      _
    %p124 = scmp.lt.s32.totalorder %s8, 2
    // Predicated region
    $region17: #{conv_module_forward.1} parent=5 // pred_check
      %p125 = pneg %p124
    $region18: #{conv_module_forward.1} parent=5 // pred_check_branch
      %127 = sbr.rel (%p125) target = $region20
    $region19: #{conv_module_forward.1} parent=5 // pred_region
      // Predicated region
      $region21: #{conv_module_forward.1} parent=19 // pred_check
        %p128 = pneg %p42
      $region22: #{conv_module_forward.1} parent=19 // pred_check_branch
        %130 = sbr.rel (%p128) target = $region24
      $region23: #{conv_module_forward.1} parent=19 // pred_region
        %p131 = scmp.lt.s32.totalorder %s15, 1
        %s132 = scalar_select %p131, %s15, 1
        %p133 = scmp.lt.s32.totalorder %s16, 0
        %s134 = scalar_select %p133, %s16, 0
        %s135 = smul.addr %s132, 32
        %s136 = sadd.s32 %s134, %s135
        %s137 = smul.addr %s136, 8
        %s138 = scalar_lea.vmem %s0, %s137
      $region24: #{conv_module_forward.1} parent=19 // pred_fallthru
        _
    $region20: #{conv_module_forward.1} parent=5 // pred_fallthru
      _
    %p139 = scmp.le.s32.totalorder 1, %s8
    %p140 = scmp.lt.s32.totalorder %s8, 3
    %p141 = pnand %p139, %p140
    %p142 = pneg %p141
    // Predicated region
    $region25: #{conv_module_forward.1} parent=5 // pred_check
      _
    $region26: #{conv_module_forward.1} parent=5 // pred_check_branch
      %144 = sbr.rel (%p141) target = $region28
    $region27: #{conv_module_forward.1} parent=5 // pred_region
      %s145 = ssub.s32 %s8, 1
      %p146 = scmp.lt.s32.totalorder %s17, 1
      %s147 = scalar_select %p146, %s17, 1
      %p148 = scmp.lt.s32.totalorder %s18, 0
      %s149 = scalar_select %p148, %s18, 0
      %s150 = smul.addr %s147, 32
      %s151 = sadd.s32 %s149, %s150
      %s152 = smul.addr %s151, 8
      %s153 = scalar_lea.vmem %s0, %s152
      %p154 = pneg %p48
      %p155 = pneg %p45
      %p156 = scmp.lt.s32.totalorder %s18, 0
      %s157 = scalar_select %p156, %s18, 0
      %s158 = smul.addr %s157, 4
      %s159 = scalar_lea.vmem %s1, %s158
      %p160 = pneg %p74
      %p161 = pneg %p71
      %p162 = pneg %p102
      %p163 = pneg %p99
      %p164 = scmp.lt.s32.totalorder %s17, 1
      %s165 = scalar_select %p164, %s17, 1
      %p166 = scmp.lt.s32.totalorder %s18, 0
      %s167 = scalar_select %p166, %s18, 0
      %s168 = smul.addr %s165, 32
      %s169 = sadd.s32 %s167, %s168
      %s170 = smul.addr %s169, 8
      %s171 = scalar_lea.vmem %s2, %s170
      %p172 = scmp.lt.s32.totalorder %s17, 1
      %s173 = scalar_select %p172, %s17, 1
      %p174 = scmp.lt.s32.totalorder %s18, 0
      %s175 = scalar_select %p174, %s18, 0
      %s176 = smul.addr %s173, 32
      %s177 = sadd.s32 %s175, %s176
      %s178 = smul.addr %s177, 8
      %s179 = scalar_lea.vmem %s0, %s178
      %p180 = scmp.lt.s32.totalorder %s18, 0
      %s181 = scalar_select %p180, %s18, 0
      %s182 = smul.addr %s181, 4
      %s183 = scalar_lea.vmem %s1, %s182
      %p184 = scmp.lt.s32.totalorder %s17, 1
      %s185 = scalar_select %p184, %s17, 1
      %p186 = scmp.lt.s32.totalorder %s18, 0
      %s187 = scalar_select %p186, %s18, 0
      %s188 = smul.addr %s185, 32
      %s189 = sadd.s32 %s187, %s188
      %s190 = smul.addr %s189, 8
      %s191 = scalar_lea.vmem %s2, %s190
      %192 = vst [vmem:[#allocation2] sm:$0xff] 0.0
      %193 = vst [vmem:[#allocation2 + $0x8] sm:$0xff] 0.0
      %194 = vst [vmem:[#allocation2 + $0x10] sm:$0xff] 0.0
      %195 = vst [vmem:[#allocation2 + $0x18] sm:$0xff] 0.0
      %196 = vst [vmem:[#allocation2 + $0x20] sm:$0xff] 0.0
      %197 = vst [vmem:[#allocation2 + $0x28] sm:$0xff] 0.0
      %198 = vst [vmem:[#allocation2 + $0x30] sm:$0xff] 0.0
      %199 = vst [vmem:[#allocation2 + $0x38] sm:$0xff] 0.0
      %200 = vst [vmem:[#allocation2 + $0x40] sm:$0xff] 0.0
      %201 = vst [vmem:[#allocation2 + $0x48] sm:$0xff] 0.0
      %202 = vst [vmem:[#allocation2 + $0x50] sm:$0xff] 0.0
      %203 = vst [vmem:[#allocation2 + $0x58] sm:$0xff] 0.0
      %204 = vst [vmem:[#allocation2 + $0x60] sm:$0xff] 0.0
      %205 = vst [vmem:[#allocation2 + $0x68] sm:$0xff] 0.0
      %206 = vst [vmem:[#allocation2 + $0x70] sm:$0xff] 0.0
      %207 = vst [vmem:[#allocation2 + $0x78] sm:$0xff] 0.0
      %208 = vst [vmem:[#allocation2 + $0x80] sm:$0xff] 0.0
      %209 = vst [vmem:[#allocation2 + $0x88] sm:$0xff] 0.0
      %210 = vst [vmem:[#allocation2 + $0x90] sm:$0xff] 0.0
      %211 = vst [vmem:[#allocation2 + $0x98] sm:$0xff] 0.0
      %212 = vst [vmem:[#allocation2 + $0xa0] sm:$0xff] 0.0
      %213 = vst [vmem:[#allocation2 + $0xa8] sm:$0xff] 0.0
      %214 = vst [vmem:[#allocation2 + $0xb0] sm:$0xff] 0.0
      %215 = vst [vmem:[#allocation2 + $0xb8] sm:$0xff] 0.0
      %216 = vst [vmem:[#allocation2 + $0xc0] sm:$0xff] 0.0
      %217 = vst [vmem:[#allocation2 + $0xc8] sm:$0xff] 0.0
      %218 = vst [vmem:[#allocation2 + $0xd0] sm:$0xff] 0.0
      %219 = vst [vmem:[#allocation2 + $0xd8] sm:$0xff] 0.0
      %220 = vst [vmem:[#allocation2 + $0xe0] sm:$0xff] 0.0
      %221 = vst [vmem:[#allocation2 + $0xe8] sm:$0xff] 0.0
      %222 = vst [vmem:[#allocation2 + $0xf0] sm:$0xff] 0.0
      %223 = vst [vmem:[#allocation2 + $0xf8] sm:$0xff] 0.0
      %224 = vst [vmem:[#allocation2 + $0x100] sm:$0xff] 0.0
      %225 = vst [vmem:[#allocation2 + $0x108] sm:$0xff] 0.0
      %226 = vst [vmem:[#allocation2 + $0x110] sm:$0xff] 0.0
      %227 = vst [vmem:[#allocation2 + $0x118] sm:$0xff] 0.0
      %228 = vst [vmem:[#allocation2 + $0x120] sm:$0xff] 0.0
      %229 = vst [vmem:[#allocation2 + $0x128] sm:$0xff] 0.0
      %230 = vst [vmem:[#allocation2 + $0x130] sm:$0xff] 0.0
      %231 = vst [vmem:[#allocation2 + $0x138] sm:$0xff] 0.0
      %232 = vst [vmem:[#allocation2 + $0x140] sm:$0xff] 0.0
      %233 = vst [vmem:[#allocation2 + $0x148] sm:$0xff] 0.0
      %234 = vst [vmem:[#allocation2 + $0x150] sm:$0xff] 0.0
      %235 = vst [vmem:[#allocation2 + $0x158] sm:$0xff] 0.0
      %236 = vst [vmem:[#allocation2 + $0x160] sm:$0xff] 0.0
      %237 = vst [vmem:[#allocation2 + $0x168] sm:$0xff] 0.0
      %238 = vst [vmem:[#allocation2 + $0x170] sm:$0xff] 0.0
      %239 = vst [vmem:[#allocation2 + $0x178] sm:$0xff] 0.0
      %240 = vst [vmem:[#allocation2 + $0x180] sm:$0xff] 0.0
      %241 = vst [vmem:[#allocation2 + $0x188] sm:$0xff] 0.0
      %242 = vst [vmem:[#allocation2 + $0x190] sm:$0xff] 0.0
      %243 = vst [vmem:[#allocation2 + $0x198] sm:$0xff] 0.0
      %244 = vst [vmem:[#allocation2 + $0x1a0] sm:$0xff] 0.0
      %245 = vst [vmem:[#allocation2 + $0x1a8] sm:$0xff] 0.0
      %246 = vst [vmem:[#allocation2 + $0x1b0] sm:$0xff] 0.0
      %247 = vst [vmem:[#allocation2 + $0x1b8] sm:$0xff] 0.0
      %248 = vst [vmem:[#allocation2 + $0x1c0] sm:$0xff] 0.0
      %249 = vst [vmem:[#allocation2 + $0x1c8] sm:$0xff] 0.0
      %250 = vst [vmem:[#allocation2 + $0x1d0] sm:$0xff] 0.0
      %251 = vst [vmem:[#allocation2 + $0x1d8] sm:$0xff] 0.0
      %252 = vst [vmem:[#allocation2 + $0x1e0] sm:$0xff] 0.0
      %253 = vst [vmem:[#allocation2 + $0x1e8] sm:$0xff] 0.0
      %254 = vst [vmem:[#allocation2 + $0x1f0] sm:$0xff] 0.0
      %255 = vst [vmem:[#allocation2 + $0x1f8] sm:$0xff] 0.0
      %256 = vst [vmem:[#allocation2 + $0x200] sm:$0xff] 0.0
      %257 = vst [vmem:[#allocation2 + $0x208] sm:$0xff] 0.0
      %258 = vst [vmem:[#allocation2 + $0x210] sm:$0xff] 0.0
      %259 = vst [vmem:[#allocation2 + $0x218] sm:$0xff] 0.0
      %260 = vst [vmem:[#allocation2 + $0x220] sm:$0xff] 0.0
      %261 = vst [vmem:[#allocation2 + $0x228] sm:$0xff] 0.0
      %262 = vst [vmem:[#allocation2 + $0x230] sm:$0xff] 0.0
      %263 = vst [vmem:[#allocation2 + $0x238] sm:$0xff] 0.0
      %v264 = vld [vmem:[%s179] sm:$0xff]
      %v265 = vld [vmem:[%s179 + $0x8] sm:$0xff]
      %v266 = vld [vmem:[%s179 + $0x10] sm:$0xff]
      %v267 = vld [vmem:[%s179 + $0x18] sm:$0xff]
      %v268 = vld [vmem:[%s179 + $0x20] sm:$0xff]
      %v269 = vld [vmem:[%s179 + $0x28] sm:$0xff]
      %v270 = vld [vmem:[%s179 + $0x30] sm:$0xff]
      %v271 = vld [vmem:[%s179 + $0x38] sm:$0xff]
      %v272 = vld [vmem:[%s179 + $0x40] sm:$0xff]
      %v273 = vld [vmem:[%s179 + $0x48] sm:$0xff]
      %v274 = vld [vmem:[%s179 + $0x50] sm:$0xff]
      %v275 = vld [vmem:[%s179 + $0x58] sm:$0xff]
      %v276 = vld [vmem:[%s179 + $0x60] sm:$0xff]
      %v277 = vld [vmem:[%s179 + $0x68] sm:$0xff]
      %v278 = vld [vmem:[%s179 + $0x70] sm:$0xff]
      %v279 = vld [vmem:[%s179 + $0x78] sm:$0xff]
      %v280 = vld [vmem:[%s179 + $0x80] sm:$0xff]
      %v281 = vld [vmem:[%s179 + $0x88] sm:$0xff]
      %v282 = vld [vmem:[%s179 + $0x90] sm:$0xff]
      %v283 = vld [vmem:[%s179 + $0x98] sm:$0xff]
      %v284 = vld [vmem:[%s179 + $0xa0] sm:$0xff]
      %v285 = vld [vmem:[%s179 + $0xa8] sm:$0xff]
      %v286 = vld [vmem:[%s179 + $0xb0] sm:$0xff]
      %v287 = vld [vmem:[%s179 + $0xb8] sm:$0xff]
      %v288 = vld [vmem:[%s179 + $0xc0] sm:$0xff]
      %v289 = vld [vmem:[%s179 + $0xc8] sm:$0xff]
      %v290 = vld [vmem:[%s179 + $0xd0] sm:$0xff]
      %v291 = vld [vmem:[%s179 + $0xd8] sm:$0xff]
      %v292 = vld [vmem:[%s179 + $0xe0] sm:$0xff]
      %v293 = vld [vmem:[%s179 + $0xe8] sm:$0xff]
      %v294 = vld [vmem:[%s179 + $0xf0] sm:$0xff]
      %v295 = vld [vmem:[%s179 + $0xf8] sm:$0xff]
      %s296 = scalar_lea.vmem [#allocation2], 96
      %297 = vst [vmem:[%s296 + $0x2] sm:$0xff] %v264
      %298 = vst [vmem:[%s296 + $0xa] sm:$0xff] %v265
      %299 = vst [vmem:[%s296 + $0x1a] sm:$0xff] %v266
      %300 = vst [vmem:[%s296 + $0x22] sm:$0xff] %v267
      %301 = vst [vmem:[%s296 + $0x32] sm:$0xff] %v268
      %302 = vst [vmem:[%s296 + $0x3a] sm:$0xff] %v269
      %303 = vst [vmem:[%s296 + $0x4a] sm:$0xff] %v270
      %304 = vst [vmem:[%s296 + $0x52] sm:$0xff] %v271
      %305 = vst [vmem:[%s296 + $0x62] sm:$0xff] %v272
      %306 = vst [vmem:[%s296 + $0x6a] sm:$0xff] %v273
      %307 = vst [vmem:[%s296 + $0x7a] sm:$0xff] %v274
      %308 = vst [vmem:[%s296 + $0x82] sm:$0xff] %v275
      %309 = vst [vmem:[%s296 + $0x92] sm:$0xff] %v276
      %310 = vst [vmem:[%s296 + $0x9a] sm:$0xff] %v277
      %311 = vst [vmem:[%s296 + $0xaa] sm:$0xff] %v278
      %312 = vst [vmem:[%s296 + $0xb2] sm:$0xff] %v279
      %313 = vst [vmem:[%s296 + $0xc2] sm:$0xff] %v280
      %314 = vst [vmem:[%s296 + $0xca] sm:$0xff] %v281
      %315 = vst [vmem:[%s296 + $0xda] sm:$0xff] %v282
      %316 = vst [vmem:[%s296 + $0xe2] sm:$0xff] %v283
      %317 = vst [vmem:[%s296 + $0xf2] sm:$0xff] %v284
      %318 = vst [vmem:[%s296 + $0xfa] sm:$0xff] %v285
      %319 = vst [vmem:[%s296 + $0x10a] sm:$0xff] %v286
      %320 = vst [vmem:[%s296 + $0x112] sm:$0xff] %v287
      %321 = vst [vmem:[%s296 + $0x122] sm:$0xff] %v288
      %322 = vst [vmem:[%s296 + $0x12a] sm:$0xff] %v289
      %323 = vst [vmem:[%s296 + $0x13a] sm:$0xff] %v290
      %324 = vst [vmem:[%s296 + $0x142] sm:$0xff] %v291
      %325 = vst [vmem:[%s296 + $0x152] sm:$0xff] %v292
      %326 = vst [vmem:[%s296 + $0x15a] sm:$0xff] %v293
      %327 = vst [vmem:[%s296 + $0x16a] sm:$0xff] %v294
      %328 = vst [vmem:[%s296 + $0x172] sm:$0xff] %v295
      %v329 = vld [vmem:[#allocation2] sm:$0xff]
      %v330 = vld [vmem:[#allocation2 + $0x8] sm:$0xff]
      %v331 = vld [vmem:[#allocation2 + $0x10] sm:$0xff]
      %v332 = vld [vmem:[#allocation2 + $0x18] sm:$0xff]
      %v333 = vld [vmem:[#allocation2 + $0x20] sm:$0xff]
      %v334 = vld [vmem:[#allocation2 + $0x28] sm:$0xff]
      %v335 = vld [vmem:[#allocation2 + $0x30] sm:$0xff]
      %v336 = vld [vmem:[#allocation2 + $0x38] sm:$0xff]
      %v337 = vld [vmem:[#allocation2 + $0x40] sm:$0xff]
      %v338 = vld [vmem:[#allocation2 + $0x48] sm:$0xff]
      %v339 = vld [vmem:[#allocation2 + $0x50] sm:$0xff]
      %v340 = vld [vmem:[#allocation2 + $0x58] sm:$0xff]
      %v341 = vld [vmem:[#allocation2 + $0x60] sm:$0xff]
      %v342 = vld [vmem:[#allocation2 + $0x68] sm:$0xff]
      %v343 = vld [vmem:[#allocation2 + $0x70] sm:$0xff]
      %v344 = vld [vmem:[#allocation2 + $0x78] sm:$0xff]
      %v345 = vld [vmem:[#allocation2 + $0x80] sm:$0xff]
      %v346 = vld [vmem:[#allocation2 + $0x88] sm:$0xff]
      %v347 = vld [vmem:[#allocation2 + $0x90] sm:$0xff]
      %v348 = vld [vmem:[#allocation2 + $0x98] sm:$0xff]
      %v349 = vld [vmem:[#allocation2 + $0xa0] sm:$0xff]
      %v350 = vld [vmem:[#allocation2 + $0xa8] sm:$0xff]
      %v351 = vld [vmem:[#allocation2 + $0xb0] sm:$0xff]
      %v352 = vld [vmem:[#allocation2 + $0xb8] sm:$0xff]
      %v353 = vld [vmem:[#allocation2 + $0xc0] sm:$0xff]
      %v354 = vld [vmem:[#allocation2 + $0xc8] sm:$0xff]
      %v355 = vld [vmem:[#allocation2 + $0xd0] sm:$0xff]
      %v356 = vld [vmem:[#allocation2 + $0xd8] sm:$0xff]
      %v357 = vld [vmem:[#allocation2 + $0xe0] sm:$0xff]
      %v358 = vld [vmem:[#allocation2 + $0xe8] sm:$0xff]
      %v359 = vld [vmem:[#allocation2 + $0xf0] sm:$0xff]
      %v360 = vld [vmem:[#allocation2 + $0xf8] sm:$0xff]
      %v361 = vld [vmem:[#allocation2 + $0x100] sm:$0xff]
      %v362 = vld [vmem:[#allocation2 + $0x108] sm:$0xff]
      %v363 = vld [vmem:[#allocation2 + $0x110] sm:$0xff]
      %v364 = vld [vmem:[#allocation2 + $0x118] sm:$0xff]
      %v365 = vld [vmem:[#allocation2 + $0x120] sm:$0xff]
      %v366 = vld [vmem:[#allocation2 + $0x128] sm:$0xff]
      %v367 = vld [vmem:[#allocation2 + $0x130] sm:$0xff]
      %v368 = vld [vmem:[#allocation2 + $0x138] sm:$0xff]
      %v369 = vld [vmem:[#allocation2 + $0x140] sm:$0xff]
      %v370 = vld [vmem:[#allocation2 + $0x148] sm:$0xff]
      %v371 = vld [vmem:[#allocation2 + $0x150] sm:$0xff]
      %v372 = vld [vmem:[#allocation2 + $0x158] sm:$0xff]
      %v373 = vld [vmem:[#allocation2 + $0x160] sm:$0xff]
      %v374 = vld [vmem:[#allocation2 + $0x168] sm:$0xff]
      %v375 = vld [vmem:[#allocation2 + $0x170] sm:$0xff]
      %v376 = vld [vmem:[#allocation2 + $0x178] sm:$0xff]
      %v377 = vld [vmem:[#allocation2 + $0x180] sm:$0xff]
      %v378 = vld [vmem:[#allocation2 + $0x188] sm:$0xff]
      %v379 = vld [vmem:[#allocation2 + $0x190] sm:$0xff]
      %v380 = vld [vmem:[#allocation2 + $0x198] sm:$0xff]
      %v381 = vld [vmem:[#allocation2 + $0x1a0] sm:$0xff]
      %v382 = vld [vmem:[#allocation2 + $0x1a8] sm:$0xff]
      %v383 = vld [vmem:[#allocation2 + $0x1b0] sm:$0xff]
      %v384 = vld [vmem:[#allocation2 + $0x1b8] sm:$0xff]
      %v385 = vld [vmem:[#allocation2 + $0x1c0] sm:$0xff]
      %v386 = vld [vmem:[#allocation2 + $0x1c8] sm:$0xff]
      %v387 = vld [vmem:[#allocation2 + $0x1d0] sm:$0xff]
      %v388 = vld [vmem:[#allocation2 + $0x1d8] sm:$0xff]
      %v389 = vld [vmem:[#allocation2 + $0x1e0] sm:$0xff]
      %v390 = vld [vmem:[#allocation2 + $0x1e8] sm:$0xff]
      %v391 = vld [vmem:[#allocation2 + $0x1f0] sm:$0xff]
      %v392 = vld [vmem:[#allocation2 + $0x1f8] sm:$0xff]
      %v393 = vld [vmem:[#allocation2 + $0x200] sm:$0xff]
      %v394 = vld [vmem:[#allocation2 + $0x208] sm:$0xff]
      %v395 = vld [vmem:[#allocation2 + $0x210] sm:$0xff]
      %v396 = vld [vmem:[#allocation2 + $0x218] sm:$0xff]
      %v397 = vld [vmem:[#allocation2 + $0x220] sm:$0xff]
      %v398 = vld [vmem:[#allocation2 + $0x228] sm:$0xff]
      %v399 = vld [vmem:[#allocation2 + $0x230] sm:$0xff]
      %v400 = vld [vmem:[#allocation2 + $0x238] sm:$0xff]
      %v401 = vld [vmem:[%s183] sm:$0x7]
      %v402 = vld [vmem:[%s183 + $0x4] sm:$0x7]
      %v403 = vld [vmem:[%s183 + $0x8] sm:$0x7]
      %v404 = vld [vmem:[%s183 + $0xc] sm:$0x7]
      %v405 = vrot.slane %v329, 6
      %v406 = vrot.slane %v332, 6
      %v407 = vrot.slane %v335, 6
      %v408 = vrot.slane %v338, 6
      %v409 = vrot.slane %v341, 6
      %v410 = vrot.slane %v344, 6
      %v411 = vrot.slane %v347, 6
      %v412 = vrot.slane %v350, 6
      %v413 = vrot.slane %v353, 6
      %v414 = vrot.slane %v356, 6
      %v415 = vrot.slane %v359, 6
      %v416 = vrot.slane %v362, 6
      %v417 = vrot.slane %v365, 6
      %v418 = vrot.slane %v368, 6
      %v419 = vrot.slane %v371, 6
      %v420 = vrot.slane %v374, 6
      %v421 = vrot.slane %v377, 6
      %v422 = vrot.slane %v380, 6
      %v423 = vrot.slane %v383, 6
      %v424 = vrot.slane %v386, 6
      %v425 = vrot.slane %v389, 6
      %v426 = vrot.slane %v392, 6
      %v427 = vrot.slane %v395, 6
      %v428 = vrot.slane %v398, 6
      %v429 = vrot.slane %v330, 6
      %v430 = vrot.slane %v333, 6
      %v431 = vrot.slane %v336, 6
      %v432 = vrot.slane %v339, 6
      %v433 = vrot.slane %v342, 6
      %v434 = vrot.slane %v345, 6
      %v435 = vrot.slane %v348, 6
      %v436 = vrot.slane %v351, 6
      %v437 = vrot.slane %v354, 6
      %v438 = vrot.slane %v357, 6
      %v439 = vrot.slane %v360, 6
      %v440 = vrot.slane %v363, 6
      %v441 = vrot.slane %v366, 6
      %v442 = vrot.slane %v369, 6
      %v443 = vrot.slane %v372, 6
      %v444 = vrot.slane %v375, 6
      %v445 = vrot.slane %v378, 6
      %v446 = vrot.slane %v381, 6
      %v447 = vrot.slane %v384, 6
      %v448 = vrot.slane %v387, 6
      %v449 = vrot.slane %v390, 6
      %v450 = vrot.slane %v393, 6
      %v451 = vrot.slane %v396, 6
      %v452 = vrot.slane %v399, 6
      %v453 = vrot.slane %v331, 6
      %v454 = vrot.slane %v334, 6
      %v455 = vrot.slane %v337, 6
      %v456 = vrot.slane %v340, 6
      %v457 = vrot.slane %v343, 6
      %v458 = vrot.slane %v346, 6
      %v459 = vrot.slane %v349, 6
      %v460 = vrot.slane %v352, 6
      %v461 = vrot.slane %v355, 6
      %v462 = vrot.slane %v358, 6
      %v463 = vrot.slane %v361, 6
      %v464 = vrot.slane %v364, 6
      %v465 = vrot.slane %v367, 6
      %v466 = vrot.slane %v370, 6
      %v467 = vrot.slane %v373, 6
      %v468 = vrot.slane %v376, 6
      %v469 = vrot.slane %v379, 6
      %v470 = vrot.slane %v382, 6
      %v471 = vrot.slane %v385, 6
      %v472 = vrot.slane %v388, 6
      %v473 = vrot.slane %v391, 6
      %v474 = vrot.slane %v394, 6
      %v475 = vrot.slane %v397, 6
      %v476 = vrot.slane %v400, 6
      %v477 = vlaneseq
      %v478 = vshrl.u32 %v477, 7
      %vm479 = vcmp.lt.s32.totalorder %v478, 2
      %v480 = vsel %vm479, %v429, %v453
      %v481 = vsel %vm479, %v430, %v454
      %v482 = vsel %vm479, %v431, %v455
      %v483 = vsel %vm479, %v432, %v456
      %v484 = vsel %vm479, %v433, %v457
      %v485 = vsel %vm479, %v434, %v458
      %v486 = vsel %vm479, %v435, %v459
      %v487 = vsel %vm479, %v436, %v460
      %v488 = vsel %vm479, %v437, %v461
      %v489 = vsel %vm479, %v438, %v462
      %v490 = vsel %vm479, %v439, %v463
      %v491 = vsel %vm479, %v440, %v464
      %v492 = vsel %vm479, %v441, %v465
      %v493 = vsel %vm479, %v442, %v466
      %v494 = vsel %vm479, %v443, %v467
      %v495 = vsel %vm479, %v444, %v468
      %v496 = vsel %vm479, %v445, %v469
      %v497 = vsel %vm479, %v446, %v470
      %v498 = vsel %vm479, %v447, %v471
      %v499 = vsel %vm479, %v448, %v472
      %v500 = vsel %vm479, %v449, %v473
      %v501 = vsel %vm479, %v450, %v474
      %v502 = vsel %vm479, %v451, %v475
      %v503 = vsel %vm479, %v452, %v476
      %v504 = vsel %vm479, %v405, %v429
      %v505 = vsel %vm479, %v406, %v430
      %v506 = vsel %vm479, %v407, %v431
      %v507 = vsel %vm479, %v408, %v432
      %v508 = vsel %vm479, %v409, %v433
      %v509 = vsel %vm479, %v410, %v434
      %v510 = vsel %vm479, %v411, %v435
      %v511 = vsel %vm479, %v412, %v436
      %v512 = vsel %vm479, %v413, %v437
      %v513 = vsel %vm479, %v414, %v438
      %v514 = vsel %vm479, %v415, %v439
      %v515 = vsel %vm479, %v416, %v440
      %v516 = vsel %vm479, %v417, %v441
      %v517 = vsel %vm479, %v418, %v442
      %v518 = vsel %vm479, %v419, %v443
      %v519 = vsel %vm479, %v420, %v444
      %v520 = vsel %vm479, %v421, %v445
      %v521 = vsel %vm479, %v422, %v446
      %v522 = vsel %vm479, %v423, %v447
      %v523 = vsel %vm479, %v424, %v448
      %v524 = vsel %vm479, %v425, %v449
      %v525 = vsel %vm479, %v426, %v450
      %v526 = vsel %vm479, %v427, %v451
      %v527 = vsel %vm479, %v428, %v452
      %v528 = vsel %vm479, %v453, %v405
      %v529 = vsel %vm479, %v454, %v406
      %v530 = vsel %vm479, %v455, %v407
      %v531 = vsel %vm479, %v456, %v408
      %v532 = vsel %vm479, %v457, %v409
      %v533 = vsel %vm479, %v458, %v410
      %v534 = vsel %vm479, %v459, %v411
      %v535 = vsel %vm479, %v460, %v412
      %v536 = vsel %vm479, %v461, %v413
      %v537 = vsel %vm479, %v462, %v414
      %v538 = vsel %vm479, %v463, %v415
      %v539 = vsel %vm479, %v464, %v416
      %v540 = vsel %vm479, %v465, %v417
      %v541 = vsel %vm479, %v466, %v418
      %v542 = vsel %vm479, %v467, %v419
      %v543 = vsel %vm479, %v468, %v420
      %v544 = vsel %vm479, %v469, %v421
      %v545 = vsel %vm479, %v470, %v422
      %v546 = vsel %vm479, %v471, %v423
      %v547 = vsel %vm479, %v472, %v424
      %v548 = vsel %vm479, %v473, %v425
      %v549 = vsel %vm479, %v474, %v426
      %v550 = vsel %vm479, %v475, %v427
      %v551 = vsel %vm479, %v476, %v428
      %v552 = vlaneseq
      %v553 = vshrl.u32 %v552, 7
      %v554 = vsub.s32 0, %v553
      %v555 = vrot.slane %v401, %v554
      %v556 = vmul.f32 %v555, %v528
      %v557 = vmul.f32 %v555, %v504
      %v558 = vmul.f32 %v555, %v480
      %v559 = vmul.f32 %v555, %v529
      %v560 = vmul.f32 %v555, %v505
      %v561 = vmul.f32 %v555, %v481
      %v562 = vmul.f32 %v555, %v530
      %v563 = vmul.f32 %v555, %v506
      %v564 = vmul.f32 %v555, %v482
      %v565 = vmul.f32 %v555, %v531
      %v566 = vmul.f32 %v555, %v507
      %v567 = vmul.f32 %v555, %v483
      %v568 = vmul.f32 %v555, %v532
      %v569 = vmul.f32 %v555, %v508
      %v570 = vmul.f32 %v555, %v484
      %v571 = vmul.f32 %v555, %v533
      %v572 = vmul.f32 %v555, %v509
      %v573 = vmul.f32 %v555, %v485
      %v574 = vmul.f32 %v555, %v534
      %v575 = vmul.f32 %v555, %v510
      %v576 = vmul.f32 %v555, %v486
      %v577 = vmul.f32 %v555, %v535
      %v578 = vmul.f32 %v555, %v511
      %v579 = vmul.f32 %v555, %v487
      %v580 = vmul.f32 %v555, %v536
      %v581 = vmul.f32 %v555, %v512
      %v582 = vmul.f32 %v555, %v488
      %v583 = vmul.f32 %v555, %v537
      %v584 = vmul.f32 %v555, %v513
      %v585 = vmul.f32 %v555, %v489
      %v586 = vmul.f32 %v555, %v538
      %v587 = vmul.f32 %v555, %v514
      %v588 = vmul.f32 %v555, %v490
      %v589 = vmul.f32 %v555, %v539
      %v590 = vmul.f32 %v555, %v515
      %v591 = vmul.f32 %v555, %v491
      %v592 = vmul.f32 %v555, %v540
      %v593 = vmul.f32 %v555, %v516
      %v594 = vmul.f32 %v555, %v492
      %v595 = vmul.f32 %v555, %v541
      %v596 = vmul.f32 %v555, %v517
      %v597 = vmul.f32 %v555, %v493
      %v598 = vmul.f32 %v555, %v542
      %v599 = vmul.f32 %v555, %v518
      %v600 = vmul.f32 %v555, %v494
      %v601 = vmul.f32 %v555, %v543
      %v602 = vmul.f32 %v555, %v519
      %v603 = vmul.f32 %v555, %v495
      %v604 = vmul.f32 %v555, %v544
      %v605 = vmul.f32 %v555, %v520
      %v606 = vmul.f32 %v555, %v496
      %v607 = vmul.f32 %v555, %v545
      %v608 = vmul.f32 %v555, %v521
      %v609 = vmul.f32 %v555, %v497
      %v610 = vmul.f32 %v555, %v546
      %v611 = vmul.f32 %v555, %v522
      %v612 = vmul.f32 %v555, %v498
      %v613 = vmul.f32 %v555, %v547
      %v614 = vmul.f32 %v555, %v523
      %v615 = vmul.f32 %v555, %v499
      %v616 = vmul.f32 %v555, %v548
      %v617 = vmul.f32 %v555, %v524
      %v618 = vmul.f32 %v555, %v500
      %v619 = vmul.f32 %v555, %v549
      %v620 = vmul.f32 %v555, %v525
      %v621 = vmul.f32 %v555, %v501
      %v622 = vmul.f32 %v555, %v550
      %v623 = vmul.f32 %v555, %v526
      %v624 = vmul.f32 %v555, %v502
      %v625 = vmul.f32 %v555, %v551
      %v626 = vmul.f32 %v555, %v527
      %v627 = vmul.f32 %v555, %v503
      %v628 = vlaneseq
      %v629 = vshrl.u32 %v628, 7
      %v630 = vsub.s32 1, %v629
      %v631 = vrot.slane %v401, %v630
      %v632 = vmul.f32 %v631, %v329
      %v633 = vmul.f32 %v631, %v330
      %v634 = vmul.f32 %v631, %v331
      %v635 = vmul.f32 %v631, %v332
      %v636 = vmul.f32 %v631, %v333
      %v637 = vmul.f32 %v631, %v334
      %v638 = vmul.f32 %v631, %v335
      %v639 = vmul.f32 %v631, %v336
      %v640 = vmul.f32 %v631, %v337
      %v641 = vmul.f32 %v631, %v338
      %v642 = vmul.f32 %v631, %v339
      %v643 = vmul.f32 %v631, %v340
      %v644 = vmul.f32 %v631, %v341
      %v645 = vmul.f32 %v631, %v342
      %v646 = vmul.f32 %v631, %v343
      %v647 = vmul.f32 %v631, %v344
      %v648 = vmul.f32 %v631, %v345
      %v649 = vmul.f32 %v631, %v346
      %v650 = vmul.f32 %v631, %v347
      %v651 = vmul.f32 %v631, %v348
      %v652 = vmul.f32 %v631, %v349
      %v653 = vmul.f32 %v631, %v350
      %v654 = vmul.f32 %v631, %v351
      %v655 = vmul.f32 %v631, %v352
      %v656 = vmul.f32 %v631, %v353
      %v657 = vmul.f32 %v631, %v354
      %v658 = vmul.f32 %v631, %v355
      %v659 = vmul.f32 %v631, %v356
      %v660 = vmul.f32 %v631, %v357
      %v661 = vmul.f32 %v631, %v358
      %v662 = vmul.f32 %v631, %v359
      %v663 = vmul.f32 %v631, %v360
      %v664 = vmul.f32 %v631, %v361
      %v665 = vmul.f32 %v631, %v362
      %v666 = vmul.f32 %v631, %v363
      %v667 = vmul.f32 %v631, %v364
      %v668 = vmul.f32 %v631, %v365
      %v669 = vmul.f32 %v631, %v366
      %v670 = vmul.f32 %v631, %v367
      %v671 = vmul.f32 %v631, %v368
      %v672 = vmul.f32 %v631, %v369
      %v673 = vmul.f32 %v631, %v370
      %v674 = vmul.f32 %v631, %v371
      %v675 = vmul.f32 %v631, %v372
      %v676 = vmul.f32 %v631, %v373
      %v677 = vmul.f32 %v631, %v374
      %v678 = vmul.f32 %v631, %v375
      %v679 = vmul.f32 %v631, %v376
      %v680 = vmul.f32 %v631, %v377
      %v681 = vmul.f32 %v631, %v378
      %v682 = vmul.f32 %v631, %v379
      %v683 = vmul.f32 %v631, %v380
      %v684 = vmul.f32 %v631, %v381
      %v685 = vmul.f32 %v631, %v382
      %v686 = vmul.f32 %v631, %v383
      %v687 = vmul.f32 %v631, %v384
      %v688 = vmul.f32 %v631, %v385
      %v689 = vmul.f32 %v631, %v386
      %v690 = vmul.f32 %v631, %v387
      %v691 = vmul.f32 %v631, %v388
      %v692 = vmul.f32 %v631, %v389
      %v693 = vmul.f32 %v631, %v390
      %v694 = vmul.f32 %v631, %v391
      %v695 = vmul.f32 %v631, %v392
      %v696 = vmul.f32 %v631, %v393
      %v697 = vmul.f32 %v631, %v394
      %v698 = vmul.f32 %v631, %v395
      %v699 = vmul.f32 %v631, %v396
      %v700 = vmul.f32 %v631, %v397
      %v701 = vmul.f32 %v631, %v398
      %v702 = vmul.f32 %v631, %v399
      %v703 = vmul.f32 %v631, %v400
      %v704 = vadd.f32 %v556, %v632
      %v705 = vadd.f32 %v557, %v633
      %v706 = vadd.f32 %v558, %v634
      %v707 = vadd.f32 %v559, %v635
      %v708 = vadd.f32 %v560, %v636
      %v709 = vadd.f32 %v561, %v637
      %v710 = vadd.f32 %v562, %v638
      %v711 = vadd.f32 %v563, %v639
      %v712 = vadd.f32 %v564, %v640
      %v713 = vadd.f32 %v565, %v641
      %v714 = vadd.f32 %v566, %v642
      %v715 = vadd.f32 %v567, %v643
      %v716 = vadd.f32 %v568, %v644
      %v717 = vadd.f32 %v569, %v645
      %v718 = vadd.f32 %v570, %v646
      %v719 = vadd.f32 %v571, %v647
      %v720 = vadd.f32 %v572, %v648
      %v721 = vadd.f32 %v573, %v649
      %v722 = vadd.f32 %v574, %v650
      %v723 = vadd.f32 %v575, %v651
      %v724 = vadd.f32 %v576, %v652
      %v725 = vadd.f32 %v577, %v653
      %v726 = vadd.f32 %v578, %v654
      %v727 = vadd.f32 %v579, %v655
      %v728 = vadd.f32 %v580, %v656
      %v729 = vadd.f32 %v581, %v657
      %v730 = vadd.f32 %v582, %v658
      %v731 = vadd.f32 %v583, %v659
      %v732 = vadd.f32 %v584, %v660
      %v733 = vadd.f32 %v585, %v661
      %v734 = vadd.f32 %v586, %v662
      %v735 = vadd.f32 %v587, %v663
      %v736 = vadd.f32 %v588, %v664
      %v737 = vadd.f32 %v589, %v665
      %v738 = vadd.f32 %v590, %v666
      %v739 = vadd.f32 %v591, %v667
      %v740 = vadd.f32 %v592, %v668
      %v741 = vadd.f32 %v593, %v669
      %v742 = vadd.f32 %v594, %v670
      %v743 = vadd.f32 %v595, %v671
      %v744 = vadd.f32 %v596, %v672
      %v745 = vadd.f32 %v597, %v673
      %v746 = vadd.f32 %v598, %v674
      %v747 = vadd.f32 %v599, %v675
      %v748 = vadd.f32 %v600, %v676
      %v749 = vadd.f32 %v601, %v677
      %v750 = vadd.f32 %v602, %v678
      %v751 = vadd.f32 %v603, %v679
      %v752 = vadd.f32 %v604, %v680
      %v753 = vadd.f32 %v605, %v681
      %v754 = vadd.f32 %v606, %v682
      %v755 = vadd.f32 %v607, %v683
      %v756 = vadd.f32 %v608, %v684
      %v757 = vadd.f32 %v609, %v685
      %v758 = vadd.f32 %v610, %v686
      %v759 = vadd.f32 %v611, %v687
      %v760 = vadd.f32 %v612, %v688
      %v761 = vadd.f32 %v613, %v689
      %v762 = vadd.f32 %v614, %v690
      %v763 = vadd.f32 %v615, %v691
      %v764 = vadd.f32 %v616, %v692
      %v765 = vadd.f32 %v617, %v693
      %v766 = vadd.f32 %v618, %v694
      %v767 = vadd.f32 %v619, %v695
      %v768 = vadd.f32 %v620, %v696
      %v769 = vadd.f32 %v621, %v697
      %v770 = vadd.f32 %v622, %v698
      %v771 = vadd.f32 %v623, %v699
      %v772 = vadd.f32 %v624, %v700
      %v773 = vadd.f32 %v625, %v701
      %v774 = vadd.f32 %v626, %v702
      %v775 = vadd.f32 %v627, %v703
      %v776 = vrot.slane %v329, 2
      %v777 = vrot.slane %v332, 2
      %v778 = vrot.slane %v335, 2
      %v779 = vrot.slane %v338, 2
      %v780 = vrot.slane %v341, 2
      %v781 = vrot.slane %v344, 2
      %v782 = vrot.slane %v347, 2
      %v783 = vrot.slane %v350, 2
      %v784 = vrot.slane %v353, 2
      %v785 = vrot.slane %v356, 2
      %v786 = vrot.slane %v359, 2
      %v787 = vrot.slane %v362, 2
      %v788 = vrot.slane %v365, 2
      %v789 = vrot.slane %v368, 2
      %v790 = vrot.slane %v371, 2
      %v791 = vrot.slane %v374, 2
      %v792 = vrot.slane %v377, 2
      %v793 = vrot.slane %v380, 2
      %v794 = vrot.slane %v383, 2
      %v795 = vrot.slane %v386, 2
      %v796 = vrot.slane %v389, 2
      %v797 = vrot.slane %v392, 2
      %v798 = vrot.slane %v395, 2
      %v799 = vrot.slane %v398, 2
      %v800 = vrot.slane %v330, 2
      %v801 = vrot.slane %v333, 2
      %v802 = vrot.slane %v336, 2
      %v803 = vrot.slane %v339, 2
      %v804 = vrot.slane %v342, 2
      %v805 = vrot.slane %v345, 2
      %v806 = vrot.slane %v348, 2
      %v807 = vrot.slane %v351, 2
      %v808 = vrot.slane %v354, 2
      %v809 = vrot.slane %v357, 2
      %v810 = vrot.slane %v360, 2
      %v811 = vrot.slane %v363, 2
      %v812 = vrot.slane %v366, 2
      %v813 = vrot.slane %v369, 2
      %v814 = vrot.slane %v372, 2
      %v815 = vrot.slane %v375, 2
      %v816 = vrot.slane %v378, 2
      %v817 = vrot.slane %v381, 2
      %v818 = vrot.slane %v384, 2
      %v819 = vrot.slane %v387, 2
      %v820 = vrot.slane %v390, 2
      %v821 = vrot.slane %v393, 2
      %v822 = vrot.slane %v396, 2
      %v823 = vrot.slane %v399, 2
      %v824 = vrot.slane %v331, 2
      %v825 = vrot.slane %v334, 2
      %v826 = vrot.slane %v337, 2
      %v827 = vrot.slane %v340, 2
      %v828 = vrot.slane %v343, 2
      %v829 = vrot.slane %v346, 2
      %v830 = vrot.slane %v349, 2
      %v831 = vrot.slane %v352, 2
      %v832 = vrot.slane %v355, 2
      %v833 = vrot.slane %v358, 2
      %v834 = vrot.slane %v361, 2
      %v835 = vrot.slane %v364, 2
      %v836 = vrot.slane %v367, 2
      %v837 = vrot.slane %v370, 2
      %v838 = vrot.slane %v373, 2
      %v839 = vrot.slane %v376, 2
      %v840 = vrot.slane %v379, 2
      %v841 = vrot.slane %v382, 2
      %v842 = vrot.slane %v385, 2
      %v843 = vrot.slane %v388, 2
      %v844 = vrot.slane %v391, 2
      %v845 = vrot.slane %v394, 2
      %v846 = vrot.slane %v397, 2
      %v847 = vrot.slane %v400, 2
      %vm848 = vcmp.lt.s32.totalorder %v478, 6
      %v849 = vsel %vm848, %v800, %v824
      %v850 = vsel %vm848, %v801, %v825
      %v851 = vsel %vm848, %v802, %v826
      %v852 = vsel %vm848, %v803, %v827
      %v853 = vsel %vm848, %v804, %v828
      %v854 = vsel %vm848, %v805, %v829
      %v855 = vsel %vm848, %v806, %v830
      %v856 = vsel %vm848, %v807, %v831
      %v857 = vsel %vm848, %v808, %v832
      %v858 = vsel %vm848, %v809, %v833
      %v859 = vsel %vm848, %v810, %v834
      %v860 = vsel %vm848, %v811, %v835
      %v861 = vsel %vm848, %v812, %v836
      %v862 = vsel %vm848, %v813, %v837
      %v863 = vsel %vm848, %v814, %v838
      %v864 = vsel %vm848, %v815, %v839
      %v865 = vsel %vm848, %v816, %v840
      %v866 = vsel %vm848, %v817, %v841
      %v867 = vsel %vm848, %v818, %v842
      %v868 = vsel %vm848, %v819, %v843
      %v869 = vsel %vm848, %v820, %v844
      %v870 = vsel %vm848, %v821, %v845
      %v871 = vsel %vm848, %v822, %v846
      %v872 = vsel %vm848, %v823, %v847
      %v873 = vsel %vm848, %v776, %v800
      %v874 = vsel %vm848, %v777, %v801
      %v875 = vsel %vm848, %v778, %v802
      %v876 = vsel %vm848, %v779, %v803
      %v877 = vsel %vm848, %v780, %v804
      %v878 = vsel %vm848, %v781, %v805
      %v879 = vsel %vm848, %v782, %v806
      %v880 = vsel %vm848, %v783, %v807
      %v881 = vsel %vm848, %v784, %v808
      %v882 = vsel %vm848, %v785, %v809
      %v883 = vsel %vm848, %v786, %v810
      %v884 = vsel %vm848, %v787, %v811
      %v885 = vsel %vm848, %v788, %v812
      %v886 = vsel %vm848, %v789, %v813
      %v887 = vsel %vm848, %v790, %v814
      %v888 = vsel %vm848, %v791, %v815
      %v889 = vsel %vm848, %v792, %v816
      %v890 = vsel %vm848, %v793, %v817
      %v891 = vsel %vm848, %v794, %v818
      %v892 = vsel %vm848, %v795, %v819
      %v893 = vsel %vm848, %v796, %v820
      %v894 = vsel %vm848, %v797, %v821
      %v895 = vsel %vm848, %v798, %v822
      %v896 = vsel %vm848, %v799, %v823
      %v897 = vsel %vm848, %v824, %v776
      %v898 = vsel %vm848, %v825, %v777
      %v899 = vsel %vm848, %v826, %v778
      %v900 = vsel %vm848, %v827, %v779
      %v901 = vsel %vm848, %v828, %v780
      %v902 = vsel %vm848, %v829, %v781
      %v903 = vsel %vm848, %v830, %v782
      %v904 = vsel %vm848, %v831, %v783
      %v905 = vsel %vm848, %v832, %v784
      %v906 = vsel %vm848, %v833, %v785
      %v907 = vsel %vm848, %v834, %v786
      %v908 = vsel %vm848, %v835, %v787
      %v909 = vsel %vm848, %v836, %v788
      %v910 = vsel %vm848, %v837, %v789
      %v911 = vsel %vm848, %v838, %v790
      %v912 = vsel %vm848, %v839, %v791
      %v913 = vsel %vm848, %v840, %v792
      %v914 = vsel %vm848, %v841, %v793
      %v915 = vsel %vm848, %v842, %v794
      %v916 = vsel %vm848, %v843, %v795
      %v917 = vsel %vm848, %v844, %v796
      %v918 = vsel %vm848, %v845, %v797
      %v919 = vsel %vm848, %v846, %v798
      %v920 = vsel %vm848, %v847, %v799
      %v921 = vlaneseq
      %v922 = vshrl.u32 %v921, 7
      %v923 = vsub.s32 2, %v922
      %v924 = vrot.slane %v401, %v923
      %v925 = vmul.f32 %v924, %v873
      %v926 = vmul.f32 %v924, %v849
      %v927 = vmul.f32 %v924, %v897
      %v928 = vmul.f32 %v924, %v874
      %v929 = vmul.f32 %v924, %v850
      %v930 = vmul.f32 %v924, %v898
      %v931 = vmul.f32 %v924, %v875
      %v932 = vmul.f32 %v924, %v851
      %v933 = vmul.f32 %v924, %v899
      %v934 = vmul.f32 %v924, %v876
      %v935 = vmul.f32 %v924, %v852
      %v936 = vmul.f32 %v924, %v900
      %v937 = vmul.f32 %v924, %v877
      %v938 = vmul.f32 %v924, %v853
      %v939 = vmul.f32 %v924, %v901
      %v940 = vmul.f32 %v924, %v878
      %v941 = vmul.f32 %v924, %v854
      %v942 = vmul.f32 %v924, %v902
      %v943 = vmul.f32 %v924, %v879
      %v944 = vmul.f32 %v924, %v855
      %v945 = vmul.f32 %v924, %v903
      %v946 = vmul.f32 %v924, %v880
      %v947 = vmul.f32 %v924, %v856
      %v948 = vmul.f32 %v924, %v904
      %v949 = vmul.f32 %v924, %v881
      %v950 = vmul.f32 %v924, %v857
      %v951 = vmul.f32 %v924, %v905
      %v952 = vmul.f32 %v924, %v882
      %v953 = vmul.f32 %v924, %v858
      %v954 = vmul.f32 %v924, %v906
      %v955 = vmul.f32 %v924, %v883
      %v956 = vmul.f32 %v924, %v859
      %v957 = vmul.f32 %v924, %v907
      %v958 = vmul.f32 %v924, %v884
      %v959 = vmul.f32 %v924, %v860
      %v960 = vmul.f32 %v924, %v908
      %v961 = vmul.f32 %v924, %v885
      %v962 = vmul.f32 %v924, %v861
      %v963 = vmul.f32 %v924, %v909
      %v964 = vmul.f32 %v924, %v886
      %v965 = vmul.f32 %v924, %v862
      %v966 = vmul.f32 %v924, %v910
      %v967 = vmul.f32 %v924, %v887
      %v968 = vmul.f32 %v924, %v863
      %v969 = vmul.f32 %v924, %v911
      %v970 = vmul.f32 %v924, %v888
      %v971 = vmul.f32 %v924, %v864
      %v972 = vmul.f32 %v924, %v912
      %v973 = vmul.f32 %v924, %v889
      %v974 = vmul.f32 %v924, %v865
      %v975 = vmul.f32 %v924, %v913
      %v976 = vmul.f32 %v924, %v890
      %v977 = vmul.f32 %v924, %v866
      %v978 = vmul.f32 %v924, %v914
      %v979 = vmul.f32 %v924, %v891
      %v980 = vmul.f32 %v924, %v867
      %v981 = vmul.f32 %v924, %v915
      %v982 = vmul.f32 %v924, %v892
      %v983 = vmul.f32 %v924, %v868
      %v984 = vmul.f32 %v924, %v916
      %v985 = vmul.f32 %v924, %v893
      %v986 = vmul.f32 %v924, %v869
      %v987 = vmul.f32 %v924, %v917
      %v988 = vmul.f32 %v924, %v894
      %v989 = vmul.f32 %v924, %v870
      %v990 = vmul.f32 %v924, %v918
      %v991 = vmul.f32 %v924, %v895
      %v992 = vmul.f32 %v924, %v871
      %v993 = vmul.f32 %v924, %v919
      %v994 = vmul.f32 %v924, %v896
      %v995 = vmul.f32 %v924, %v872
      %v996 = vmul.f32 %v924, %v920
      %v997 = vadd.f32 %v704, %v925
      %v998 = vadd.f32 %v705, %v926
      %v999 = vadd.f32 %v706, %v927
      %v1000 = vadd.f32 %v707, %v928
      %v1001 = vadd.f32 %v708, %v929
      %v1002 = vadd.f32 %v709, %v930
      %v1003 = vadd.f32 %v710, %v931
      %v1004 = vadd.f32 %v711, %v932
      %v1005 = vadd.f32 %v712, %v933
      %v1006 = vadd.f32 %v713, %v934
      %v1007 = vadd.f32 %v714, %v935
      %v1008 = vadd.f32 %v715, %v936
      %v1009 = vadd.f32 %v716, %v937
      %v1010 = vadd.f32 %v717, %v938
      %v1011 = vadd.f32 %v718, %v939
      %v1012 = vadd.f32 %v719, %v940
      %v1013 = vadd.f32 %v720, %v941
      %v1014 = vadd.f32 %v721, %v942
      %v1015 = vadd.f32 %v722, %v943
      %v1016 = vadd.f32 %v723, %v944
      %v1017 = vadd.f32 %v724, %v945
      %v1018 = vadd.f32 %v725, %v946
      %v1019 = vadd.f32 %v726, %v947
      %v1020 = vadd.f32 %v727, %v948
      %v1021 = vadd.f32 %v728, %v949
      %v1022 = vadd.f32 %v729, %v950
      %v1023 = vadd.f32 %v730, %v951
      %v1024 = vadd.f32 %v731, %v952
      %v1025 = vadd.f32 %v732, %v953
      %v1026 = vadd.f32 %v733, %v954
      %v1027 = vadd.f32 %v734, %v955
      %v1028 = vadd.f32 %v735, %v956
      %v1029 = vadd.f32 %v736, %v957
      %v1030 = vadd.f32 %v737, %v958
      %v1031 = vadd.f32 %v738, %v959
      %v1032 = vadd.f32 %v739, %v960
      %v1033 = vadd.f32 %v740, %v961
      %v1034 = vadd.f32 %v741, %v962
      %v1035 = vadd.f32 %v742, %v963
      %v1036 = vadd.f32 %v743, %v964
      %v1037 = vadd.f32 %v744, %v965
      %v1038 = vadd.f32 %v745, %v966
      %v1039 = vadd.f32 %v746, %v967
      %v1040 = vadd.f32 %v747, %v968
      %v1041 = vadd.f32 %v748, %v969
      %v1042 = vadd.f32 %v749, %v970
      %v1043 = vadd.f32 %v750, %v971
      %v1044 = vadd.f32 %v751, %v972
      %v1045 = vadd.f32 %v752, %v973
      %v1046 = vadd.f32 %v753, %v974
      %v1047 = vadd.f32 %v754, %v975
      %v1048 = vadd.f32 %v755, %v976
      %v1049 = vadd.f32 %v756, %v977
      %v1050 = vadd.f32 %v757, %v978
      %v1051 = vadd.f32 %v758, %v979
      %v1052 = vadd.f32 %v759, %v980
      %v1053 = vadd.f32 %v760, %v981
      %v1054 = vadd.f32 %v761, %v982
      %v1055 = vadd.f32 %v762, %v983
      %v1056 = vadd.f32 %v763, %v984
      %v1057 = vadd.f32 %v764, %v985
      %v1058 = vadd.f32 %v765, %v986
      %v1059 = vadd.f32 %v766, %v987
      %v1060 = vadd.f32 %v767, %v988
      %v1061 = vadd.f32 %v768, %v989
      %v1062 = vadd.f32 %v769, %v990
      %v1063 = vadd.f32 %v770, %v991
      %v1064 = vadd.f32 %v771, %v992
      %v1065 = vadd.f32 %v772, %v993
      %v1066 = vadd.f32 %v773, %v994
      %v1067 = vadd.f32 %v774, %v995
      %v1068 = vadd.f32 %v775, %v996
      %vm1069 = vcmp.gt.f32.partialorder %v997, 0.0
      %vm1070 = vcmp.gt.f32.partialorder %v998, 0.0
      %vm1071 = vcmp.gt.f32.partialorder %v999, 0.0
      %vm1072 = vcmp.gt.f32.partialorder %v1000, 0.0
      %vm1073 = vcmp.gt.f32.partialorder %v1001, 0.0
      %vm1074 = vcmp.gt.f32.partialorder %v1002, 0.0
      %vm1075 = vcmp.gt.f32.partialorder %v1003, 0.0
      %vm1076 = vcmp.gt.f32.partialorder %v1004, 0.0
      %vm1077 = vcmp.gt.f32.partialorder %v1005, 0.0
      %vm1078 = vcmp.gt.f32.partialorder %v1006, 0.0
      %vm1079 = vcmp.gt.f32.partialorder %v1007, 0.0
      %vm1080 = vcmp.gt.f32.partialorder %v1008, 0.0
      %vm1081 = vcmp.gt.f32.partialorder %v1009, 0.0
      %vm1082 = vcmp.gt.f32.partialorder %v1010, 0.0
      %vm1083 = vcmp.gt.f32.partialorder %v1011, 0.0
      %vm1084 = vcmp.gt.f32.partialorder %v1012, 0.0
      %vm1085 = vcmp.gt.f32.partialorder %v1013, 0.0
      %vm1086 = vcmp.gt.f32.partialorder %v1014, 0.0
      %vm1087 = vcmp.gt.f32.partialorder %v1015, 0.0
      %vm1088 = vcmp.gt.f32.partialorder %v1016, 0.0
      %vm1089 = vcmp.gt.f32.partialorder %v1017, 0.0
      %vm1090 = vcmp.gt.f32.partialorder %v1018, 0.0
      %vm1091 = vcmp.gt.f32.partialorder %v1019, 0.0
      %vm1092 = vcmp.gt.f32.partialorder %v1020, 0.0
      %vm1093 = vcmp.gt.f32.partialorder %v1021, 0.0
      %vm1094 = vcmp.gt.f32.partialorder %v1022, 0.0
      %vm1095 = vcmp.gt.f32.partialorder %v1023, 0.0
      %vm1096 = vcmp.gt.f32.partialorder %v1024, 0.0
      %vm1097 = vcmp.gt.f32.partialorder %v1025, 0.0
      %vm1098 = vcmp.gt.f32.partialorder %v1026, 0.0
      %vm1099 = vcmp.gt.f32.partialorder %v1027, 0.0
      %vm1100 = vcmp.gt.f32.partialorder %v1028, 0.0
      %vm1101 = vcmp.gt.f32.partialorder %v1029, 0.0
      %vm1102 = vcmp.gt.f32.partialorder %v1030, 0.0
      %vm1103 = vcmp.gt.f32.partialorder %v1031, 0.0
      %vm1104 = vcmp.gt.f32.partialorder %v1032, 0.0
      %vm1105 = vcmp.gt.f32.partialorder %v1033, 0.0
      %vm1106 = vcmp.gt.f32.partialorder %v1034, 0.0
      %vm1107 = vcmp.gt.f32.partialorder %v1035, 0.0
      %vm1108 = vcmp.gt.f32.partialorder %v1036, 0.0
      %vm1109 = vcmp.gt.f32.partialorder %v1037, 0.0
      %vm1110 = vcmp.gt.f32.partialorder %v1038, 0.0
      %vm1111 = vcmp.gt.f32.partialorder %v1039, 0.0
      %vm1112 = vcmp.gt.f32.partialorder %v1040, 0.0
      %vm1113 = vcmp.gt.f32.partialorder %v1041, 0.0
      %vm1114 = vcmp.gt.f32.partialorder %v1042, 0.0
      %vm1115 = vcmp.gt.f32.partialorder %v1043, 0.0
      %vm1116 = vcmp.gt.f32.partialorder %v1044, 0.0
      %vm1117 = vcmp.gt.f32.partialorder %v1045, 0.0
      %vm1118 = vcmp.gt.f32.partialorder %v1046, 0.0
      %vm1119 = vcmp.gt.f32.partialorder %v1047, 0.0
      %vm1120 = vcmp.gt.f32.partialorder %v1048, 0.0
      %vm1121 = vcmp.gt.f32.partialorder %v1049, 0.0
      %vm1122 = vcmp.gt.f32.partialorder %v1050, 0.0
      %vm1123 = vcmp.gt.f32.partialorder %v1051, 0.0
      %vm1124 = vcmp.gt.f32.partialorder %v1052, 0.0
      %vm1125 = vcmp.gt.f32.partialorder %v1053, 0.0
      %vm1126 = vcmp.gt.f32.partialorder %v1054, 0.0
      %vm1127 = vcmp.gt.f32.partialorder %v1055, 0.0
      %vm1128 = vcmp.gt.f32.partialorder %v1056, 0.0
      %vm1129 = vcmp.gt.f32.partialorder %v1057, 0.0
      %vm1130 = vcmp.gt.f32.partialorder %v1058, 0.0
      %vm1131 = vcmp.gt.f32.partialorder %v1059, 0.0
      %vm1132 = vcmp.gt.f32.partialorder %v1060, 0.0
      %vm1133 = vcmp.gt.f32.partialorder %v1061, 0.0
      %vm1134 = vcmp.gt.f32.partialorder %v1062, 0.0
      %vm1135 = vcmp.gt.f32.partialorder %v1063, 0.0
      %vm1136 = vcmp.gt.f32.partialorder %v1064, 0.0
      %vm1137 = vcmp.gt.f32.partialorder %v1065, 0.0
      %vm1138 = vcmp.gt.f32.partialorder %v1066, 0.0
      %vm1139 = vcmp.gt.f32.partialorder %v1067, 0.0
      %vm1140 = vcmp.gt.f32.partialorder %v1068, 0.0
      %v1141 = vmin.f32 %v997, 0.0
      %v1142 = vmin.f32 %v998, 0.0
      %v1143 = vmin.f32 %v999, 0.0
      %v1144 = vmin.f32 %v1000, 0.0
      %v1145 = vmin.f32 %v1001, 0.0
      %v1146 = vmin.f32 %v1002, 0.0
      %v1147 = vmin.f32 %v1003, 0.0
      %v1148 = vmin.f32 %v1004, 0.0
      %v1149 = vmin.f32 %v1005, 0.0
      %v1150 = vmin.f32 %v1006, 0.0
      %v1151 = vmin.f32 %v1007, 0.0
      %v1152 = vmin.f32 %v1008, 0.0
      %v1153 = vmin.f32 %v1009, 0.0
      %v1154 = vmin.f32 %v1010, 0.0
      %v1155 = vmin.f32 %v1011, 0.0
      %v1156 = vmin.f32 %v1012, 0.0
      %v1157 = vmin.f32 %v1013, 0.0
      %v1158 = vmin.f32 %v1014, 0.0
      %v1159 = vmin.f32 %v1015, 0.0
      %v1160 = vmin.f32 %v1016, 0.0
      %v1161 = vmin.f32 %v1017, 0.0
      %v1162 = vmin.f32 %v1018, 0.0
      %v1163 = vmin.f32 %v1019, 0.0
      %v1164 = vmin.f32 %v1020, 0.0
      %v1165 = vmin.f32 %v1021, 0.0
      %v1166 = vmin.f32 %v1022, 0.0
      %v1167 = vmin.f32 %v1023, 0.0
      %v1168 = vmin.f32 %v1024, 0.0
      %v1169 = vmin.f32 %v1025, 0.0
      %v1170 = vmin.f32 %v1026, 0.0
      %v1171 = vmin.f32 %v1027, 0.0
      %v1172 = vmin.f32 %v1028, 0.0
      %v1173 = vmin.f32 %v1029, 0.0
      %v1174 = vmin.f32 %v1030, 0.0
      %v1175 = vmin.f32 %v1031, 0.0
      %v1176 = vmin.f32 %v1032, 0.0
      %v1177 = vmin.f32 %v1033, 0.0
      %v1178 = vmin.f32 %v1034, 0.0
      %v1179 = vmin.f32 %v1035, 0.0
      %v1180 = vmin.f32 %v1036, 0.0
      %v1181 = vmin.f32 %v1037, 0.0
      %v1182 = vmin.f32 %v1038, 0.0
      %v1183 = vmin.f32 %v1039, 0.0
      %v1184 = vmin.f32 %v1040, 0.0
      %v1185 = vmin.f32 %v1041, 0.0
      %v1186 = vmin.f32 %v1042, 0.0
      %v1187 = vmin.f32 %v1043, 0.0
      %v1188 = vmin.f32 %v1044, 0.0
      %v1189 = vmin.f32 %v1045, 0.0
      %v1190 = vmin.f32 %v1046, 0.0
      %v1191 = vmin.f32 %v1047, 0.0
      %v1192 = vmin.f32 %v1048, 0.0
      %v1193 = vmin.f32 %v1049, 0.0
      %v1194 = vmin.f32 %v1050, 0.0
      %v1195 = vmin.f32 %v1051, 0.0
      %v1196 = vmin.f32 %v1052, 0.0
      %v1197 = vmin.f32 %v1053, 0.0
      %v1198 = vmin.f32 %v1054, 0.0
      %v1199 = vmin.f32 %v1055, 0.0
      %v1200 = vmin.f32 %v1056, 0.0
      %v1201 = vmin.f32 %v1057, 0.0
      %v1202 = vmin.f32 %v1058, 0.0
      %v1203 = vmin.f32 %v1059, 0.0
      %v1204 = vmin.f32 %v1060, 0.0
      %v1205 = vmin.f32 %v1061, 0.0
      %v1206 = vmin.f32 %v1062, 0.0
      %v1207 = vmin.f32 %v1063, 0.0
      %v1208 = vmin.f32 %v1064, 0.0
      %v1209 = vmin.f32 %v1065, 0.0
      %v1210 = vmin.f32 %v1066, 0.0
      %v1211 = vmin.f32 %v1067, 0.0
      %v1212 = vmin.f32 %v1068, 0.0
      %v1213 = vmul.f32 %v1141, 1.442695
      %v1214 = vpow.pop %v1213
      %v1215 = vmul.f32 %v1142, 1.442695
      %v1216 = vpow.pop %v1215
      %v1217 = vmul.f32 %v1143, 1.442695
      %v1218 = vpow.pop %v1217
      %v1219 = vmul.f32 %v1144, 1.442695
      %v1220 = vpow.pop %v1219
      %v1221 = vmul.f32 %v1145, 1.442695
      %v1222 = vpow.pop %v1221
      %v1223 = vmul.f32 %v1146, 1.442695
      %v1224 = vpow.pop %v1223
      %v1225 = vmul.f32 %v1147, 1.442695
      %v1226 = vpow.pop %v1225
      %v1227 = vmul.f32 %v1148, 1.442695
      %v1228 = vpow.pop %v1227
      %v1229 = vmul.f32 %v1149, 1.442695
      %v1230 = vpow.pop %v1229
      %v1231 = vmul.f32 %v1150, 1.442695
      %v1232 = vpow.pop %v1231
      %v1233 = vmul.f32 %v1151, 1.442695
      %v1234 = vpow.pop %v1233
      %v1235 = vmul.f32 %v1152, 1.442695
      %v1236 = vpow.pop %v1235
      %v1237 = vmul.f32 %v1153, 1.442695
      %v1238 = vpow.pop %v1237
      %v1239 = vmul.f32 %v1154, 1.442695
      %v1240 = vpow.pop %v1239
      %v1241 = vmul.f32 %v1155, 1.442695
      %v1242 = vpow.pop %v1241
      %v1243 = vmul.f32 %v1156, 1.442695
      %v1244 = vpow.pop %v1243
      %v1245 = vmul.f32 %v1157, 1.442695
      %v1246 = vpow.pop %v1245
      %v1247 = vmul.f32 %v1158, 1.442695
      %v1248 = vpow.pop %v1247
      %v1249 = vmul.f32 %v1159, 1.442695
      %v1250 = vpow.pop %v1249
      %v1251 = vmul.f32 %v1160, 1.442695
      %v1252 = vpow.pop %v1251
      %v1253 = vmul.f32 %v1161, 1.442695
      %v1254 = vpow.pop %v1253
      %v1255 = vmul.f32 %v1162, 1.442695
      %v1256 = vpow.pop %v1255
      %v1257 = vmul.f32 %v1163, 1.442695
      %v1258 = vpow.pop %v1257
      %v1259 = vmul.f32 %v1164, 1.442695
      %v1260 = vpow.pop %v1259
      %v1261 = vmul.f32 %v1165, 1.442695
      %v1262 = vpow.pop %v1261
      %v1263 = vmul.f32 %v1166, 1.442695
      %v1264 = vpow.pop %v1263
      %v1265 = vmul.f32 %v1167, 1.442695
      %v1266 = vpow.pop %v1265
      %v1267 = vmul.f32 %v1168, 1.442695
      %v1268 = vpow.pop %v1267
      %v1269 = vmul.f32 %v1169, 1.442695
      %v1270 = vpow.pop %v1269
      %v1271 = vmul.f32 %v1170, 1.442695
      %v1272 = vpow.pop %v1271
      %v1273 = vmul.f32 %v1171, 1.442695
      %v1274 = vpow.pop %v1273
      %v1275 = vmul.f32 %v1172, 1.442695
      %v1276 = vpow.pop %v1275
      %v1277 = vmul.f32 %v1173, 1.442695
      %v1278 = vpow.pop %v1277
      %v1279 = vmul.f32 %v1174, 1.442695
      %v1280 = vpow.pop %v1279
      %v1281 = vmul.f32 %v1175, 1.442695
      %v1282 = vpow.pop %v1281
      %v1283 = vmul.f32 %v1176, 1.442695
      %v1284 = vpow.pop %v1283
      %v1285 = vmul.f32 %v1177, 1.442695
      %v1286 = vpow.pop %v1285
      %v1287 = vmul.f32 %v1178, 1.442695
      %v1288 = vpow.pop %v1287
      %v1289 = vmul.f32 %v1179, 1.442695
      %v1290 = vpow.pop %v1289
      %v1291 = vmul.f32 %v1180, 1.442695
      %v1292 = vpow.pop %v1291
      %v1293 = vmul.f32 %v1181, 1.442695
      %v1294 = vpow.pop %v1293
      %v1295 = vmul.f32 %v1182, 1.442695
      %v1296 = vpow.pop %v1295
      %v1297 = vmul.f32 %v1183, 1.442695
      %v1298 = vpow.pop %v1297
      %v1299 = vmul.f32 %v1184, 1.442695
      %v1300 = vpow.pop %v1299
      %v1301 = vmul.f32 %v1185, 1.442695
      %v1302 = vpow.pop %v1301
      %v1303 = vmul.f32 %v1186, 1.442695
      %v1304 = vpow.pop %v1303
      %v1305 = vmul.f32 %v1187, 1.442695
      %v1306 = vpow.pop %v1305
      %v1307 = vmul.f32 %v1188, 1.442695
      %v1308 = vpow.pop %v1307
      %v1309 = vmul.f32 %v1189, 1.442695
      %v1310 = vpow.pop %v1309
      %v1311 = vmul.f32 %v1190, 1.442695
      %v1312 = vpow.pop %v1311
      %v1313 = vmul.f32 %v1191, 1.442695
      %v1314 = vpow.pop %v1313
      %v1315 = vmul.f32 %v1192, 1.442695
      %v1316 = vpow.pop %v1315
      %v1317 = vmul.f32 %v1193, 1.442695
      %v1318 = vpow.pop %v1317
      %v1319 = vmul.f32 %v1194, 1.442695
      %v1320 = vpow.pop %v1319
      %v1321 = vmul.f32 %v1195, 1.442695
      %v1322 = vpow.pop %v1321
      %v1323 = vmul.f32 %v1196, 1.442695
      %v1324 = vpow.pop %v1323
      %v1325 = vmul.f32 %v1197, 1.442695
      %v1326 = vpow.pop %v1325
      %v1327 = vmul.f32 %v1198, 1.442695
      %v1328 = vpow.pop %v1327
      %v1329 = vmul.f32 %v1199, 1.442695
      %v1330 = vpow.pop %v1329
      %v1331 = vmul.f32 %v1200, 1.442695
      %v1332 = vpow.pop %v1331
      %v1333 = vmul.f32 %v1201, 1.442695
      %v1334 = vpow.pop %v1333
      %v1335 = vmul.f32 %v1202, 1.442695
      %v1336 = vpow.pop %v1335
      %v1337 = vmul.f32 %v1203, 1.442695
      %v1338 = vpow.pop %v1337
      %v1339 = vmul.f32 %v1204, 1.442695
      %v1340 = vpow.pop %v1339
      %v1341 = vmul.f32 %v1205, 1.442695
      %v1342 = vpow.pop %v1341
      %v1343 = vmul.f32 %v1206, 1.442695
      %v1344 = vpow.pop %v1343
      %v1345 = vmul.f32 %v1207, 1.442695
      %v1346 = vpow.pop %v1345
      %v1347 = vmul.f32 %v1208, 1.442695
      %v1348 = vpow.pop %v1347
      %v1349 = vmul.f32 %v1209, 1.442695
      %v1350 = vpow.pop %v1349
      %v1351 = vmul.f32 %v1210, 1.442695
      %v1352 = vpow.pop %v1351
      %v1353 = vmul.f32 %v1211, 1.442695
      %v1354 = vpow.pop %v1353
      %v1355 = vmul.f32 %v1212, 1.442695
      %v1356 = vpow.pop %v1355
      %v1357 = vsub.f32 %v1214, 1.0
      %v1358 = vsub.f32 %v1216, 1.0
      %v1359 = vsub.f32 %v1218, 1.0
      %v1360 = vsub.f32 %v1220, 1.0
      %v1361 = vsub.f32 %v1222, 1.0
      %v1362 = vsub.f32 %v1224, 1.0
      %v1363 = vsub.f32 %v1226, 1.0
      %v1364 = vsub.f32 %v1228, 1.0
      %v1365 = vsub.f32 %v1230, 1.0
      %v1366 = vsub.f32 %v1232, 1.0
      %v1367 = vsub.f32 %v1234, 1.0
      %v1368 = vsub.f32 %v1236, 1.0
      %v1369 = vsub.f32 %v1238, 1.0
      %v1370 = vsub.f32 %v1240, 1.0
      %v1371 = vsub.f32 %v1242, 1.0
      %v1372 = vsub.f32 %v1244, 1.0
      %v1373 = vsub.f32 %v1246, 1.0
      %v1374 = vsub.f32 %v1248, 1.0
      %v1375 = vsub.f32 %v1250, 1.0
      %v1376 = vsub.f32 %v1252, 1.0
      %v1377 = vsub.f32 %v1254, 1.0
      %v1378 = vsub.f32 %v1256, 1.0
      %v1379 = vsub.f32 %v1258, 1.0
      %v1380 = vsub.f32 %v1260, 1.0
      %v1381 = vsub.f32 %v1262, 1.0
      %v1382 = vsub.f32 %v1264, 1.0
      %v1383 = vsub.f32 %v1266, 1.0
      %v1384 = vsub.f32 %v1268, 1.0
      %v1385 = vsub.f32 %v1270, 1.0
      %v1386 = vsub.f32 %v1272, 1.0
      %v1387 = vsub.f32 %v1274, 1.0
      %v1388 = vsub.f32 %v1276, 1.0
      %v1389 = vsub.f32 %v1278, 1.0
      %v1390 = vsub.f32 %v1280, 1.0
      %v1391 = vsub.f32 %v1282, 1.0
      %v1392 = vsub.f32 %v1284, 1.0
      %v1393 = vsub.f32 %v1286, 1.0
      %v1394 = vsub.f32 %v1288, 1.0
      %v1395 = vsub.f32 %v1290, 1.0
      %v1396 = vsub.f32 %v1292, 1.0
      %v1397 = vsub.f32 %v1294, 1.0
      %v1398 = vsub.f32 %v1296, 1.0
      %v1399 = vsub.f32 %v1298, 1.0
      %v1400 = vsub.f32 %v1300, 1.0
      %v1401 = vsub.f32 %v1302, 1.0
      %v1402 = vsub.f32 %v1304, 1.0
      %v1403 = vsub.f32 %v1306, 1.0
      %v1404 = vsub.f32 %v1308, 1.0
      %v1405 = vsub.f32 %v1310, 1.0
      %v1406 = vsub.f32 %v1312, 1.0
      %v1407 = vsub.f32 %v1314, 1.0
      %v1408 = vsub.f32 %v1316, 1.0
      %v1409 = vsub.f32 %v1318, 1.0
      %v1410 = vsub.f32 %v1320, 1.0
      %v1411 = vsub.f32 %v1322, 1.0
      %v1412 = vsub.f32 %v1324, 1.0
      %v1413 = vsub.f32 %v1326, 1.0
      %v1414 = vsub.f32 %v1328, 1.0
      %v1415 = vsub.f32 %v1330, 1.0
      %v1416 = vsub.f32 %v1332, 1.0
      %v1417 = vsub.f32 %v1334, 1.0
      %v1418 = vsub.f32 %v1336, 1.0
      %v1419 = vsub.f32 %v1338, 1.0
      %v1420 = vsub.f32 %v1340, 1.0
      %v1421 = vsub.f32 %v1342, 1.0
      %v1422 = vsub.f32 %v1344, 1.0
      %v1423 = vsub.f32 %v1346, 1.0
      %v1424 = vsub.f32 %v1348, 1.0
      %v1425 = vsub.f32 %v1350, 1.0
      %v1426 = vsub.f32 %v1352, 1.0
      %v1427 = vsub.f32 %v1354, 1.0
      %v1428 = vsub.f32 %v1356, 1.0
      %v1429 = vmul.f32 %v1357, 1.6732632
      %v1430 = vmul.f32 %v1358, 1.6732632
      %v1431 = vmul.f32 %v1359, 1.6732632
      %v1432 = vmul.f32 %v1360, 1.6732632
      %v1433 = vmul.f32 %v1361, 1.6732632
      %v1434 = vmul.f32 %v1362, 1.6732632
      %v1435 = vmul.f32 %v1363, 1.6732632
      %v1436 = vmul.f32 %v1364, 1.6732632
      %v1437 = vmul.f32 %v1365, 1.6732632
      %v1438 = vmul.f32 %v1366, 1.6732632
      %v1439 = vmul.f32 %v1367, 1.6732632
      %v1440 = vmul.f32 %v1368, 1.6732632
      %v1441 = vmul.f32 %v1369, 1.6732632
      %v1442 = vmul.f32 %v1370, 1.6732632
      %v1443 = vmul.f32 %v1371, 1.6732632
      %v1444 = vmul.f32 %v1372, 1.6732632
      %v1445 = vmul.f32 %v1373, 1.6732632
      %v1446 = vmul.f32 %v1374, 1.6732632
      %v1447 = vmul.f32 %v1375, 1.6732632
      %v1448 = vmul.f32 %v1376, 1.6732632
      %v1449 = vmul.f32 %v1377, 1.6732632
      %v1450 = vmul.f32 %v1378, 1.6732632
      %v1451 = vmul.f32 %v1379, 1.6732632
      %v1452 = vmul.f32 %v1380, 1.6732632
      %v1453 = vmul.f32 %v1381, 1.6732632
      %v1454 = vmul.f32 %v1382, 1.6732632
      %v1455 = vmul.f32 %v1383, 1.6732632
      %v1456 = vmul.f32 %v1384, 1.6732632
      %v1457 = vmul.f32 %v1385, 1.6732632
      %v1458 = vmul.f32 %v1386, 1.6732632
      %v1459 = vmul.f32 %v1387, 1.6732632
      %v1460 = vmul.f32 %v1388, 1.6732632
      %v1461 = vmul.f32 %v1389, 1.6732632
      %v1462 = vmul.f32 %v1390, 1.6732632
      %v1463 = vmul.f32 %v1391, 1.6732632
      %v1464 = vmul.f32 %v1392, 1.6732632
      %v1465 = vmul.f32 %v1393, 1.6732632
      %v1466 = vmul.f32 %v1394, 1.6732632
      %v1467 = vmul.f32 %v1395, 1.6732632
      %v1468 = vmul.f32 %v1396, 1.6732632
      %v1469 = vmul.f32 %v1397, 1.6732632
      %v1470 = vmul.f32 %v1398, 1.6732632
      %v1471 = vmul.f32 %v1399, 1.6732632
      %v1472 = vmul.f32 %v1400, 1.6732632
      %v1473 = vmul.f32 %v1401, 1.6732632
      %v1474 = vmul.f32 %v1402, 1.6732632
      %v1475 = vmul.f32 %v1403, 1.6732632
      %v1476 = vmul.f32 %v1404, 1.6732632
      %v1477 = vmul.f32 %v1405, 1.6732632
      %v1478 = vmul.f32 %v1406, 1.6732632
      %v1479 = vmul.f32 %v1407, 1.6732632
      %v1480 = vmul.f32 %v1408, 1.6732632
      %v1481 = vmul.f32 %v1409, 1.6732632
      %v1482 = vmul.f32 %v1410, 1.6732632
      %v1483 = vmul.f32 %v1411, 1.6732632
      %v1484 = vmul.f32 %v1412, 1.6732632
      %v1485 = vmul.f32 %v1413, 1.6732632
      %v1486 = vmul.f32 %v1414, 1.6732632
      %v1487 = vmul.f32 %v1415, 1.6732632
      %v1488 = vmul.f32 %v1416, 1.6732632
      %v1489 = vmul.f32 %v1417, 1.6732632
      %v1490 = vmul.f32 %v1418, 1.6732632
      %v1491 = vmul.f32 %v1419, 1.6732632
      %v1492 = vmul.f32 %v1420, 1.6732632
      %v1493 = vmul.f32 %v1421, 1.6732632
      %v1494 = vmul.f32 %v1422, 1.6732632
      %v1495 = vmul.f32 %v1423, 1.6732632
      %v1496 = vmul.f32 %v1424, 1.6732632
      %v1497 = vmul.f32 %v1425, 1.6732632
      %v1498 = vmul.f32 %v1426, 1.6732632
      %v1499 = vmul.f32 %v1427, 1.6732632
      %v1500 = vmul.f32 %v1428, 1.6732632
      %v1501 = vsel %vm1069, %v997, %v1429
      %v1502 = vsel %vm1070, %v998, %v1430
      %v1503 = vsel %vm1071, %v999, %v1431
      %v1504 = vsel %vm1072, %v1000, %v1432
      %v1505 = vsel %vm1073, %v1001, %v1433
      %v1506 = vsel %vm1074, %v1002, %v1434
      %v1507 = vsel %vm1075, %v1003, %v1435
      %v1508 = vsel %vm1076, %v1004, %v1436
      %v1509 = vsel %vm1077, %v1005, %v1437
      %v1510 = vsel %vm1078, %v1006, %v1438
      %v1511 = vsel %vm1079, %v1007, %v1439
      %v1512 = vsel %vm1080, %v1008, %v1440
      %v1513 = vsel %vm1081, %v1009, %v1441
      %v1514 = vsel %vm1082, %v1010, %v1442
      %v1515 = vsel %vm1083, %v1011, %v1443
      %v1516 = vsel %vm1084, %v1012, %v1444
      %v1517 = vsel %vm1085, %v1013, %v1445
      %v1518 = vsel %vm1086, %v1014, %v1446
      %v1519 = vsel %vm1087, %v1015, %v1447
      %v1520 = vsel %vm1088, %v1016, %v1448
      %v1521 = vsel %vm1089, %v1017, %v1449
      %v1522 = vsel %vm1090, %v1018, %v1450
      %v1523 = vsel %vm1091, %v1019, %v1451
      %v1524 = vsel %vm1092, %v1020, %v1452
      %v1525 = vsel %vm1093, %v1021, %v1453
      %v1526 = vsel %vm1094, %v1022, %v1454
      %v1527 = vsel %vm1095, %v1023, %v1455
      %v1528 = vsel %vm1096, %v1024, %v1456
      %v1529 = vsel %vm1097, %v1025, %v1457
      %v1530 = vsel %vm1098, %v1026, %v1458
      %v1531 = vsel %vm1099, %v1027, %v1459
      %v1532 = vsel %vm1100, %v1028, %v1460
      %v1533 = vsel %vm1101, %v1029, %v1461
      %v1534 = vsel %vm1102, %v1030, %v1462
      %v1535 = vsel %vm1103, %v1031, %v1463
      %v1536 = vsel %vm1104, %v1032, %v1464
      %v1537 = vsel %vm1105, %v1033, %v1465
      %v1538 = vsel %vm1106, %v1034, %v1466
      %v1539 = vsel %vm1107, %v1035, %v1467
      %v1540 = vsel %vm1108, %v1036, %v1468
      %v1541 = vsel %vm1109, %v1037, %v1469
      %v1542 = vsel %vm1110, %v1038, %v1470
      %v1543 = vsel %vm1111, %v1039, %v1471
      %v1544 = vsel %vm1112, %v1040, %v1472
      %v1545 = vsel %vm1113, %v1041, %v1473
      %v1546 = vsel %vm1114, %v1042, %v1474
      %v1547 = vsel %vm1115, %v1043, %v1475
      %v1548 = vsel %vm1116, %v1044, %v1476
      %v1549 = vsel %vm1117, %v1045, %v1477
      %v1550 = vsel %vm1118, %v1046, %v1478
      %v1551 = vsel %vm1119, %v1047, %v1479
      %v1552 = vsel %vm1120, %v1048, %v1480
      %v1553 = vsel %vm1121, %v1049, %v1481
      %v1554 = vsel %vm1122, %v1050, %v1482
      %v1555 = vsel %vm1123, %v1051, %v1483
      %v1556 = vsel %vm1124, %v1052, %v1484
      %v1557 = vsel %vm1125, %v1053, %v1485
      %v1558 = vsel %vm1126, %v1054, %v1486
      %v1559 = vsel %vm1127, %v1055, %v1487
      %v1560 = vsel %vm1128, %v1056, %v1488
      %v1561 = vsel %vm1129, %v1057, %v1489
      %v1562 = vsel %vm1130, %v1058, %v1490
      %v1563 = vsel %vm1131, %v1059, %v1491
      %v1564 = vsel %vm1132, %v1060, %v1492
      %v1565 = vsel %vm1133, %v1061, %v1493
      %v1566 = vsel %vm1134, %v1062, %v1494
      %v1567 = vsel %vm1135, %v1063, %v1495
      %v1568 = vsel %vm1136, %v1064, %v1496
      %v1569 = vsel %vm1137, %v1065, %v1497
      %v1570 = vsel %vm1138, %v1066, %v1498
      %v1571 = vsel %vm1139, %v1067, %v1499
      %v1572 = vsel %vm1140, %v1068, %v1500
      %v1573 = vmul.f32 %v1501, 1.050701
      %v1574 = vmul.f32 %v1502, 1.050701
      %v1575 = vmul.f32 %v1503, 1.050701
      %v1576 = vmul.f32 %v1504, 1.050701
      %v1577 = vmul.f32 %v1505, 1.050701
      %v1578 = vmul.f32 %v1506, 1.050701
      %v1579 = vmul.f32 %v1507, 1.050701
      %v1580 = vmul.f32 %v1508, 1.050701
      %v1581 = vmul.f32 %v1509, 1.050701
      %v1582 = vmul.f32 %v1510, 1.050701
      %v1583 = vmul.f32 %v1511, 1.050701
      %v1584 = vmul.f32 %v1512, 1.050701
      %v1585 = vmul.f32 %v1513, 1.050701
      %v1586 = vmul.f32 %v1514, 1.050701
      %v1587 = vmul.f32 %v1515, 1.050701
      %v1588 = vmul.f32 %v1516, 1.050701
      %v1589 = vmul.f32 %v1517, 1.050701
      %v1590 = vmul.f32 %v1518, 1.050701
      %v1591 = vmul.f32 %v1519, 1.050701
      %v1592 = vmul.f32 %v1520, 1.050701
      %v1593 = vmul.f32 %v1521, 1.050701
      %v1594 = vmul.f32 %v1522, 1.050701
      %v1595 = vmul.f32 %v1523, 1.050701
      %v1596 = vmul.f32 %v1524, 1.050701
      %v1597 = vmul.f32 %v1525, 1.050701
      %v1598 = vmul.f32 %v1526, 1.050701
      %v1599 = vmul.f32 %v1527, 1.050701
      %v1600 = vmul.f32 %v1528, 1.050701
      %v1601 = vmul.f32 %v1529, 1.050701
      %v1602 = vmul.f32 %v1530, 1.050701
      %v1603 = vmul.f32 %v1531, 1.050701
      %v1604 = vmul.f32 %v1532, 1.050701
      %v1605 = vmul.f32 %v1533, 1.050701
      %v1606 = vmul.f32 %v1534, 1.050701
      %v1607 = vmul.f32 %v1535, 1.050701
      %v1608 = vmul.f32 %v1536, 1.050701
      %v1609 = vmul.f32 %v1537, 1.050701
      %v1610 = vmul.f32 %v1538, 1.050701
      %v1611 = vmul.f32 %v1539, 1.050701
      %v1612 = vmul.f32 %v1540, 1.050701
      %v1613 = vmul.f32 %v1541, 1.050701
      %v1614 = vmul.f32 %v1542, 1.050701
      %v1615 = vmul.f32 %v1543, 1.050701
      %v1616 = vmul.f32 %v1544, 1.050701
      %v1617 = vmul.f32 %v1545, 1.050701
      %v1618 = vmul.f32 %v1546, 1.050701
      %v1619 = vmul.f32 %v1547, 1.050701
      %v1620 = vmul.f32 %v1548, 1.050701
      %v1621 = vmul.f32 %v1549, 1.050701
      %v1622 = vmul.f32 %v1550, 1.050701
      %v1623 = vmul.f32 %v1551, 1.050701
      %v1624 = vmul.f32 %v1552, 1.050701
      %v1625 = vmul.f32 %v1553, 1.050701
      %v1626 = vmul.f32 %v1554, 1.050701
      %v1627 = vmul.f32 %v1555, 1.050701
      %v1628 = vmul.f32 %v1556, 1.050701
      %v1629 = vmul.f32 %v1557, 1.050701
      %v1630 = vmul.f32 %v1558, 1.050701
      %v1631 = vmul.f32 %v1559, 1.050701
      %v1632 = vmul.f32 %v1560, 1.050701
      %v1633 = vmul.f32 %v1561, 1.050701
      %v1634 = vmul.f32 %v1562, 1.050701
      %v1635 = vmul.f32 %v1563, 1.050701
      %v1636 = vmul.f32 %v1564, 1.050701
      %v1637 = vmul.f32 %v1565, 1.050701
      %v1638 = vmul.f32 %v1566, 1.050701
      %v1639 = vmul.f32 %v1567, 1.050701
      %v1640 = vmul.f32 %v1568, 1.050701
      %v1641 = vmul.f32 %v1569, 1.050701
      %v1642 = vmul.f32 %v1570, 1.050701
      %v1643 = vmul.f32 %v1571, 1.050701
      %v1644 = vmul.f32 %v1572, 1.050701
      %v1645 = vlaneseq
      %v1646 = vshrl.u32 %v1645, 7
      %v1647 = vsub.s32 0, %v1646
      %v1648 = vrot.slane %v402, %v1647
      %v1649 = vmul.f32 %v1648, %v1573
      %v1650 = vmul.f32 %v1648, %v1574
      %v1651 = vmul.f32 %v1648, %v1575
      %v1652 = vmul.f32 %v1648, %v1576
      %v1653 = vmul.f32 %v1648, %v1577
      %v1654 = vmul.f32 %v1648, %v1578
      %v1655 = vmul.f32 %v1648, %v1579
      %v1656 = vmul.f32 %v1648, %v1580
      %v1657 = vmul.f32 %v1648, %v1581
      %v1658 = vmul.f32 %v1648, %v1582
      %v1659 = vmul.f32 %v1648, %v1583
      %v1660 = vmul.f32 %v1648, %v1584
      %v1661 = vmul.f32 %v1648, %v1585
      %v1662 = vmul.f32 %v1648, %v1586
      %v1663 = vmul.f32 %v1648, %v1587
      %v1664 = vmul.f32 %v1648, %v1588
      %v1665 = vmul.f32 %v1648, %v1589
      %v1666 = vmul.f32 %v1648, %v1590
      %v1667 = vmul.f32 %v1648, %v1591
      %v1668 = vmul.f32 %v1648, %v1592
      %v1669 = vmul.f32 %v1648, %v1593
      %v1670 = vmul.f32 %v1648, %v1594
      %v1671 = vmul.f32 %v1648, %v1595
      %v1672 = vmul.f32 %v1648, %v1596
      %v1673 = vmul.f32 %v1648, %v1597
      %v1674 = vmul.f32 %v1648, %v1598
      %v1675 = vmul.f32 %v1648, %v1599
      %v1676 = vmul.f32 %v1648, %v1600
      %v1677 = vmul.f32 %v1648, %v1601
      %v1678 = vmul.f32 %v1648, %v1602
      %v1679 = vmul.f32 %v1648, %v1603
      %v1680 = vmul.f32 %v1648, %v1604
      %v1681 = vmul.f32 %v1648, %v1605
      %v1682 = vmul.f32 %v1648, %v1606
      %v1683 = vmul.f32 %v1648, %v1607
      %v1684 = vmul.f32 %v1648, %v1608
      %v1685 = vmul.f32 %v1648, %v1609
      %v1686 = vmul.f32 %v1648, %v1610
      %v1687 = vmul.f32 %v1648, %v1611
      %v1688 = vmul.f32 %v1648, %v1612
      %v1689 = vmul.f32 %v1648, %v1613
      %v1690 = vmul.f32 %v1648, %v1614
      %v1691 = vmul.f32 %v1648, %v1615
      %v1692 = vmul.f32 %v1648, %v1616
      %v1693 = vmul.f32 %v1648, %v1617
      %v1694 = vmul.f32 %v1648, %v1618
      %v1695 = vmul.f32 %v1648, %v1619
      %v1696 = vmul.f32 %v1648, %v1620
      %v1697 = vmul.f32 %v1648, %v1621
      %v1698 = vmul.f32 %v1648, %v1622
      %v1699 = vmul.f32 %v1648, %v1623
      %v1700 = vmul.f32 %v1648, %v1624
      %v1701 = vmul.f32 %v1648, %v1625
      %v1702 = vmul.f32 %v1648, %v1626
      %v1703 = vmul.f32 %v1648, %v1627
      %v1704 = vmul.f32 %v1648, %v1628
      %v1705 = vmul.f32 %v1648, %v1629
      %v1706 = vmul.f32 %v1648, %v1630
      %v1707 = vmul.f32 %v1648, %v1631
      %v1708 = vmul.f32 %v1648, %v1632
      %v1709 = vlaneseq
      %v1710 = vshrl.u32 %v1709, 7
      %v1711 = vsub.s32 1, %v1710
      %v1712 = vrot.slane %v402, %v1711
      %v1713 = vmul.f32 %v1712, %v1579
      %v1714 = vmul.f32 %v1712, %v1580
      %v1715 = vmul.f32 %v1712, %v1581
      %v1716 = vmul.f32 %v1712, %v1582
      %v1717 = vmul.f32 %v1712, %v1583
      %v1718 = vmul.f32 %v1712, %v1584
      %v1719 = vmul.f32 %v1712, %v1585
      %v1720 = vmul.f32 %v1712, %v1586
      %v1721 = vmul.f32 %v1712, %v1587
      %v1722 = vmul.f32 %v1712, %v1588
      %v1723 = vmul.f32 %v1712, %v1589
      %v1724 = vmul.f32 %v1712, %v1590
      %v1725 = vmul.f32 %v1712, %v1591
      %v1726 = vmul.f32 %v1712, %v1592
      %v1727 = vmul.f32 %v1712, %v1593
      %v1728 = vmul.f32 %v1712, %v1594
      %v1729 = vmul.f32 %v1712, %v1595
      %v1730 = vmul.f32 %v1712, %v1596
      %v1731 = vmul.f32 %v1712, %v1597
      %v1732 = vmul.f32 %v1712, %v1598
      %v1733 = vmul.f32 %v1712, %v1599
      %v1734 = vmul.f32 %v1712, %v1600
      %v1735 = vmul.f32 %v1712, %v1601
      %v1736 = vmul.f32 %v1712, %v1602
      %v1737 = vmul.f32 %v1712, %v1603
      %v1738 = vmul.f32 %v1712, %v1604
      %v1739 = vmul.f32 %v1712, %v1605
      %v1740 = vmul.f32 %v1712, %v1606
      %v1741 = vmul.f32 %v1712, %v1607
      %v1742 = vmul.f32 %v1712, %v1608
      %v1743 = vmul.f32 %v1712, %v1609
      %v1744 = vmul.f32 %v1712, %v1610
      %v1745 = vmul.f32 %v1712, %v1611
      %v1746 = vmul.f32 %v1712, %v1612
      %v1747 = vmul.f32 %v1712, %v1613
      %v1748 = vmul.f32 %v1712, %v1614
      %v1749 = vmul.f32 %v1712, %v1615
      %v1750 = vmul.f32 %v1712, %v1616
      %v1751 = vmul.f32 %v1712, %v1617
      %v1752 = vmul.f32 %v1712, %v1618
      %v1753 = vmul.f32 %v1712, %v1619
      %v1754 = vmul.f32 %v1712, %v1620
      %v1755 = vmul.f32 %v1712, %v1621
      %v1756 = vmul.f32 %v1712, %v1622
      %v1757 = vmul.f32 %v1712, %v1623
      %v1758 = vmul.f32 %v1712, %v1624
      %v1759 = vmul.f32 %v1712, %v1625
      %v1760 = vmul.f32 %v1712, %v1626
      %v1761 = vmul.f32 %v1712, %v1627
      %v1762 = vmul.f32 %v1712, %v1628
      %v1763 = vmul.f32 %v1712, %v1629
      %v1764 = vmul.f32 %v1712, %v1630
      %v1765 = vmul.f32 %v1712, %v1631
      %v1766 = vmul.f32 %v1712, %v1632
      %v1767 = vmul.f32 %v1712, %v1633
      %v1768 = vmul.f32 %v1712, %v1634
      %v1769 = vmul.f32 %v1712, %v1635
      %v1770 = vmul.f32 %v1712, %v1636
      %v1771 = vmul.f32 %v1712, %v1637
      %v1772 = vmul.f32 %v1712, %v1638
      %v1773 = vadd.f32 %v1649, %v1713
      %v1774 = vadd.f32 %v1650, %v1714
      %v1775 = vadd.f32 %v1651, %v1715
      %v1776 = vadd.f32 %v1652, %v1716
      %v1777 = vadd.f32 %v1653, %v1717
      %v1778 = vadd.f32 %v1654, %v1718
      %v1779 = vadd.f32 %v1655, %v1719
      %v1780 = vadd.f32 %v1656, %v1720
      %v1781 = vadd.f32 %v1657, %v1721
      %v1782 = vadd.f32 %v1658, %v1722
      %v1783 = vadd.f32 %v1659, %v1723
      %v1784 = vadd.f32 %v1660, %v1724
      %v1785 = vadd.f32 %v1661, %v1725
      %v1786 = vadd.f32 %v1662, %v1726
      %v1787 = vadd.f32 %v1663, %v1727
      %v1788 = vadd.f32 %v1664, %v1728
      %v1789 = vadd.f32 %v1665, %v1729
      %v1790 = vadd.f32 %v1666, %v1730
      %v1791 = vadd.f32 %v1667, %v1731
      %v1792 = vadd.f32 %v1668, %v1732
      %v1793 = vadd.f32 %v1669, %v1733
      %v1794 = vadd.f32 %v1670, %v1734
      %v1795 = vadd.f32 %v1671, %v1735
      %v1796 = vadd.f32 %v1672, %v1736
      %v1797 = vadd.f32 %v1673, %v1737
      %v1798 = vadd.f32 %v1674, %v1738
      %v1799 = vadd.f32 %v1675, %v1739
      %v1800 = vadd.f32 %v1676, %v1740
      %v1801 = vadd.f32 %v1677, %v1741
      %v1802 = vadd.f32 %v1678, %v1742
      %v1803 = vadd.f32 %v1679, %v1743
      %v1804 = vadd.f32 %v1680, %v1744
      %v1805 = vadd.f32 %v1681, %v1745
      %v1806 = vadd.f32 %v1682, %v1746
      %v1807 = vadd.f32 %v1683, %v1747
      %v1808 = vadd.f32 %v1684, %v1748
      %v1809 = vadd.f32 %v1685, %v1749
      %v1810 = vadd.f32 %v1686, %v1750
      %v1811 = vadd.f32 %v1687, %v1751
      %v1812 = vadd.f32 %v1688, %v1752
      %v1813 = vadd.f32 %v1689, %v1753
      %v1814 = vadd.f32 %v1690, %v1754
      %v1815 = vadd.f32 %v1691, %v1755
      %v1816 = vadd.f32 %v1692, %v1756
      %v1817 = vadd.f32 %v1693, %v1757
      %v1818 = vadd.f32 %v1694, %v1758
      %v1819 = vadd.f32 %v1695, %v1759
      %v1820 = vadd.f32 %v1696, %v1760
      %v1821 = vadd.f32 %v1697, %v1761
      %v1822 = vadd.f32 %v1698, %v1762
      %v1823 = vadd.f32 %v1699, %v1763
      %v1824 = vadd.f32 %v1700, %v1764
      %v1825 = vadd.f32 %v1701, %v1765
      %v1826 = vadd.f32 %v1702, %v1766
      %v1827 = vadd.f32 %v1703, %v1767
      %v1828 = vadd.f32 %v1704, %v1768
      %v1829 = vadd.f32 %v1705, %v1769
      %v1830 = vadd.f32 %v1706, %v1770
      %v1831 = vadd.f32 %v1707, %v1771
      %v1832 = vadd.f32 %v1708, %v1772
      %v1833 = vlaneseq
      %v1834 = vshrl.u32 %v1833, 7
      %v1835 = vsub.s32 2, %v1834
      %v1836 = vrot.slane %v402, %v1835
      %v1837 = vmul.f32 %v1836, %v1585
      %v1838 = vmul.f32 %v1836, %v1586
      %v1839 = vmul.f32 %v1836, %v1587
      %v1840 = vmul.f32 %v1836, %v1588
      %v1841 = vmul.f32 %v1836, %v1589
      %v1842 = vmul.f32 %v1836, %v1590
      %v1843 = vmul.f32 %v1836, %v1591
      %v1844 = vmul.f32 %v1836, %v1592
      %v1845 = vmul.f32 %v1836, %v1593
      %v1846 = vmul.f32 %v1836, %v1594
      %v1847 = vmul.f32 %v1836, %v1595
      %v1848 = vmul.f32 %v1836, %v1596
      %v1849 = vmul.f32 %v1836, %v1597
      %v1850 = vmul.f32 %v1836, %v1598
      %v1851 = vmul.f32 %v1836, %v1599
      %v1852 = vmul.f32 %v1836, %v1600
      %v1853 = vmul.f32 %v1836, %v1601
      %v1854 = vmul.f32 %v1836, %v1602
      %v1855 = vmul.f32 %v1836, %v1603
      %v1856 = vmul.f32 %v1836, %v1604
      %v1857 = vmul.f32 %v1836, %v1605
      %v1858 = vmul.f32 %v1836, %v1606
      %v1859 = vmul.f32 %v1836, %v1607
      %v1860 = vmul.f32 %v1836, %v1608
      %v1861 = vmul.f32 %v1836, %v1609
      %v1862 = vmul.f32 %v1836, %v1610
      %v1863 = vmul.f32 %v1836, %v1611
      %v1864 = vmul.f32 %v1836, %v1612
      %v1865 = vmul.f32 %v1836, %v1613
      %v1866 = vmul.f32 %v1836, %v1614
      %v1867 = vmul.f32 %v1836, %v1615
      %v1868 = vmul.f32 %v1836, %v1616
      %v1869 = vmul.f32 %v1836, %v1617
      %v1870 = vmul.f32 %v1836, %v1618
      %v1871 = vmul.f32 %v1836, %v1619
      %v1872 = vmul.f32 %v1836, %v1620
      %v1873 = vmul.f32 %v1836, %v1621
      %v1874 = vmul.f32 %v1836, %v1622
      %v1875 = vmul.f32 %v1836, %v1623
      %v1876 = vmul.f32 %v1836, %v1624
      %v1877 = vmul.f32 %v1836, %v1625
      %v1878 = vmul.f32 %v1836, %v1626
      %v1879 = vmul.f32 %v1836, %v1627
      %v1880 = vmul.f32 %v1836, %v1628
      %v1881 = vmul.f32 %v1836, %v1629
      %v1882 = vmul.f32 %v1836, %v1630
      %v1883 = vmul.f32 %v1836, %v1631
      %v1884 = vmul.f32 %v1836, %v1632
      %v1885 = vmul.f32 %v1836, %v1633
      %v1886 = vmul.f32 %v1836, %v1634
      %v1887 = vmul.f32 %v1836, %v1635
      %v1888 = vmul.f32 %v1836, %v1636
      %v1889 = vmul.f32 %v1836, %v1637
      %v1890 = vmul.f32 %v1836, %v1638
      %v1891 = vmul.f32 %v1836, %v1639
      %v1892 = vmul.f32 %v1836, %v1640
      %v1893 = vmul.f32 %v1836, %v1641
      %v1894 = vmul.f32 %v1836, %v1642
      %v1895 = vmul.f32 %v1836, %v1643
      %v1896 = vmul.f32 %v1836, %v1644
      %v1897 = vadd.f32 %v1773, %v1837
      %v1898 = vadd.f32 %v1774, %v1838
      %v1899 = vadd.f32 %v1775, %v1839
      %v1900 = vadd.f32 %v1776, %v1840
      %v1901 = vadd.f32 %v1777, %v1841
      %v1902 = vadd.f32 %v1778, %v1842
      %v1903 = vadd.f32 %v1779, %v1843
      %v1904 = vadd.f32 %v1780, %v1844
      %v1905 = vadd.f32 %v1781, %v1845
      %v1906 = vadd.f32 %v1782, %v1846
      %v1907 = vadd.f32 %v1783, %v1847
      %v1908 = vadd.f32 %v1784, %v1848
      %v1909 = vadd.f32 %v1785, %v1849
      %v1910 = vadd.f32 %v1786, %v1850
      %v1911 = vadd.f32 %v1787, %v1851
      %v1912 = vadd.f32 %v1788, %v1852
      %v1913 = vadd.f32 %v1789, %v1853
      %v1914 = vadd.f32 %v1790, %v1854
      %v1915 = vadd.f32 %v1791, %v1855
      %v1916 = vadd.f32 %v1792, %v1856
      %v1917 = vadd.f32 %v1793, %v1857
      %v1918 = vadd.f32 %v1794, %v1858
      %v1919 = vadd.f32 %v1795, %v1859
      %v1920 = vadd.f32 %v1796, %v1860
      %v1921 = vadd.f32 %v1797, %v1861
      %v1922 = vadd.f32 %v1798, %v1862
      %v1923 = vadd.f32 %v1799, %v1863
      %v1924 = vadd.f32 %v1800, %v1864
      %v1925 = vadd.f32 %v1801, %v1865
      %v1926 = vadd.f32 %v1802, %v1866
      %v1927 = vadd.f32 %v1803, %v1867
      %v1928 = vadd.f32 %v1804, %v1868
      %v1929 = vadd.f32 %v1805, %v1869
      %v1930 = vadd.f32 %v1806, %v1870
      %v1931 = vadd.f32 %v1807, %v1871
      %v1932 = vadd.f32 %v1808, %v1872
      %v1933 = vadd.f32 %v1809, %v1873
      %v1934 = vadd.f32 %v1810, %v1874
      %v1935 = vadd.f32 %v1811, %v1875
      %v1936 = vadd.f32 %v1812, %v1876
      %v1937 = vadd.f32 %v1813, %v1877
      %v1938 = vadd.f32 %v1814, %v1878
      %v1939 = vadd.f32 %v1815, %v1879
      %v1940 = vadd.f32 %v1816, %v1880
      %v1941 = vadd.f32 %v1817, %v1881
      %v1942 = vadd.f32 %v1818, %v1882
      %v1943 = vadd.f32 %v1819, %v1883
      %v1944 = vadd.f32 %v1820, %v1884
      %v1945 = vadd.f32 %v1821, %v1885
      %v1946 = vadd.f32 %v1822, %v1886
      %v1947 = vadd.f32 %v1823, %v1887
      %v1948 = vadd.f32 %v1824, %v1888
      %v1949 = vadd.f32 %v1825, %v1889
      %v1950 = vadd.f32 %v1826, %v1890
      %v1951 = vadd.f32 %v1827, %v1891
      %v1952 = vadd.f32 %v1828, %v1892
      %v1953 = vadd.f32 %v1829, %v1893
      %v1954 = vadd.f32 %v1830, %v1894
      %v1955 = vadd.f32 %v1831, %v1895
      %v1956 = vadd.f32 %v1832, %v1896
      %vm1957 = vcmp.gt.f32.partialorder %v1897, 0.0
      %vm1958 = vcmp.gt.f32.partialorder %v1898, 0.0
      %vm1959 = vcmp.gt.f32.partialorder %v1899, 0.0
      %vm1960 = vcmp.gt.f32.partialorder %v1900, 0.0
      %vm1961 = vcmp.gt.f32.partialorder %v1901, 0.0
      %vm1962 = vcmp.gt.f32.partialorder %v1902, 0.0
      %vm1963 = vcmp.gt.f32.partialorder %v1903, 0.0
      %vm1964 = vcmp.gt.f32.partialorder %v1904, 0.0
      %vm1965 = vcmp.gt.f32.partialorder %v1905, 0.0
      %vm1966 = vcmp.gt.f32.partialorder %v1906, 0.0
      %vm1967 = vcmp.gt.f32.partialorder %v1907, 0.0
      %vm1968 = vcmp.gt.f32.partialorder %v1908, 0.0
      %vm1969 = vcmp.gt.f32.partialorder %v1909, 0.0
      %vm1970 = vcmp.gt.f32.partialorder %v1910, 0.0
      %vm1971 = vcmp.gt.f32.partialorder %v1911, 0.0
      %vm1972 = vcmp.gt.f32.partialorder %v1912, 0.0
      %vm1973 = vcmp.gt.f32.partialorder %v1913, 0.0
      %vm1974 = vcmp.gt.f32.partialorder %v1914, 0.0
      %vm1975 = vcmp.gt.f32.partialorder %v1915, 0.0
      %vm1976 = vcmp.gt.f32.partialorder %v1916, 0.0
      %vm1977 = vcmp.gt.f32.partialorder %v1917, 0.0
      %vm1978 = vcmp.gt.f32.partialorder %v1918, 0.0
      %vm1979 = vcmp.gt.f32.partialorder %v1919, 0.0
      %vm1980 = vcmp.gt.f32.partialorder %v1920, 0.0
      %vm1981 = vcmp.gt.f32.partialorder %v1921, 0.0
      %vm1982 = vcmp.gt.f32.partialorder %v1922, 0.0
      %vm1983 = vcmp.gt.f32.partialorder %v1923, 0.0
      %vm1984 = vcmp.gt.f32.partialorder %v1924, 0.0
      %vm1985 = vcmp.gt.f32.partialorder %v1925, 0.0
      %vm1986 = vcmp.gt.f32.partialorder %v1926, 0.0
      %vm1987 = vcmp.gt.f32.partialorder %v1927, 0.0
      %vm1988 = vcmp.gt.f32.partialorder %v1928, 0.0
      %vm1989 = vcmp.gt.f32.partialorder %v1929, 0.0
      %vm1990 = vcmp.gt.f32.partialorder %v1930, 0.0
      %vm1991 = vcmp.gt.f32.partialorder %v1931, 0.0
      %vm1992 = vcmp.gt.f32.partialorder %v1932, 0.0
      %vm1993 = vcmp.gt.f32.partialorder %v1933, 0.0
      %vm1994 = vcmp.gt.f32.partialorder %v1934, 0.0
      %vm1995 = vcmp.gt.f32.partialorder %v1935, 0.0
      %vm1996 = vcmp.gt.f32.partialorder %v1936, 0.0
      %vm1997 = vcmp.gt.f32.partialorder %v1937, 0.0
      %vm1998 = vcmp.gt.f32.partialorder %v1938, 0.0
      %vm1999 = vcmp.gt.f32.partialorder %v1939, 0.0
      %vm2000 = vcmp.gt.f32.partialorder %v1940, 0.0
      %vm2001 = vcmp.gt.f32.partialorder %v1941, 0.0
      %vm2002 = vcmp.gt.f32.partialorder %v1942, 0.0
      %vm2003 = vcmp.gt.f32.partialorder %v1943, 0.0
      %vm2004 = vcmp.gt.f32.partialorder %v1944, 0.0
      %vm2005 = vcmp.gt.f32.partialorder %v1945, 0.0
      %vm2006 = vcmp.gt.f32.partialorder %v1946, 0.0
      %vm2007 = vcmp.gt.f32.partialorder %v1947, 0.0
      %vm2008 = vcmp.gt.f32.partialorder %v1948, 0.0
      %vm2009 = vcmp.gt.f32.partialorder %v1949, 0.0
      %vm2010 = vcmp.gt.f32.partialorder %v1950, 0.0
      %vm2011 = vcmp.gt.f32.partialorder %v1951, 0.0
      %vm2012 = vcmp.gt.f32.partialorder %v1952, 0.0
      %vm2013 = vcmp.gt.f32.partialorder %v1953, 0.0
      %vm2014 = vcmp.gt.f32.partialorder %v1954, 0.0
      %vm2015 = vcmp.gt.f32.partialorder %v1955, 0.0
      %vm2016 = vcmp.gt.f32.partialorder %v1956, 0.0
      %v2017 = vmin.f32 %v1897, 0.0
      %v2018 = vmin.f32 %v1898, 0.0
      %v2019 = vmin.f32 %v1899, 0.0
      %v2020 = vmin.f32 %v1900, 0.0
      %v2021 = vmin.f32 %v1901, 0.0
      %v2022 = vmin.f32 %v1902, 0.0
      %v2023 = vmin.f32 %v1903, 0.0
      %v2024 = vmin.f32 %v1904, 0.0
      %v2025 = vmin.f32 %v1905, 0.0
      %v2026 = vmin.f32 %v1906, 0.0
      %v2027 = vmin.f32 %v1907, 0.0
      %v2028 = vmin.f32 %v1908, 0.0
      %v2029 = vmin.f32 %v1909, 0.0
      %v2030 = vmin.f32 %v1910, 0.0
      %v2031 = vmin.f32 %v1911, 0.0
      %v2032 = vmin.f32 %v1912, 0.0
      %v2033 = vmin.f32 %v1913, 0.0
      %v2034 = vmin.f32 %v1914, 0.0
      %v2035 = vmin.f32 %v1915, 0.0
      %v2036 = vmin.f32 %v1916, 0.0
      %v2037 = vmin.f32 %v1917, 0.0
      %v2038 = vmin.f32 %v1918, 0.0
      %v2039 = vmin.f32 %v1919, 0.0
      %v2040 = vmin.f32 %v1920, 0.0
      %v2041 = vmin.f32 %v1921, 0.0
      %v2042 = vmin.f32 %v1922, 0.0
      %v2043 = vmin.f32 %v1923, 0.0
      %v2044 = vmin.f32 %v1924, 0.0
      %v2045 = vmin.f32 %v1925, 0.0
      %v2046 = vmin.f32 %v1926, 0.0
      %v2047 = vmin.f32 %v1927, 0.0
      %v2048 = vmin.f32 %v1928, 0.0
      %v2049 = vmin.f32 %v1929, 0.0
      %v2050 = vmin.f32 %v1930, 0.0
      %v2051 = vmin.f32 %v1931, 0.0
      %v2052 = vmin.f32 %v1932, 0.0
      %v2053 = vmin.f32 %v1933, 0.0
      %v2054 = vmin.f32 %v1934, 0.0
      %v2055 = vmin.f32 %v1935, 0.0
      %v2056 = vmin.f32 %v1936, 0.0
      %v2057 = vmin.f32 %v1937, 0.0
      %v2058 = vmin.f32 %v1938, 0.0
      %v2059 = vmin.f32 %v1939, 0.0
      %v2060 = vmin.f32 %v1940, 0.0
      %v2061 = vmin.f32 %v1941, 0.0
      %v2062 = vmin.f32 %v1942, 0.0
      %v2063 = vmin.f32 %v1943, 0.0
      %v2064 = vmin.f32 %v1944, 0.0
      %v2065 = vmin.f32 %v1945, 0.0
      %v2066 = vmin.f32 %v1946, 0.0
      %v2067 = vmin.f32 %v1947, 0.0
      %v2068 = vmin.f32 %v1948, 0.0
      %v2069 = vmin.f32 %v1949, 0.0
      %v2070 = vmin.f32 %v1950, 0.0
      %v2071 = vmin.f32 %v1951, 0.0
      %v2072 = vmin.f32 %v1952, 0.0
      %v2073 = vmin.f32 %v1953, 0.0
      %v2074 = vmin.f32 %v1954, 0.0
      %v2075 = vmin.f32 %v1955, 0.0
      %v2076 = vmin.f32 %v1956, 0.0
      %v2077 = vmul.f32 %v2017, 1.442695
      %v2078 = vpow.pop %v2077
      %v2079 = vmul.f32 %v2018, 1.442695
      %v2080 = vpow.pop %v2079
      %v2081 = vmul.f32 %v2019, 1.442695
      %v2082 = vpow.pop %v2081
      %v2083 = vmul.f32 %v2020, 1.442695
      %v2084 = vpow.pop %v2083
      %v2085 = vmul.f32 %v2021, 1.442695
      %v2086 = vpow.pop %v2085
      %v2087 = vmul.f32 %v2022, 1.442695
      %v2088 = vpow.pop %v2087
      %v2089 = vmul.f32 %v2023, 1.442695
      %v2090 = vpow.pop %v2089
      %v2091 = vmul.f32 %v2024, 1.442695
      %v2092 = vpow.pop %v2091
      %v2093 = vmul.f32 %v2025, 1.442695
      %v2094 = vpow.pop %v2093
      %v2095 = vmul.f32 %v2026, 1.442695
      %v2096 = vpow.pop %v2095
      %v2097 = vmul.f32 %v2027, 1.442695
      %v2098 = vpow.pop %v2097
      %v2099 = vmul.f32 %v2028, 1.442695
      %v2100 = vpow.pop %v2099
      %v2101 = vmul.f32 %v2029, 1.442695
      %v2102 = vpow.pop %v2101
      %v2103 = vmul.f32 %v2030, 1.442695
      %v2104 = vpow.pop %v2103
      %v2105 = vmul.f32 %v2031, 1.442695
      %v2106 = vpow.pop %v2105
      %v2107 = vmul.f32 %v2032, 1.442695
      %v2108 = vpow.pop %v2107
      %v2109 = vmul.f32 %v2033, 1.442695
      %v2110 = vpow.pop %v2109
      %v2111 = vmul.f32 %v2034, 1.442695
      %v2112 = vpow.pop %v2111
      %v2113 = vmul.f32 %v2035, 1.442695
      %v2114 = vpow.pop %v2113
      %v2115 = vmul.f32 %v2036, 1.442695
      %v2116 = vpow.pop %v2115
      %v2117 = vmul.f32 %v2037, 1.442695
      %v2118 = vpow.pop %v2117
      %v2119 = vmul.f32 %v2038, 1.442695
      %v2120 = vpow.pop %v2119
      %v2121 = vmul.f32 %v2039, 1.442695
      %v2122 = vpow.pop %v2121
      %v2123 = vmul.f32 %v2040, 1.442695
      %v2124 = vpow.pop %v2123
      %v2125 = vmul.f32 %v2041, 1.442695
      %v2126 = vpow.pop %v2125
      %v2127 = vmul.f32 %v2042, 1.442695
      %v2128 = vpow.pop %v2127
      %v2129 = vmul.f32 %v2043, 1.442695
      %v2130 = vpow.pop %v2129
      %v2131 = vmul.f32 %v2044, 1.442695
      %v2132 = vpow.pop %v2131
      %v2133 = vmul.f32 %v2045, 1.442695
      %v2134 = vpow.pop %v2133
      %v2135 = vmul.f32 %v2046, 1.442695
      %v2136 = vpow.pop %v2135
      %v2137 = vmul.f32 %v2047, 1.442695
      %v2138 = vpow.pop %v2137
      %v2139 = vmul.f32 %v2048, 1.442695
      %v2140 = vpow.pop %v2139
      %v2141 = vmul.f32 %v2049, 1.442695
      %v2142 = vpow.pop %v2141
      %v2143 = vmul.f32 %v2050, 1.442695
      %v2144 = vpow.pop %v2143
      %v2145 = vmul.f32 %v2051, 1.442695
      %v2146 = vpow.pop %v2145
      %v2147 = vmul.f32 %v2052, 1.442695
      %v2148 = vpow.pop %v2147
      %v2149 = vmul.f32 %v2053, 1.442695
      %v2150 = vpow.pop %v2149
      %v2151 = vmul.f32 %v2054, 1.442695
      %v2152 = vpow.pop %v2151
      %v2153 = vmul.f32 %v2055, 1.442695
      %v2154 = vpow.pop %v2153
      %v2155 = vmul.f32 %v2056, 1.442695
      %v2156 = vpow.pop %v2155
      %v2157 = vmul.f32 %v2057, 1.442695
      %v2158 = vpow.pop %v2157
      %v2159 = vmul.f32 %v2058, 1.442695
      %v2160 = vpow.pop %v2159
      %v2161 = vmul.f32 %v2059, 1.442695
      %v2162 = vpow.pop %v2161
      %v2163 = vmul.f32 %v2060, 1.442695
      %v2164 = vpow.pop %v2163
      %v2165 = vmul.f32 %v2061, 1.442695
      %v2166 = vpow.pop %v2165
      %v2167 = vmul.f32 %v2062, 1.442695
      %v2168 = vpow.pop %v2167
      %v2169 = vmul.f32 %v2063, 1.442695
      %v2170 = vpow.pop %v2169
      %v2171 = vmul.f32 %v2064, 1.442695
      %v2172 = vpow.pop %v2171
      %v2173 = vmul.f32 %v2065, 1.442695
      %v2174 = vpow.pop %v2173
      %v2175 = vmul.f32 %v2066, 1.442695
      %v2176 = vpow.pop %v2175
      %v2177 = vmul.f32 %v2067, 1.442695
      %v2178 = vpow.pop %v2177
      %v2179 = vmul.f32 %v2068, 1.442695
      %v2180 = vpow.pop %v2179
      %v2181 = vmul.f32 %v2069, 1.442695
      %v2182 = vpow.pop %v2181
      %v2183 = vmul.f32 %v2070, 1.442695
      %v2184 = vpow.pop %v2183
      %v2185 = vmul.f32 %v2071, 1.442695
      %v2186 = vpow.pop %v2185
      %v2187 = vmul.f32 %v2072, 1.442695
      %v2188 = vpow.pop %v2187
      %v2189 = vmul.f32 %v2073, 1.442695
      %v2190 = vpow.pop %v2189
      %v2191 = vmul.f32 %v2074, 1.442695
      %v2192 = vpow.pop %v2191
      %v2193 = vmul.f32 %v2075, 1.442695
      %v2194 = vpow.pop %v2193
      %v2195 = vmul.f32 %v2076, 1.442695
      %v2196 = vpow.pop %v2195
      %v2197 = vsub.f32 %v2078, 1.0
      %v2198 = vsub.f32 %v2080, 1.0
      %v2199 = vsub.f32 %v2082, 1.0
      %v2200 = vsub.f32 %v2084, 1.0
      %v2201 = vsub.f32 %v2086, 1.0
      %v2202 = vsub.f32 %v2088, 1.0
      %v2203 = vsub.f32 %v2090, 1.0
      %v2204 = vsub.f32 %v2092, 1.0
      %v2205 = vsub.f32 %v2094, 1.0
      %v2206 = vsub.f32 %v2096, 1.0
      %v2207 = vsub.f32 %v2098, 1.0
      %v2208 = vsub.f32 %v2100, 1.0
      %v2209 = vsub.f32 %v2102, 1.0
      %v2210 = vsub.f32 %v2104, 1.0
      %v2211 = vsub.f32 %v2106, 1.0
      %v2212 = vsub.f32 %v2108, 1.0
      %v2213 = vsub.f32 %v2110, 1.0
      %v2214 = vsub.f32 %v2112, 1.0
      %v2215 = vsub.f32 %v2114, 1.0
      %v2216 = vsub.f32 %v2116, 1.0
      %v2217 = vsub.f32 %v2118, 1.0
      %v2218 = vsub.f32 %v2120, 1.0
      %v2219 = vsub.f32 %v2122, 1.0
      %v2220 = vsub.f32 %v2124, 1.0
      %v2221 = vsub.f32 %v2126, 1.0
      %v2222 = vsub.f32 %v2128, 1.0
      %v2223 = vsub.f32 %v2130, 1.0
      %v2224 = vsub.f32 %v2132, 1.0
      %v2225 = vsub.f32 %v2134, 1.0
      %v2226 = vsub.f32 %v2136, 1.0
      %v2227 = vsub.f32 %v2138, 1.0
      %v2228 = vsub.f32 %v2140, 1.0
      %v2229 = vsub.f32 %v2142, 1.0
      %v2230 = vsub.f32 %v2144, 1.0
      %v2231 = vsub.f32 %v2146, 1.0
      %v2232 = vsub.f32 %v2148, 1.0
      %v2233 = vsub.f32 %v2150, 1.0
      %v2234 = vsub.f32 %v2152, 1.0
      %v2235 = vsub.f32 %v2154, 1.0
      %v2236 = vsub.f32 %v2156, 1.0
      %v2237 = vsub.f32 %v2158, 1.0
      %v2238 = vsub.f32 %v2160, 1.0
      %v2239 = vsub.f32 %v2162, 1.0
      %v2240 = vsub.f32 %v2164, 1.0
      %v2241 = vsub.f32 %v2166, 1.0
      %v2242 = vsub.f32 %v2168, 1.0
      %v2243 = vsub.f32 %v2170, 1.0
      %v2244 = vsub.f32 %v2172, 1.0
      %v2245 = vsub.f32 %v2174, 1.0
      %v2246 = vsub.f32 %v2176, 1.0
      %v2247 = vsub.f32 %v2178, 1.0
      %v2248 = vsub.f32 %v2180, 1.0
      %v2249 = vsub.f32 %v2182, 1.0
      %v2250 = vsub.f32 %v2184, 1.0
      %v2251 = vsub.f32 %v2186, 1.0
      %v2252 = vsub.f32 %v2188, 1.0
      %v2253 = vsub.f32 %v2190, 1.0
      %v2254 = vsub.f32 %v2192, 1.0
      %v2255 = vsub.f32 %v2194, 1.0
      %v2256 = vsub.f32 %v2196, 1.0
      %v2257 = vmul.f32 %v2197, 1.6732632
      %v2258 = vmul.f32 %v2198, 1.6732632
      %v2259 = vmul.f32 %v2199, 1.6732632
      %v2260 = vmul.f32 %v2200, 1.6732632
      %v2261 = vmul.f32 %v2201, 1.6732632
      %v2262 = vmul.f32 %v2202, 1.6732632
      %v2263 = vmul.f32 %v2203, 1.6732632
      %v2264 = vmul.f32 %v2204, 1.6732632
      %v2265 = vmul.f32 %v2205, 1.6732632
      %v2266 = vmul.f32 %v2206, 1.6732632
      %v2267 = vmul.f32 %v2207, 1.6732632
      %v2268 = vmul.f32 %v2208, 1.6732632
      %v2269 = vmul.f32 %v2209, 1.6732632
      %v2270 = vmul.f32 %v2210, 1.6732632
      %v2271 = vmul.f32 %v2211, 1.6732632
      %v2272 = vmul.f32 %v2212, 1.6732632
      %v2273 = vmul.f32 %v2213, 1.6732632
      %v2274 = vmul.f32 %v2214, 1.6732632
      %v2275 = vmul.f32 %v2215, 1.6732632
      %v2276 = vmul.f32 %v2216, 1.6732632
      %v2277 = vmul.f32 %v2217, 1.6732632
      %v2278 = vmul.f32 %v2218, 1.6732632
      %v2279 = vmul.f32 %v2219, 1.6732632
      %v2280 = vmul.f32 %v2220, 1.6732632
      %v2281 = vmul.f32 %v2221, 1.6732632
      %v2282 = vmul.f32 %v2222, 1.6732632
      %v2283 = vmul.f32 %v2223, 1.6732632
      %v2284 = vmul.f32 %v2224, 1.6732632
      %v2285 = vmul.f32 %v2225, 1.6732632
      %v2286 = vmul.f32 %v2226, 1.6732632
      %v2287 = vmul.f32 %v2227, 1.6732632
      %v2288 = vmul.f32 %v2228, 1.6732632
      %v2289 = vmul.f32 %v2229, 1.6732632
      %v2290 = vmul.f32 %v2230, 1.6732632
      %v2291 = vmul.f32 %v2231, 1.6732632
      %v2292 = vmul.f32 %v2232, 1.6732632
      %v2293 = vmul.f32 %v2233, 1.6732632
      %v2294 = vmul.f32 %v2234, 1.6732632
      %v2295 = vmul.f32 %v2235, 1.6732632
      %v2296 = vmul.f32 %v2236, 1.6732632
      %v2297 = vmul.f32 %v2237, 1.6732632
      %v2298 = vmul.f32 %v2238, 1.6732632
      %v2299 = vmul.f32 %v2239, 1.6732632
      %v2300 = vmul.f32 %v2240, 1.6732632
      %v2301 = vmul.f32 %v2241, 1.6732632
      %v2302 = vmul.f32 %v2242, 1.6732632
      %v2303 = vmul.f32 %v2243, 1.6732632
      %v2304 = vmul.f32 %v2244, 1.6732632
      %v2305 = vmul.f32 %v2245, 1.6732632
      %v2306 = vmul.f32 %v2246, 1.6732632
      %v2307 = vmul.f32 %v2247, 1.6732632
      %v2308 = vmul.f32 %v2248, 1.6732632
      %v2309 = vmul.f32 %v2249, 1.6732632
      %v2310 = vmul.f32 %v2250, 1.6732632
      %v2311 = vmul.f32 %v2251, 1.6732632
      %v2312 = vmul.f32 %v2252, 1.6732632
      %v2313 = vmul.f32 %v2253, 1.6732632
      %v2314 = vmul.f32 %v2254, 1.6732632
      %v2315 = vmul.f32 %v2255, 1.6732632
      %v2316 = vmul.f32 %v2256, 1.6732632
      %v2317 = vsel %vm1957, %v1897, %v2257
      %v2318 = vsel %vm1958, %v1898, %v2258
      %v2319 = vsel %vm1959, %v1899, %v2259
      %v2320 = vsel %vm1960, %v1900, %v2260
      %v2321 = vsel %vm1961, %v1901, %v2261
      %v2322 = vsel %vm1962, %v1902, %v2262
      %v2323 = vsel %vm1963, %v1903, %v2263
      %v2324 = vsel %vm1964, %v1904, %v2264
      %v2325 = vsel %vm1965, %v1905, %v2265
      %v2326 = vsel %vm1966, %v1906, %v2266
      %v2327 = vsel %vm1967, %v1907, %v2267
      %v2328 = vsel %vm1968, %v1908, %v2268
      %v2329 = vsel %vm1969, %v1909, %v2269
      %v2330 = vsel %vm1970, %v1910, %v2270
      %v2331 = vsel %vm1971, %v1911, %v2271
      %v2332 = vsel %vm1972, %v1912, %v2272
      %v2333 = vsel %vm1973, %v1913, %v2273
      %v2334 = vsel %vm1974, %v1914, %v2274
      %v2335 = vsel %vm1975, %v1915, %v2275
      %v2336 = vsel %vm1976, %v1916, %v2276
      %v2337 = vsel %vm1977, %v1917, %v2277
      %v2338 = vsel %vm1978, %v1918, %v2278
      %v2339 = vsel %vm1979, %v1919, %v2279
      %v2340 = vsel %vm1980, %v1920, %v2280
      %v2341 = vsel %vm1981, %v1921, %v2281
      %v2342 = vsel %vm1982, %v1922, %v2282
      %v2343 = vsel %vm1983, %v1923, %v2283
      %v2344 = vsel %vm1984, %v1924, %v2284
      %v2345 = vsel %vm1985, %v1925, %v2285
      %v2346 = vsel %vm1986, %v1926, %v2286
      %v2347 = vsel %vm1987, %v1927, %v2287
      %v2348 = vsel %vm1988, %v1928, %v2288
      %v2349 = vsel %vm1989, %v1929, %v2289
      %v2350 = vsel %vm1990, %v1930, %v2290
      %v2351 = vsel %vm1991, %v1931, %v2291
      %v2352 = vsel %vm1992, %v1932, %v2292
      %v2353 = vsel %vm1993, %v1933, %v2293
      %v2354 = vsel %vm1994, %v1934, %v2294
      %v2355 = vsel %vm1995, %v1935, %v2295
      %v2356 = vsel %vm1996, %v1936, %v2296
      %v2357 = vsel %vm1997, %v1937, %v2297
      %v2358 = vsel %vm1998, %v1938, %v2298
      %v2359 = vsel %vm1999, %v1939, %v2299
      %v2360 = vsel %vm2000, %v1940, %v2300
      %v2361 = vsel %vm2001, %v1941, %v2301
      %v2362 = vsel %vm2002, %v1942, %v2302
      %v2363 = vsel %vm2003, %v1943, %v2303
      %v2364 = vsel %vm2004, %v1944, %v2304
      %v2365 = vsel %vm2005, %v1945, %v2305
      %v2366 = vsel %vm2006, %v1946, %v2306
      %v2367 = vsel %vm2007, %v1947, %v2307
      %v2368 = vsel %vm2008, %v1948, %v2308
      %v2369 = vsel %vm2009, %v1949, %v2309
      %v2370 = vsel %vm2010, %v1950, %v2310
      %v2371 = vsel %vm2011, %v1951, %v2311
      %v2372 = vsel %vm2012, %v1952, %v2312
      %v2373 = vsel %vm2013, %v1953, %v2313
      %v2374 = vsel %vm2014, %v1954, %v2314
      %v2375 = vsel %vm2015, %v1955, %v2315
      %v2376 = vsel %vm2016, %v1956, %v2316
      %v2377 = vmul.f32 %v2317, 1.050701
      %v2378 = vmul.f32 %v2318, 1.050701
      %v2379 = vmul.f32 %v2319, 1.050701
      %v2380 = vmul.f32 %v2320, 1.050701
      %v2381 = vmul.f32 %v2321, 1.050701
      %v2382 = vmul.f32 %v2322, 1.050701
      %v2383 = vmul.f32 %v2323, 1.050701
      %v2384 = vmul.f32 %v2324, 1.050701
      %v2385 = vmul.f32 %v2325, 1.050701
      %v2386 = vmul.f32 %v2326, 1.050701
      %v2387 = vmul.f32 %v2327, 1.050701
      %v2388 = vmul.f32 %v2328, 1.050701
      %v2389 = vmul.f32 %v2329, 1.050701
      %v2390 = vmul.f32 %v2330, 1.050701
      %v2391 = vmul.f32 %v2331, 1.050701
      %v2392 = vmul.f32 %v2332, 1.050701
      %v2393 = vmul.f32 %v2333, 1.050701
      %v2394 = vmul.f32 %v2334, 1.050701
      %v2395 = vmul.f32 %v2335, 1.050701
      %v2396 = vmul.f32 %v2336, 1.050701
      %v2397 = vmul.f32 %v2337, 1.050701
      %v2398 = vmul.f32 %v2338, 1.050701
      %v2399 = vmul.f32 %v2339, 1.050701
      %v2400 = vmul.f32 %v2340, 1.050701
      %v2401 = vmul.f32 %v2341, 1.050701
      %v2402 = vmul.f32 %v2342, 1.050701
      %v2403 = vmul.f32 %v2343, 1.050701
      %v2404 = vmul.f32 %v2344, 1.050701
      %v2405 = vmul.f32 %v2345, 1.050701
      %v2406 = vmul.f32 %v2346, 1.050701
      %v2407 = vmul.f32 %v2347, 1.050701
      %v2408 = vmul.f32 %v2348, 1.050701
      %v2409 = vmul.f32 %v2349, 1.050701
      %v2410 = vmul.f32 %v2350, 1.050701
      %v2411 = vmul.f32 %v2351, 1.050701
      %v2412 = vmul.f32 %v2352, 1.050701
      %v2413 = vmul.f32 %v2353, 1.050701
      %v2414 = vmul.f32 %v2354, 1.050701
      %v2415 = vmul.f32 %v2355, 1.050701
      %v2416 = vmul.f32 %v2356, 1.050701
      %v2417 = vmul.f32 %v2357, 1.050701
      %v2418 = vmul.f32 %v2358, 1.050701
      %v2419 = vmul.f32 %v2359, 1.050701
      %v2420 = vmul.f32 %v2360, 1.050701
      %v2421 = vmul.f32 %v2361, 1.050701
      %v2422 = vmul.f32 %v2362, 1.050701
      %v2423 = vmul.f32 %v2363, 1.050701
      %v2424 = vmul.f32 %v2364, 1.050701
      %v2425 = vmul.f32 %v2365, 1.050701
      %v2426 = vmul.f32 %v2366, 1.050701
      %v2427 = vmul.f32 %v2367, 1.050701
      %v2428 = vmul.f32 %v2368, 1.050701
      %v2429 = vmul.f32 %v2369, 1.050701
      %v2430 = vmul.f32 %v2370, 1.050701
      %v2431 = vmul.f32 %v2371, 1.050701
      %v2432 = vmul.f32 %v2372, 1.050701
      %v2433 = vmul.f32 %v2373, 1.050701
      %v2434 = vmul.f32 %v2374, 1.050701
      %v2435 = vmul.f32 %v2375, 1.050701
      %v2436 = vmul.f32 %v2376, 1.050701
      %v2437 = vadd.s32 %v478, 8
      %v2438 = vadd.s32 %v478, 16
      %vm2439 = vcmp.ge.s32.totalorder %v478, 2
      %vm2440 = vcmp.ge.s32.totalorder %v2437, 2
      %vm2441 = vcmp.ge.s32.totalorder %v2438, 2
      %vm2442 = vmand 0, %vm2439
      %vm2443 = vmand 0, %vm2440
      %vm2444 = vmand 0, %vm2441
      %vm2445 = vmand 1, %vm2439
      %vm2446 = vmand 1, %vm2440
      %vm2447 = vmand 1, %vm2441
      %vm2448 = vcmp.lt.s32.totalorder %v478, 18
      %vm2449 = vcmp.lt.s32.totalorder %v2437, 18
      %vm2450 = vcmp.lt.s32.totalorder %v2438, 18
      %vm2451 = vmand %vm2442, %vm2448
      %vm2452 = vmand %vm2443, %vm2449
      %vm2453 = vmand %vm2444, %vm2450
      %vm2454 = vmand %vm2445, %vm2448
      %vm2455 = vmand %vm2446, %vm2449
      %vm2456 = vmand %vm2447, %vm2450
      %v2457 = vsel %vm2451, 1, 0
      %v2458 = vsel %vm2452, 1, 0
      %v2459 = vsel %vm2453, 1, 0
      %v2460 = vsel %vm2454, 1, 0
      %v2461 = vsel %vm2455, 1, 0
      %v2462 = vsel %vm2456, 1, 0
      %v2463 = vcvt.s32.f32 %v2457
      %v2464 = vcvt.s32.f32 %v2458
      %v2465 = vcvt.s32.f32 %v2459
      %v2466 = vcvt.s32.f32 %v2460
      %v2467 = vcvt.s32.f32 %v2461
      %v2468 = vcvt.s32.f32 %v2462
      %v2469 = vmul.f32 %v2377, %v2463
      %v2470 = vmul.f32 %v2378, %v2464
      %v2471 = vmul.f32 %v2379, %v2465
      %v2472 = vmul.f32 %v2380, %v2463
      %v2473 = vmul.f32 %v2381, %v2464
      %v2474 = vmul.f32 %v2382, %v2465
      %v2475 = vmul.f32 %v2383, %v2466
      %v2476 = vmul.f32 %v2384, %v2467
      %v2477 = vmul.f32 %v2385, %v2468
      %v2478 = vmul.f32 %v2386, %v2466
      %v2479 = vmul.f32 %v2387, %v2467
      %v2480 = vmul.f32 %v2388, %v2468
      %v2481 = vmul.f32 %v2389, %v2466
      %v2482 = vmul.f32 %v2390, %v2467
      %v2483 = vmul.f32 %v2391, %v2468
      %v2484 = vmul.f32 %v2392, %v2466
      %v2485 = vmul.f32 %v2393, %v2467
      %v2486 = vmul.f32 %v2394, %v2468
      %v2487 = vmul.f32 %v2395, %v2466
      %v2488 = vmul.f32 %v2396, %v2467
      %v2489 = vmul.f32 %v2397, %v2468
      %v2490 = vmul.f32 %v2398, %v2466
      %v2491 = vmul.f32 %v2399, %v2467
      %v2492 = vmul.f32 %v2400, %v2468
      %v2493 = vmul.f32 %v2401, %v2466
      %v2494 = vmul.f32 %v2402, %v2467
      %v2495 = vmul.f32 %v2403, %v2468
      %v2496 = vmul.f32 %v2404, %v2466
      %v2497 = vmul.f32 %v2405, %v2467
      %v2498 = vmul.f32 %v2406, %v2468
      %v2499 = vmul.f32 %v2407, %v2466
      %v2500 = vmul.f32 %v2408, %v2467
      %v2501 = vmul.f32 %v2409, %v2468
      %v2502 = vmul.f32 %v2410, %v2466
      %v2503 = vmul.f32 %v2411, %v2467
      %v2504 = vmul.f32 %v2412, %v2468
      %v2505 = vmul.f32 %v2413, %v2466
      %v2506 = vmul.f32 %v2414, %v2467
      %v2507 = vmul.f32 %v2415, %v2468
      %v2508 = vmul.f32 %v2416, %v2466
      %v2509 = vmul.f32 %v2417, %v2467
      %v2510 = vmul.f32 %v2418, %v2468
      %v2511 = vmul.f32 %v2419, %v2466
      %v2512 = vmul.f32 %v2420, %v2467
      %v2513 = vmul.f32 %v2421, %v2468
      %v2514 = vmul.f32 %v2422, %v2466
      %v2515 = vmul.f32 %v2423, %v2467
      %v2516 = vmul.f32 %v2424, %v2468
      %v2517 = vmul.f32 %v2425, %v2466
      %v2518 = vmul.f32 %v2426, %v2467
      %v2519 = vmul.f32 %v2427, %v2468
      %v2520 = vmul.f32 %v2428, %v2466
      %v2521 = vmul.f32 %v2429, %v2467
      %v2522 = vmul.f32 %v2430, %v2468
      %v2523 = vmul.f32 %v2431, %v2463
      %v2524 = vmul.f32 %v2432, %v2464
      %v2525 = vmul.f32 %v2433, %v2465
      %v2526 = vmul.f32 %v2434, %v2463
      %v2527 = vmul.f32 %v2435, %v2464
      %v2528 = vmul.f32 %v2436, %v2465
      %v2529 = vlaneseq
      %v2530 = vshrl.u32 %v2529, 7
      %v2531 = vsub.s32 0, %v2530
      %v2532 = vrot.slane %v403, %v2531
      %v2533 = vmul.f32 %v2532, %v2469
      %v2534 = vmul.f32 %v2532, %v2470
      %v2535 = vmul.f32 %v2532, %v2471
      %v2536 = vmul.f32 %v2532, %v2472
      %v2537 = vmul.f32 %v2532, %v2473
      %v2538 = vmul.f32 %v2532, %v2474
      %v2539 = vmul.f32 %v2532, %v2475
      %v2540 = vmul.f32 %v2532, %v2476
      %v2541 = vmul.f32 %v2532, %v2477
      %v2542 = vmul.f32 %v2532, %v2478
      %v2543 = vmul.f32 %v2532, %v2479
      %v2544 = vmul.f32 %v2532, %v2480
      %v2545 = vmul.f32 %v2532, %v2481
      %v2546 = vmul.f32 %v2532, %v2482
      %v2547 = vmul.f32 %v2532, %v2483
      %v2548 = vmul.f32 %v2532, %v2484
      %v2549 = vmul.f32 %v2532, %v2485
      %v2550 = vmul.f32 %v2532, %v2486
      %v2551 = vmul.f32 %v2532, %v2487
      %v2552 = vmul.f32 %v2532, %v2488
      %v2553 = vmul.f32 %v2532, %v2489
      %v2554 = vmul.f32 %v2532, %v2490
      %v2555 = vmul.f32 %v2532, %v2491
      %v2556 = vmul.f32 %v2532, %v2492
      %v2557 = vmul.f32 %v2532, %v2493
      %v2558 = vmul.f32 %v2532, %v2494
      %v2559 = vmul.f32 %v2532, %v2495
      %v2560 = vmul.f32 %v2532, %v2496
      %v2561 = vmul.f32 %v2532, %v2497
      %v2562 = vmul.f32 %v2532, %v2498
      %v2563 = vmul.f32 %v2532, %v2499
      %v2564 = vmul.f32 %v2532, %v2500
      %v2565 = vmul.f32 %v2532, %v2501
      %v2566 = vmul.f32 %v2532, %v2502
      %v2567 = vmul.f32 %v2532, %v2503
      %v2568 = vmul.f32 %v2532, %v2504
      %v2569 = vmul.f32 %v2532, %v2505
      %v2570 = vmul.f32 %v2532, %v2506
      %v2571 = vmul.f32 %v2532, %v2507
      %v2572 = vmul.f32 %v2532, %v2508
      %v2573 = vmul.f32 %v2532, %v2509
      %v2574 = vmul.f32 %v2532, %v2510
      %v2575 = vmul.f32 %v2532, %v2511
      %v2576 = vmul.f32 %v2532, %v2512
      %v2577 = vmul.f32 %v2532, %v2513
      %v2578 = vmul.f32 %v2532, %v2514
      %v2579 = vmul.f32 %v2532, %v2515
      %v2580 = vmul.f32 %v2532, %v2516
      %v2581 = vlaneseq
      %v2582 = vshrl.u32 %v2581, 7
      %v2583 = vsub.s32 1, %v2582
      %v2584 = vrot.slane %v403, %v2583
      %v2585 = vmul.f32 %v2584, %v2475
      %v2586 = vmul.f32 %v2584, %v2476
      %v2587 = vmul.f32 %v2584, %v2477
      %v2588 = vmul.f32 %v2584, %v2478
      %v2589 = vmul.f32 %v2584, %v2479
      %v2590 = vmul.f32 %v2584, %v2480
      %v2591 = vmul.f32 %v2584, %v2481
      %v2592 = vmul.f32 %v2584, %v2482
      %v2593 = vmul.f32 %v2584, %v2483
      %v2594 = vmul.f32 %v2584, %v2484
      %v2595 = vmul.f32 %v2584, %v2485
      %v2596 = vmul.f32 %v2584, %v2486
      %v2597 = vmul.f32 %v2584, %v2487
      %v2598 = vmul.f32 %v2584, %v2488
      %v2599 = vmul.f32 %v2584, %v2489
      %v2600 = vmul.f32 %v2584, %v2490
      %v2601 = vmul.f32 %v2584, %v2491
      %v2602 = vmul.f32 %v2584, %v2492
      %v2603 = vmul.f32 %v2584, %v2493
      %v2604 = vmul.f32 %v2584, %v2494
      %v2605 = vmul.f32 %v2584, %v2495
      %v2606 = vmul.f32 %v2584, %v2496
      %v2607 = vmul.f32 %v2584, %v2497
      %v2608 = vmul.f32 %v2584, %v2498
      %v2609 = vmul.f32 %v2584, %v2499
      %v2610 = vmul.f32 %v2584, %v2500
      %v2611 = vmul.f32 %v2584, %v2501
      %v2612 = vmul.f32 %v2584, %v2502
      %v2613 = vmul.f32 %v2584, %v2503
      %v2614 = vmul.f32 %v2584, %v2504
      %v2615 = vmul.f32 %v2584, %v2505
      %v2616 = vmul.f32 %v2584, %v2506
      %v2617 = vmul.f32 %v2584, %v2507
      %v2618 = vmul.f32 %v2584, %v2508
      %v2619 = vmul.f32 %v2584, %v2509
      %v2620 = vmul.f32 %v2584, %v2510
      %v2621 = vmul.f32 %v2584, %v2511
      %v2622 = vmul.f32 %v2584, %v2512
      %v2623 = vmul.f32 %v2584, %v2513
      %v2624 = vmul.f32 %v2584, %v2514
      %v2625 = vmul.f32 %v2584, %v2515
      %v2626 = vmul.f32 %v2584, %v2516
      %v2627 = vmul.f32 %v2584, %v2517
      %v2628 = vmul.f32 %v2584, %v2518
      %v2629 = vmul.f32 %v2584, %v2519
      %v2630 = vmul.f32 %v2584, %v2520
      %v2631 = vmul.f32 %v2584, %v2521
      %v2632 = vmul.f32 %v2584, %v2522
      %v2633 = vadd.f32 %v2533, %v2585
      %v2634 = vadd.f32 %v2534, %v2586
      %v2635 = vadd.f32 %v2535, %v2587
      %v2636 = vadd.f32 %v2536, %v2588
      %v2637 = vadd.f32 %v2537, %v2589
      %v2638 = vadd.f32 %v2538, %v2590
      %v2639 = vadd.f32 %v2539, %v2591
      %v2640 = vadd.f32 %v2540, %v2592
      %v2641 = vadd.f32 %v2541, %v2593
      %v2642 = vadd.f32 %v2542, %v2594
      %v2643 = vadd.f32 %v2543, %v2595
      %v2644 = vadd.f32 %v2544, %v2596
      %v2645 = vadd.f32 %v2545, %v2597
      %v2646 = vadd.f32 %v2546, %v2598
      %v2647 = vadd.f32 %v2547, %v2599
      %v2648 = vadd.f32 %v2548, %v2600
      %v2649 = vadd.f32 %v2549, %v2601
      %v2650 = vadd.f32 %v2550, %v2602
      %v2651 = vadd.f32 %v2551, %v2603
      %v2652 = vadd.f32 %v2552, %v2604
      %v2653 = vadd.f32 %v2553, %v2605
      %v2654 = vadd.f32 %v2554, %v2606
      %v2655 = vadd.f32 %v2555, %v2607
      %v2656 = vadd.f32 %v2556, %v2608
      %v2657 = vadd.f32 %v2557, %v2609
      %v2658 = vadd.f32 %v2558, %v2610
      %v2659 = vadd.f32 %v2559, %v2611
      %v2660 = vadd.f32 %v2560, %v2612
      %v2661 = vadd.f32 %v2561, %v2613
      %v2662 = vadd.f32 %v2562, %v2614
      %v2663 = vadd.f32 %v2563, %v2615
      %v2664 = vadd.f32 %v2564, %v2616
      %v2665 = vadd.f32 %v2565, %v2617
      %v2666 = vadd.f32 %v2566, %v2618
      %v2667 = vadd.f32 %v2567, %v2619
      %v2668 = vadd.f32 %v2568, %v2620
      %v2669 = vadd.f32 %v2569, %v2621
      %v2670 = vadd.f32 %v2570, %v2622
      %v2671 = vadd.f32 %v2571, %v2623
      %v2672 = vadd.f32 %v2572, %v2624
      %v2673 = vadd.f32 %v2573, %v2625
      %v2674 = vadd.f32 %v2574, %v2626
      %v2675 = vadd.f32 %v2575, %v2627
      %v2676 = vadd.f32 %v2576, %v2628
      %v2677 = vadd.f32 %v2577, %v2629
      %v2678 = vadd.f32 %v2578, %v2630
      %v2679 = vadd.f32 %v2579, %v2631
      %v2680 = vadd.f32 %v2580, %v2632
      %v2681 = vlaneseq
      %v2682 = vshrl.u32 %v2681, 7
      %v2683 = vsub.s32 2, %v2682
      %v2684 = vrot.slane %v403, %v2683
      %v2685 = vmul.f32 %v2684, %v2481
      %v2686 = vmul.f32 %v2684, %v2482
      %v2687 = vmul.f32 %v2684, %v2483
      %v2688 = vmul.f32 %v2684, %v2484
      %v2689 = vmul.f32 %v2684, %v2485
      %v2690 = vmul.f32 %v2684, %v2486
      %v2691 = vmul.f32 %v2684, %v2487
      %v2692 = vmul.f32 %v2684, %v2488
      %v2693 = vmul.f32 %v2684, %v2489
      %v2694 = vmul.f32 %v2684, %v2490
      %v2695 = vmul.f32 %v2684, %v2491
      %v2696 = vmul.f32 %v2684, %v2492
      %v2697 = vmul.f32 %v2684, %v2493
      %v2698 = vmul.f32 %v2684, %v2494
      %v2699 = vmul.f32 %v2684, %v2495
      %v2700 = vmul.f32 %v2684, %v2496
      %v2701 = vmul.f32 %v2684, %v2497
      %v2702 = vmul.f32 %v2684, %v2498
      %v2703 = vmul.f32 %v2684, %v2499
      %v2704 = vmul.f32 %v2684, %v2500
      %v2705 = vmul.f32 %v2684, %v2501
      %v2706 = vmul.f32 %v2684, %v2502
      %v2707 = vmul.f32 %v2684, %v2503
      %v2708 = vmul.f32 %v2684, %v2504
      %v2709 = vmul.f32 %v2684, %v2505
      %v2710 = vmul.f32 %v2684, %v2506
      %v2711 = vmul.f32 %v2684, %v2507
      %v2712 = vmul.f32 %v2684, %v2508
      %v2713 = vmul.f32 %v2684, %v2509
      %v2714 = vmul.f32 %v2684, %v2510
      %v2715 = vmul.f32 %v2684, %v2511
      %v2716 = vmul.f32 %v2684, %v2512
      %v2717 = vmul.f32 %v2684, %v2513
      %v2718 = vmul.f32 %v2684, %v2514
      %v2719 = vmul.f32 %v2684, %v2515
      %v2720 = vmul.f32 %v2684, %v2516
      %v2721 = vmul.f32 %v2684, %v2517
      %v2722 = vmul.f32 %v2684, %v2518
      %v2723 = vmul.f32 %v2684, %v2519
      %v2724 = vmul.f32 %v2684, %v2520
      %v2725 = vmul.f32 %v2684, %v2521
      %v2726 = vmul.f32 %v2684, %v2522
      %v2727 = vmul.f32 %v2684, %v2523
      %v2728 = vmul.f32 %v2684, %v2524
      %v2729 = vmul.f32 %v2684, %v2525
      %v2730 = vmul.f32 %v2684, %v2526
      %v2731 = vmul.f32 %v2684, %v2527
      %v2732 = vmul.f32 %v2684, %v2528
      %v2733 = vadd.f32 %v2633, %v2685
      %v2734 = vadd.f32 %v2634, %v2686
      %v2735 = vadd.f32 %v2635, %v2687
      %v2736 = vadd.f32 %v2636, %v2688
      %v2737 = vadd.f32 %v2637, %v2689
      %v2738 = vadd.f32 %v2638, %v2690
      %v2739 = vadd.f32 %v2639, %v2691
      %v2740 = vadd.f32 %v2640, %v2692
      %v2741 = vadd.f32 %v2641, %v2693
      %v2742 = vadd.f32 %v2642, %v2694
      %v2743 = vadd.f32 %v2643, %v2695
      %v2744 = vadd.f32 %v2644, %v2696
      %v2745 = vadd.f32 %v2645, %v2697
      %v2746 = vadd.f32 %v2646, %v2698
      %v2747 = vadd.f32 %v2647, %v2699
      %v2748 = vadd.f32 %v2648, %v2700
      %v2749 = vadd.f32 %v2649, %v2701
      %v2750 = vadd.f32 %v2650, %v2702
      %v2751 = vadd.f32 %v2651, %v2703
      %v2752 = vadd.f32 %v2652, %v2704
      %v2753 = vadd.f32 %v2653, %v2705
      %v2754 = vadd.f32 %v2654, %v2706
      %v2755 = vadd.f32 %v2655, %v2707
      %v2756 = vadd.f32 %v2656, %v2708
      %v2757 = vadd.f32 %v2657, %v2709
      %v2758 = vadd.f32 %v2658, %v2710
      %v2759 = vadd.f32 %v2659, %v2711
      %v2760 = vadd.f32 %v2660, %v2712
      %v2761 = vadd.f32 %v2661, %v2713
      %v2762 = vadd.f32 %v2662, %v2714
      %v2763 = vadd.f32 %v2663, %v2715
      %v2764 = vadd.f32 %v2664, %v2716
      %v2765 = vadd.f32 %v2665, %v2717
      %v2766 = vadd.f32 %v2666, %v2718
      %v2767 = vadd.f32 %v2667, %v2719
      %v2768 = vadd.f32 %v2668, %v2720
      %v2769 = vadd.f32 %v2669, %v2721
      %v2770 = vadd.f32 %v2670, %v2722
      %v2771 = vadd.f32 %v2671, %v2723
      %v2772 = vadd.f32 %v2672, %v2724
      %v2773 = vadd.f32 %v2673, %v2725
      %v2774 = vadd.f32 %v2674, %v2726
      %v2775 = vadd.f32 %v2675, %v2727
      %v2776 = vadd.f32 %v2676, %v2728
      %v2777 = vadd.f32 %v2677, %v2729
      %v2778 = vadd.f32 %v2678, %v2730
      %v2779 = vadd.f32 %v2679, %v2731
      %v2780 = vadd.f32 %v2680, %v2732
      %vm2781 = vcmp.gt.f32.partialorder %v2733, 0.0
      %vm2782 = vcmp.gt.f32.partialorder %v2734, 0.0
      %vm2783 = vcmp.gt.f32.partialorder %v2735, 0.0
      %vm2784 = vcmp.gt.f32.partialorder %v2736, 0.0
      %vm2785 = vcmp.gt.f32.partialorder %v2737, 0.0
      %vm2786 = vcmp.gt.f32.partialorder %v2738, 0.0
      %vm2787 = vcmp.gt.f32.partialorder %v2739, 0.0
      %vm2788 = vcmp.gt.f32.partialorder %v2740, 0.0
      %vm2789 = vcmp.gt.f32.partialorder %v2741, 0.0
      %vm2790 = vcmp.gt.f32.partialorder %v2742, 0.0
      %vm2791 = vcmp.gt.f32.partialorder %v2743, 0.0
      %vm2792 = vcmp.gt.f32.partialorder %v2744, 0.0
      %vm2793 = vcmp.gt.f32.partialorder %v2745, 0.0
      %vm2794 = vcmp.gt.f32.partialorder %v2746, 0.0
      %vm2795 = vcmp.gt.f32.partialorder %v2747, 0.0
      %vm2796 = vcmp.gt.f32.partialorder %v2748, 0.0
      %vm2797 = vcmp.gt.f32.partialorder %v2749, 0.0
      %vm2798 = vcmp.gt.f32.partialorder %v2750, 0.0
      %vm2799 = vcmp.gt.f32.partialorder %v2751, 0.0
      %vm2800 = vcmp.gt.f32.partialorder %v2752, 0.0
      %vm2801 = vcmp.gt.f32.partialorder %v2753, 0.0
      %vm2802 = vcmp.gt.f32.partialorder %v2754, 0.0
      %vm2803 = vcmp.gt.f32.partialorder %v2755, 0.0
      %vm2804 = vcmp.gt.f32.partialorder %v2756, 0.0
      %vm2805 = vcmp.gt.f32.partialorder %v2757, 0.0
      %vm2806 = vcmp.gt.f32.partialorder %v2758, 0.0
      %vm2807 = vcmp.gt.f32.partialorder %v2759, 0.0
      %vm2808 = vcmp.gt.f32.partialorder %v2760, 0.0
      %vm2809 = vcmp.gt.f32.partialorder %v2761, 0.0
      %vm2810 = vcmp.gt.f32.partialorder %v2762, 0.0
      %vm2811 = vcmp.gt.f32.partialorder %v2763, 0.0
      %vm2812 = vcmp.gt.f32.partialorder %v2764, 0.0
      %vm2813 = vcmp.gt.f32.partialorder %v2765, 0.0
      %vm2814 = vcmp.gt.f32.partialorder %v2766, 0.0
      %vm2815 = vcmp.gt.f32.partialorder %v2767, 0.0
      %vm2816 = vcmp.gt.f32.partialorder %v2768, 0.0
      %vm2817 = vcmp.gt.f32.partialorder %v2769, 0.0
      %vm2818 = vcmp.gt.f32.partialorder %v2770, 0.0
      %vm2819 = vcmp.gt.f32.partialorder %v2771, 0.0
      %vm2820 = vcmp.gt.f32.partialorder %v2772, 0.0
      %vm2821 = vcmp.gt.f32.partialorder %v2773, 0.0
      %vm2822 = vcmp.gt.f32.partialorder %v2774, 0.0
      %vm2823 = vcmp.gt.f32.partialorder %v2775, 0.0
      %vm2824 = vcmp.gt.f32.partialorder %v2776, 0.0
      %vm2825 = vcmp.gt.f32.partialorder %v2777, 0.0
      %vm2826 = vcmp.gt.f32.partialorder %v2778, 0.0
      %vm2827 = vcmp.gt.f32.partialorder %v2779, 0.0
      %vm2828 = vcmp.gt.f32.partialorder %v2780, 0.0
      %v2829 = vmin.f32 %v2733, 0.0
      %v2830 = vmin.f32 %v2734, 0.0
      %v2831 = vmin.f32 %v2735, 0.0
      %v2832 = vmin.f32 %v2736, 0.0
      %v2833 = vmin.f32 %v2737, 0.0
      %v2834 = vmin.f32 %v2738, 0.0
      %v2835 = vmin.f32 %v2739, 0.0
      %v2836 = vmin.f32 %v2740, 0.0
      %v2837 = vmin.f32 %v2741, 0.0
      %v2838 = vmin.f32 %v2742, 0.0
      %v2839 = vmin.f32 %v2743, 0.0
      %v2840 = vmin.f32 %v2744, 0.0
      %v2841 = vmin.f32 %v2745, 0.0
      %v2842 = vmin.f32 %v2746, 0.0
      %v2843 = vmin.f32 %v2747, 0.0
      %v2844 = vmin.f32 %v2748, 0.0
      %v2845 = vmin.f32 %v2749, 0.0
      %v2846 = vmin.f32 %v2750, 0.0
      %v2847 = vmin.f32 %v2751, 0.0
      %v2848 = vmin.f32 %v2752, 0.0
      %v2849 = vmin.f32 %v2753, 0.0
      %v2850 = vmin.f32 %v2754, 0.0
      %v2851 = vmin.f32 %v2755, 0.0
      %v2852 = vmin.f32 %v2756, 0.0
      %v2853 = vmin.f32 %v2757, 0.0
      %v2854 = vmin.f32 %v2758, 0.0
      %v2855 = vmin.f32 %v2759, 0.0
      %v2856 = vmin.f32 %v2760, 0.0
      %v2857 = vmin.f32 %v2761, 0.0
      %v2858 = vmin.f32 %v2762, 0.0
      %v2859 = vmin.f32 %v2763, 0.0
      %v2860 = vmin.f32 %v2764, 0.0
      %v2861 = vmin.f32 %v2765, 0.0
      %v2862 = vmin.f32 %v2766, 0.0
      %v2863 = vmin.f32 %v2767, 0.0
      %v2864 = vmin.f32 %v2768, 0.0
      %v2865 = vmin.f32 %v2769, 0.0
      %v2866 = vmin.f32 %v2770, 0.0
      %v2867 = vmin.f32 %v2771, 0.0
      %v2868 = vmin.f32 %v2772, 0.0
      %v2869 = vmin.f32 %v2773, 0.0
      %v2870 = vmin.f32 %v2774, 0.0
      %v2871 = vmin.f32 %v2775, 0.0
      %v2872 = vmin.f32 %v2776, 0.0
      %v2873 = vmin.f32 %v2777, 0.0
      %v2874 = vmin.f32 %v2778, 0.0
      %v2875 = vmin.f32 %v2779, 0.0
      %v2876 = vmin.f32 %v2780, 0.0
      %v2877 = vmul.f32 %v2829, 1.442695
      %v2878 = vpow.pop %v2877
      %v2879 = vmul.f32 %v2830, 1.442695
      %v2880 = vpow.pop %v2879
      %v2881 = vmul.f32 %v2831, 1.442695
      %v2882 = vpow.pop %v2881
      %v2883 = vmul.f32 %v2832, 1.442695
      %v2884 = vpow.pop %v2883
      %v2885 = vmul.f32 %v2833, 1.442695
      %v2886 = vpow.pop %v2885
      %v2887 = vmul.f32 %v2834, 1.442695
      %v2888 = vpow.pop %v2887
      %v2889 = vmul.f32 %v2835, 1.442695
      %v2890 = vpow.pop %v2889
      %v2891 = vmul.f32 %v2836, 1.442695
      %v2892 = vpow.pop %v2891
      %v2893 = vmul.f32 %v2837, 1.442695
      %v2894 = vpow.pop %v2893
      %v2895 = vmul.f32 %v2838, 1.442695
      %v2896 = vpow.pop %v2895
      %v2897 = vmul.f32 %v2839, 1.442695
      %v2898 = vpow.pop %v2897
      %v2899 = vmul.f32 %v2840, 1.442695
      %v2900 = vpow.pop %v2899
      %v2901 = vmul.f32 %v2841, 1.442695
      %v2902 = vpow.pop %v2901
      %v2903 = vmul.f32 %v2842, 1.442695
      %v2904 = vpow.pop %v2903
      %v2905 = vmul.f32 %v2843, 1.442695
      %v2906 = vpow.pop %v2905
      %v2907 = vmul.f32 %v2844, 1.442695
      %v2908 = vpow.pop %v2907
      %v2909 = vmul.f32 %v2845, 1.442695
      %v2910 = vpow.pop %v2909
      %v2911 = vmul.f32 %v2846, 1.442695
      %v2912 = vpow.pop %v2911
      %v2913 = vmul.f32 %v2847, 1.442695
      %v2914 = vpow.pop %v2913
      %v2915 = vmul.f32 %v2848, 1.442695
      %v2916 = vpow.pop %v2915
      %v2917 = vmul.f32 %v2849, 1.442695
      %v2918 = vpow.pop %v2917
      %v2919 = vmul.f32 %v2850, 1.442695
      %v2920 = vpow.pop %v2919
      %v2921 = vmul.f32 %v2851, 1.442695
      %v2922 = vpow.pop %v2921
      %v2923 = vmul.f32 %v2852, 1.442695
      %v2924 = vpow.pop %v2923
      %v2925 = vmul.f32 %v2853, 1.442695
      %v2926 = vpow.pop %v2925
      %v2927 = vmul.f32 %v2854, 1.442695
      %v2928 = vpow.pop %v2927
      %v2929 = vmul.f32 %v2855, 1.442695
      %v2930 = vpow.pop %v2929
      %v2931 = vmul.f32 %v2856, 1.442695
      %v2932 = vpow.pop %v2931
      %v2933 = vmul.f32 %v2857, 1.442695
      %v2934 = vpow.pop %v2933
      %v2935 = vmul.f32 %v2858, 1.442695
      %v2936 = vpow.pop %v2935
      %v2937 = vmul.f32 %v2859, 1.442695
      %v2938 = vpow.pop %v2937
      %v2939 = vmul.f32 %v2860, 1.442695
      %v2940 = vpow.pop %v2939
      %v2941 = vmul.f32 %v2861, 1.442695
      %v2942 = vpow.pop %v2941
      %v2943 = vmul.f32 %v2862, 1.442695
      %v2944 = vpow.pop %v2943
      %v2945 = vmul.f32 %v2863, 1.442695
      %v2946 = vpow.pop %v2945
      %v2947 = vmul.f32 %v2864, 1.442695
      %v2948 = vpow.pop %v2947
      %v2949 = vmul.f32 %v2865, 1.442695
      %v2950 = vpow.pop %v2949
      %v2951 = vmul.f32 %v2866, 1.442695
      %v2952 = vpow.pop %v2951
      %v2953 = vmul.f32 %v2867, 1.442695
      %v2954 = vpow.pop %v2953
      %v2955 = vmul.f32 %v2868, 1.442695
      %v2956 = vpow.pop %v2955
      %v2957 = vmul.f32 %v2869, 1.442695
      %v2958 = vpow.pop %v2957
      %v2959 = vmul.f32 %v2870, 1.442695
      %v2960 = vpow.pop %v2959
      %v2961 = vmul.f32 %v2871, 1.442695
      %v2962 = vpow.pop %v2961
      %v2963 = vmul.f32 %v2872, 1.442695
      %v2964 = vpow.pop %v2963
      %v2965 = vmul.f32 %v2873, 1.442695
      %v2966 = vpow.pop %v2965
      %v2967 = vmul.f32 %v2874, 1.442695
      %v2968 = vpow.pop %v2967
      %v2969 = vmul.f32 %v2875, 1.442695
      %v2970 = vpow.pop %v2969
      %v2971 = vmul.f32 %v2876, 1.442695
      %v2972 = vpow.pop %v2971
      %v2973 = vsub.f32 %v2878, 1.0
      %v2974 = vsub.f32 %v2880, 1.0
      %v2975 = vsub.f32 %v2882, 1.0
      %v2976 = vsub.f32 %v2884, 1.0
      %v2977 = vsub.f32 %v2886, 1.0
      %v2978 = vsub.f32 %v2888, 1.0
      %v2979 = vsub.f32 %v2890, 1.0
      %v2980 = vsub.f32 %v2892, 1.0
      %v2981 = vsub.f32 %v2894, 1.0
      %v2982 = vsub.f32 %v2896, 1.0
      %v2983 = vsub.f32 %v2898, 1.0
      %v2984 = vsub.f32 %v2900, 1.0
      %v2985 = vsub.f32 %v2902, 1.0
      %v2986 = vsub.f32 %v2904, 1.0
      %v2987 = vsub.f32 %v2906, 1.0
      %v2988 = vsub.f32 %v2908, 1.0
      %v2989 = vsub.f32 %v2910, 1.0
      %v2990 = vsub.f32 %v2912, 1.0
      %v2991 = vsub.f32 %v2914, 1.0
      %v2992 = vsub.f32 %v2916, 1.0
      %v2993 = vsub.f32 %v2918, 1.0
      %v2994 = vsub.f32 %v2920, 1.0
      %v2995 = vsub.f32 %v2922, 1.0
      %v2996 = vsub.f32 %v2924, 1.0
      %v2997 = vsub.f32 %v2926, 1.0
      %v2998 = vsub.f32 %v2928, 1.0
      %v2999 = vsub.f32 %v2930, 1.0
      %v3000 = vsub.f32 %v2932, 1.0
      %v3001 = vsub.f32 %v2934, 1.0
      %v3002 = vsub.f32 %v2936, 1.0
      %v3003 = vsub.f32 %v2938, 1.0
      %v3004 = vsub.f32 %v2940, 1.0
      %v3005 = vsub.f32 %v2942, 1.0
      %v3006 = vsub.f32 %v2944, 1.0
      %v3007 = vsub.f32 %v2946, 1.0
      %v3008 = vsub.f32 %v2948, 1.0
      %v3009 = vsub.f32 %v2950, 1.0
      %v3010 = vsub.f32 %v2952, 1.0
      %v3011 = vsub.f32 %v2954, 1.0
      %v3012 = vsub.f32 %v2956, 1.0
      %v3013 = vsub.f32 %v2958, 1.0
      %v3014 = vsub.f32 %v2960, 1.0
      %v3015 = vsub.f32 %v2962, 1.0
      %v3016 = vsub.f32 %v2964, 1.0
      %v3017 = vsub.f32 %v2966, 1.0
      %v3018 = vsub.f32 %v2968, 1.0
      %v3019 = vsub.f32 %v2970, 1.0
      %v3020 = vsub.f32 %v2972, 1.0
      %v3021 = vmul.f32 %v2973, 1.6732632
      %v3022 = vmul.f32 %v2974, 1.6732632
      %v3023 = vmul.f32 %v2975, 1.6732632
      %v3024 = vmul.f32 %v2976, 1.6732632
      %v3025 = vmul.f32 %v2977, 1.6732632
      %v3026 = vmul.f32 %v2978, 1.6732632
      %v3027 = vmul.f32 %v2979, 1.6732632
      %v3028 = vmul.f32 %v2980, 1.6732632
      %v3029 = vmul.f32 %v2981, 1.6732632
      %v3030 = vmul.f32 %v2982, 1.6732632
      %v3031 = vmul.f32 %v2983, 1.6732632
      %v3032 = vmul.f32 %v2984, 1.6732632
      %v3033 = vmul.f32 %v2985, 1.6732632
      %v3034 = vmul.f32 %v2986, 1.6732632
      %v3035 = vmul.f32 %v2987, 1.6732632
      %v3036 = vmul.f32 %v2988, 1.6732632
      %v3037 = vmul.f32 %v2989, 1.6732632
      %v3038 = vmul.f32 %v2990, 1.6732632
      %v3039 = vmul.f32 %v2991, 1.6732632
      %v3040 = vmul.f32 %v2992, 1.6732632
      %v3041 = vmul.f32 %v2993, 1.6732632
      %v3042 = vmul.f32 %v2994, 1.6732632
      %v3043 = vmul.f32 %v2995, 1.6732632
      %v3044 = vmul.f32 %v2996, 1.6732632
      %v3045 = vmul.f32 %v2997, 1.6732632
      %v3046 = vmul.f32 %v2998, 1.6732632
      %v3047 = vmul.f32 %v2999, 1.6732632
      %v3048 = vmul.f32 %v3000, 1.6732632
      %v3049 = vmul.f32 %v3001, 1.6732632
      %v3050 = vmul.f32 %v3002, 1.6732632
      %v3051 = vmul.f32 %v3003, 1.6732632
      %v3052 = vmul.f32 %v3004, 1.6732632
      %v3053 = vmul.f32 %v3005, 1.6732632
      %v3054 = vmul.f32 %v3006, 1.6732632
      %v3055 = vmul.f32 %v3007, 1.6732632
      %v3056 = vmul.f32 %v3008, 1.6732632
      %v3057 = vmul.f32 %v3009, 1.6732632
      %v3058 = vmul.f32 %v3010, 1.6732632
      %v3059 = vmul.f32 %v3011, 1.6732632
      %v3060 = vmul.f32 %v3012, 1.6732632
      %v3061 = vmul.f32 %v3013, 1.6732632
      %v3062 = vmul.f32 %v3014, 1.6732632
      %v3063 = vmul.f32 %v3015, 1.6732632
      %v3064 = vmul.f32 %v3016, 1.6732632
      %v3065 = vmul.f32 %v3017, 1.6732632
      %v3066 = vmul.f32 %v3018, 1.6732632
      %v3067 = vmul.f32 %v3019, 1.6732632
      %v3068 = vmul.f32 %v3020, 1.6732632
      %v3069 = vsel %vm2781, %v2733, %v3021
      %v3070 = vsel %vm2782, %v2734, %v3022
      %v3071 = vsel %vm2783, %v2735, %v3023
      %v3072 = vsel %vm2784, %v2736, %v3024
      %v3073 = vsel %vm2785, %v2737, %v3025
      %v3074 = vsel %vm2786, %v2738, %v3026
      %v3075 = vsel %vm2787, %v2739, %v3027
      %v3076 = vsel %vm2788, %v2740, %v3028
      %v3077 = vsel %vm2789, %v2741, %v3029
      %v3078 = vsel %vm2790, %v2742, %v3030
      %v3079 = vsel %vm2791, %v2743, %v3031
      %v3080 = vsel %vm2792, %v2744, %v3032
      %v3081 = vsel %vm2793, %v2745, %v3033
      %v3082 = vsel %vm2794, %v2746, %v3034
      %v3083 = vsel %vm2795, %v2747, %v3035
      %v3084 = vsel %vm2796, %v2748, %v3036
      %v3085 = vsel %vm2797, %v2749, %v3037
      %v3086 = vsel %vm2798, %v2750, %v3038
      %v3087 = vsel %vm2799, %v2751, %v3039
      %v3088 = vsel %vm2800, %v2752, %v3040
      %v3089 = vsel %vm2801, %v2753, %v3041
      %v3090 = vsel %vm2802, %v2754, %v3042
      %v3091 = vsel %vm2803, %v2755, %v3043
      %v3092 = vsel %vm2804, %v2756, %v3044
      %v3093 = vsel %vm2805, %v2757, %v3045
      %v3094 = vsel %vm2806, %v2758, %v3046
      %v3095 = vsel %vm2807, %v2759, %v3047
      %v3096 = vsel %vm2808, %v2760, %v3048
      %v3097 = vsel %vm2809, %v2761, %v3049
      %v3098 = vsel %vm2810, %v2762, %v3050
      %v3099 = vsel %vm2811, %v2763, %v3051
      %v3100 = vsel %vm2812, %v2764, %v3052
      %v3101 = vsel %vm2813, %v2765, %v3053
      %v3102 = vsel %vm2814, %v2766, %v3054
      %v3103 = vsel %vm2815, %v2767, %v3055
      %v3104 = vsel %vm2816, %v2768, %v3056
      %v3105 = vsel %vm2817, %v2769, %v3057
      %v3106 = vsel %vm2818, %v2770, %v3058
      %v3107 = vsel %vm2819, %v2771, %v3059
      %v3108 = vsel %vm2820, %v2772, %v3060
      %v3109 = vsel %vm2821, %v2773, %v3061
      %v3110 = vsel %vm2822, %v2774, %v3062
      %v3111 = vsel %vm2823, %v2775, %v3063
      %v3112 = vsel %vm2824, %v2776, %v3064
      %v3113 = vsel %vm2825, %v2777, %v3065
      %v3114 = vsel %vm2826, %v2778, %v3066
      %v3115 = vsel %vm2827, %v2779, %v3067
      %v3116 = vsel %vm2828, %v2780, %v3068
      %v3117 = vmul.f32 %v3069, 1.050701
      %v3118 = vmul.f32 %v3070, 1.050701
      %v3119 = vmul.f32 %v3071, 1.050701
      %v3120 = vmul.f32 %v3072, 1.050701
      %v3121 = vmul.f32 %v3073, 1.050701
      %v3122 = vmul.f32 %v3074, 1.050701
      %v3123 = vmul.f32 %v3075, 1.050701
      %v3124 = vmul.f32 %v3076, 1.050701
      %v3125 = vmul.f32 %v3077, 1.050701
      %v3126 = vmul.f32 %v3078, 1.050701
      %v3127 = vmul.f32 %v3079, 1.050701
      %v3128 = vmul.f32 %v3080, 1.050701
      %v3129 = vmul.f32 %v3081, 1.050701
      %v3130 = vmul.f32 %v3082, 1.050701
      %v3131 = vmul.f32 %v3083, 1.050701
      %v3132 = vmul.f32 %v3084, 1.050701
      %v3133 = vmul.f32 %v3085, 1.050701
      %v3134 = vmul.f32 %v3086, 1.050701
      %v3135 = vmul.f32 %v3087, 1.050701
      %v3136 = vmul.f32 %v3088, 1.050701
      %v3137 = vmul.f32 %v3089, 1.050701
      %v3138 = vmul.f32 %v3090, 1.050701
      %v3139 = vmul.f32 %v3091, 1.050701
      %v3140 = vmul.f32 %v3092, 1.050701
      %v3141 = vmul.f32 %v3093, 1.050701
      %v3142 = vmul.f32 %v3094, 1.050701
      %v3143 = vmul.f32 %v3095, 1.050701
      %v3144 = vmul.f32 %v3096, 1.050701
      %v3145 = vmul.f32 %v3097, 1.050701
      %v3146 = vmul.f32 %v3098, 1.050701
      %v3147 = vmul.f32 %v3099, 1.050701
      %v3148 = vmul.f32 %v3100, 1.050701
      %v3149 = vmul.f32 %v3101, 1.050701
      %v3150 = vmul.f32 %v3102, 1.050701
      %v3151 = vmul.f32 %v3103, 1.050701
      %v3152 = vmul.f32 %v3104, 1.050701
      %v3153 = vmul.f32 %v3105, 1.050701
      %v3154 = vmul.f32 %v3106, 1.050701
      %v3155 = vmul.f32 %v3107, 1.050701
      %v3156 = vmul.f32 %v3108, 1.050701
      %v3157 = vmul.f32 %v3109, 1.050701
      %v3158 = vmul.f32 %v3110, 1.050701
      %v3159 = vmul.f32 %v3111, 1.050701
      %v3160 = vmul.f32 %v3112, 1.050701
      %v3161 = vmul.f32 %v3113, 1.050701
      %v3162 = vmul.f32 %v3114, 1.050701
      %v3163 = vmul.f32 %v3115, 1.050701
      %v3164 = vmul.f32 %v3116, 1.050701
      %v3165 = vrot.slane %v3117, 6
      %v3166 = vrot.slane %v3120, 6
      %v3167 = vrot.slane %v3123, 6
      %v3168 = vrot.slane %v3126, 6
      %v3169 = vrot.slane %v3129, 6
      %v3170 = vrot.slane %v3132, 6
      %v3171 = vrot.slane %v3135, 6
      %v3172 = vrot.slane %v3138, 6
      %v3173 = vrot.slane %v3141, 6
      %v3174 = vrot.slane %v3144, 6
      %v3175 = vrot.slane %v3147, 6
      %v3176 = vrot.slane %v3150, 6
      %v3177 = vrot.slane %v3153, 6
      %v3178 = vrot.slane %v3156, 6
      %v3179 = vrot.slane %v3159, 6
      %v3180 = vrot.slane %v3162, 6
      %v3181 = vrot.slane %v3118, 6
      %v3182 = vrot.slane %v3121, 6
      %v3183 = vrot.slane %v3124, 6
      %v3184 = vrot.slane %v3127, 6
      %v3185 = vrot.slane %v3130, 6
      %v3186 = vrot.slane %v3133, 6
      %v3187 = vrot.slane %v3136, 6
      %v3188 = vrot.slane %v3139, 6
      %v3189 = vrot.slane %v3142, 6
      %v3190 = vrot.slane %v3145, 6
      %v3191 = vrot.slane %v3148, 6
      %v3192 = vrot.slane %v3151, 6
      %v3193 = vrot.slane %v3154, 6
      %v3194 = vrot.slane %v3157, 6
      %v3195 = vrot.slane %v3160, 6
      %v3196 = vrot.slane %v3163, 6
      %v3197 = vrot.slane %v3119, 6
      %v3198 = vrot.slane %v3122, 6
      %v3199 = vrot.slane %v3125, 6
      %v3200 = vrot.slane %v3128, 6
      %v3201 = vrot.slane %v3131, 6
      %v3202 = vrot.slane %v3134, 6
      %v3203 = vrot.slane %v3137, 6
      %v3204 = vrot.slane %v3140, 6
      %v3205 = vrot.slane %v3143, 6
      %v3206 = vrot.slane %v3146, 6
      %v3207 = vrot.slane %v3149, 6
      %v3208 = vrot.slane %v3152, 6
      %v3209 = vrot.slane %v3155, 6
      %v3210 = vrot.slane %v3158, 6
      %v3211 = vrot.slane %v3161, 6
      %v3212 = vrot.slane %v3164, 6
      %v3213 = vsel %vm479, %v3181, %v3197
      %v3214 = vsel %vm479, %v3182, %v3198
      %v3215 = vsel %vm479, %v3183, %v3199
      %v3216 = vsel %vm479, %v3184, %v3200
      %v3217 = vsel %vm479, %v3185, %v3201
      %v3218 = vsel %vm479, %v3186, %v3202
      %v3219 = vsel %vm479, %v3187, %v3203
      %v3220 = vsel %vm479, %v3188, %v3204
      %v3221 = vsel %vm479, %v3189, %v3205
      %v3222 = vsel %vm479, %v3190, %v3206
      %v3223 = vsel %vm479, %v3191, %v3207
      %v3224 = vsel %vm479, %v3192, %v3208
      %v3225 = vsel %vm479, %v3193, %v3209
      %v3226 = vsel %vm479, %v3194, %v3210
      %v3227 = vsel %vm479, %v3195, %v3211
      %v3228 = vsel %vm479, %v3196, %v3212
      %v3229 = vsel %vm479, %v3165, %v3181
      %v3230 = vsel %vm479, %v3166, %v3182
      %v3231 = vsel %vm479, %v3167, %v3183
      %v3232 = vsel %vm479, %v3168, %v3184
      %v3233 = vsel %vm479, %v3169, %v3185
      %v3234 = vsel %vm479, %v3170, %v3186
      %v3235 = vsel %vm479, %v3171, %v3187
      %v3236 = vsel %vm479, %v3172, %v3188
      %v3237 = vsel %vm479, %v3173, %v3189
      %v3238 = vsel %vm479, %v3174, %v3190
      %v3239 = vsel %vm479, %v3175, %v3191
      %v3240 = vsel %vm479, %v3176, %v3192
      %v3241 = vsel %vm479, %v3177, %v3193
      %v3242 = vsel %vm479, %v3178, %v3194
      %v3243 = vsel %vm479, %v3179, %v3195
      %v3244 = vsel %vm479, %v3180, %v3196
      %v3245 = vsel %vm479, %v3197, %v3165
      %v3246 = vsel %vm479, %v3198, %v3166
      %v3247 = vsel %vm479, %v3199, %v3167
      %v3248 = vsel %vm479, %v3200, %v3168
      %v3249 = vsel %vm479, %v3201, %v3169
      %v3250 = vsel %vm479, %v3202, %v3170
      %v3251 = vsel %vm479, %v3203, %v3171
      %v3252 = vsel %vm479, %v3204, %v3172
      %v3253 = vsel %vm479, %v3205, %v3173
      %v3254 = vsel %vm479, %v3206, %v3174
      %v3255 = vsel %vm479, %v3207, %v3175
      %v3256 = vsel %vm479, %v3208, %v3176
      %v3257 = vsel %vm479, %v3209, %v3177
      %v3258 = vsel %vm479, %v3210, %v3178
      %v3259 = vsel %vm479, %v3211, %v3179
      %v3260 = vsel %vm479, %v3212, %v3180
      %v3261 = vlaneseq
      %v3262 = vshrl.u32 %v3261, 7
      %v3263 = vsub.s32 0, %v3262
      %v3264 = vrot.slane %v404, %v3263
      %v3265 = vmul.f32 %v3264, %v3245
      %v3266 = vmul.f32 %v3264, %v3229
      %v3267 = vmul.f32 %v3264, %v3213
      %v3268 = vmul.f32 %v3264, %v3246
      %v3269 = vmul.f32 %v3264, %v3230
      %v3270 = vmul.f32 %v3264, %v3214
      %v3271 = vmul.f32 %v3264, %v3247
      %v3272 = vmul.f32 %v3264, %v3231
      %v3273 = vmul.f32 %v3264, %v3215
      %v3274 = vmul.f32 %v3264, %v3248
      %v3275 = vmul.f32 %v3264, %v3232
      %v3276 = vmul.f32 %v3264, %v3216
      %v3277 = vmul.f32 %v3264, %v3249
      %v3278 = vmul.f32 %v3264, %v3233
      %v3279 = vmul.f32 %v3264, %v3217
      %v3280 = vmul.f32 %v3264, %v3250
      %v3281 = vmul.f32 %v3264, %v3234
      %v3282 = vmul.f32 %v3264, %v3218
      %v3283 = vmul.f32 %v3264, %v3251
      %v3284 = vmul.f32 %v3264, %v3235
      %v3285 = vmul.f32 %v3264, %v3219
      %v3286 = vmul.f32 %v3264, %v3252
      %v3287 = vmul.f32 %v3264, %v3236
      %v3288 = vmul.f32 %v3264, %v3220
      %v3289 = vmul.f32 %v3264, %v3253
      %v3290 = vmul.f32 %v3264, %v3237
      %v3291 = vmul.f32 %v3264, %v3221
      %v3292 = vmul.f32 %v3264, %v3254
      %v3293 = vmul.f32 %v3264, %v3238
      %v3294 = vmul.f32 %v3264, %v3222
      %v3295 = vmul.f32 %v3264, %v3255
      %v3296 = vmul.f32 %v3264, %v3239
      %v3297 = vmul.f32 %v3264, %v3223
      %v3298 = vmul.f32 %v3264, %v3256
      %v3299 = vmul.f32 %v3264, %v3240
      %v3300 = vmul.f32 %v3264, %v3224
      %v3301 = vmul.f32 %v3264, %v3257
      %v3302 = vmul.f32 %v3264, %v3241
      %v3303 = vmul.f32 %v3264, %v3225
      %v3304 = vmul.f32 %v3264, %v3258
      %v3305 = vmul.f32 %v3264, %v3242
      %v3306 = vmul.f32 %v3264, %v3226
      %v3307 = vmul.f32 %v3264, %v3259
      %v3308 = vmul.f32 %v3264, %v3243
      %v3309 = vmul.f32 %v3264, %v3227
      %v3310 = vmul.f32 %v3264, %v3260
      %v3311 = vmul.f32 %v3264, %v3244
      %v3312 = vmul.f32 %v3264, %v3228
      %v3313 = vlaneseq
      %v3314 = vshrl.u32 %v3313, 7
      %v3315 = vsub.s32 1, %v3314
      %v3316 = vrot.slane %v404, %v3315
      %v3317 = vmul.f32 %v3316, %v3117
      %v3318 = vmul.f32 %v3316, %v3118
      %v3319 = vmul.f32 %v3316, %v3119
      %v3320 = vmul.f32 %v3316, %v3120
      %v3321 = vmul.f32 %v3316, %v3121
      %v3322 = vmul.f32 %v3316, %v3122
      %v3323 = vmul.f32 %v3316, %v3123
      %v3324 = vmul.f32 %v3316, %v3124
      %v3325 = vmul.f32 %v3316, %v3125
      %v3326 = vmul.f32 %v3316, %v3126
      %v3327 = vmul.f32 %v3316, %v3127
      %v3328 = vmul.f32 %v3316, %v3128
      %v3329 = vmul.f32 %v3316, %v3129
      %v3330 = vmul.f32 %v3316, %v3130
      %v3331 = vmul.f32 %v3316, %v3131
      %v3332 = vmul.f32 %v3316, %v3132
      %v3333 = vmul.f32 %v3316, %v3133
      %v3334 = vmul.f32 %v3316, %v3134
      %v3335 = vmul.f32 %v3316, %v3135
      %v3336 = vmul.f32 %v3316, %v3136
      %v3337 = vmul.f32 %v3316, %v3137
      %v3338 = vmul.f32 %v3316, %v3138
      %v3339 = vmul.f32 %v3316, %v3139
      %v3340 = vmul.f32 %v3316, %v3140
      %v3341 = vmul.f32 %v3316, %v3141
      %v3342 = vmul.f32 %v3316, %v3142
      %v3343 = vmul.f32 %v3316, %v3143
      %v3344 = vmul.f32 %v3316, %v3144
      %v3345 = vmul.f32 %v3316, %v3145
      %v3346 = vmul.f32 %v3316, %v3146
      %v3347 = vmul.f32 %v3316, %v3147
      %v3348 = vmul.f32 %v3316, %v3148
      %v3349 = vmul.f32 %v3316, %v3149
      %v3350 = vmul.f32 %v3316, %v3150
      %v3351 = vmul.f32 %v3316, %v3151
      %v3352 = vmul.f32 %v3316, %v3152
      %v3353 = vmul.f32 %v3316, %v3153
      %v3354 = vmul.f32 %v3316, %v3154
      %v3355 = vmul.f32 %v3316, %v3155
      %v3356 = vmul.f32 %v3316, %v3156
      %v3357 = vmul.f32 %v3316, %v3157
      %v3358 = vmul.f32 %v3316, %v3158
      %v3359 = vmul.f32 %v3316, %v3159
      %v3360 = vmul.f32 %v3316, %v3160
      %v3361 = vmul.f32 %v3316, %v3161
      %v3362 = vmul.f32 %v3316, %v3162
      %v3363 = vmul.f32 %v3316, %v3163
      %v3364 = vmul.f32 %v3316, %v3164
      %v3365 = vadd.f32 %v3265, %v3317
      %v3366 = vadd.f32 %v3266, %v3318
      %v3367 = vadd.f32 %v3267, %v3319
      %v3368 = vadd.f32 %v3268, %v3320
      %v3369 = vadd.f32 %v3269, %v3321
      %v3370 = vadd.f32 %v3270, %v3322
      %v3371 = vadd.f32 %v3271, %v3323
      %v3372 = vadd.f32 %v3272, %v3324
      %v3373 = vadd.f32 %v3273, %v3325
      %v3374 = vadd.f32 %v3274, %v3326
      %v3375 = vadd.f32 %v3275, %v3327
      %v3376 = vadd.f32 %v3276, %v3328
      %v3377 = vadd.f32 %v3277, %v3329
      %v3378 = vadd.f32 %v3278, %v3330
      %v3379 = vadd.f32 %v3279, %v3331
      %v3380 = vadd.f32 %v3280, %v3332
      %v3381 = vadd.f32 %v3281, %v3333
      %v3382 = vadd.f32 %v3282, %v3334
      %v3383 = vadd.f32 %v3283, %v3335
      %v3384 = vadd.f32 %v3284, %v3336
      %v3385 = vadd.f32 %v3285, %v3337
      %v3386 = vadd.f32 %v3286, %v3338
      %v3387 = vadd.f32 %v3287, %v3339
      %v3388 = vadd.f32 %v3288, %v3340
      %v3389 = vadd.f32 %v3289, %v3341
      %v3390 = vadd.f32 %v3290, %v3342
      %v3391 = vadd.f32 %v3291, %v3343
      %v3392 = vadd.f32 %v3292, %v3344
      %v3393 = vadd.f32 %v3293, %v3345
      %v3394 = vadd.f32 %v3294, %v3346
      %v3395 = vadd.f32 %v3295, %v3347
      %v3396 = vadd.f32 %v3296, %v3348
      %v3397 = vadd.f32 %v3297, %v3349
      %v3398 = vadd.f32 %v3298, %v3350
      %v3399 = vadd.f32 %v3299, %v3351
      %v3400 = vadd.f32 %v3300, %v3352
      %v3401 = vadd.f32 %v3301, %v3353
      %v3402 = vadd.f32 %v3302, %v3354
      %v3403 = vadd.f32 %v3303, %v3355
      %v3404 = vadd.f32 %v3304, %v3356
      %v3405 = vadd.f32 %v3305, %v3357
      %v3406 = vadd.f32 %v3306, %v3358
      %v3407 = vadd.f32 %v3307, %v3359
      %v3408 = vadd.f32 %v3308, %v3360
      %v3409 = vadd.f32 %v3309, %v3361
      %v3410 = vadd.f32 %v3310, %v3362
      %v3411 = vadd.f32 %v3311, %v3363
      %v3412 = vadd.f32 %v3312, %v3364
      %v3413 = vrot.slane %v3117, 2
      %v3414 = vrot.slane %v3120, 2
      %v3415 = vrot.slane %v3123, 2
      %v3416 = vrot.slane %v3126, 2
      %v3417 = vrot.slane %v3129, 2
      %v3418 = vrot.slane %v3132, 2
      %v3419 = vrot.slane %v3135, 2
      %v3420 = vrot.slane %v3138, 2
      %v3421 = vrot.slane %v3141, 2
      %v3422 = vrot.slane %v3144, 2
      %v3423 = vrot.slane %v3147, 2
      %v3424 = vrot.slane %v3150, 2
      %v3425 = vrot.slane %v3153, 2
      %v3426 = vrot.slane %v3156, 2
      %v3427 = vrot.slane %v3159, 2
      %v3428 = vrot.slane %v3162, 2
      %v3429 = vrot.slane %v3118, 2
      %v3430 = vrot.slane %v3121, 2
      %v3431 = vrot.slane %v3124, 2
      %v3432 = vrot.slane %v3127, 2
      %v3433 = vrot.slane %v3130, 2
      %v3434 = vrot.slane %v3133, 2
      %v3435 = vrot.slane %v3136, 2
      %v3436 = vrot.slane %v3139, 2
      %v3437 = vrot.slane %v3142, 2
      %v3438 = vrot.slane %v3145, 2
      %v3439 = vrot.slane %v3148, 2
      %v3440 = vrot.slane %v3151, 2
      %v3441 = vrot.slane %v3154, 2
      %v3442 = vrot.slane %v3157, 2
      %v3443 = vrot.slane %v3160, 2
      %v3444 = vrot.slane %v3163, 2
      %v3445 = vrot.slane %v3119, 2
      %v3446 = vrot.slane %v3122, 2
      %v3447 = vrot.slane %v3125, 2
      %v3448 = vrot.slane %v3128, 2
      %v3449 = vrot.slane %v3131, 2
      %v3450 = vrot.slane %v3134, 2
      %v3451 = vrot.slane %v3137, 2
      %v3452 = vrot.slane %v3140, 2
      %v3453 = vrot.slane %v3143, 2
      %v3454 = vrot.slane %v3146, 2
      %v3455 = vrot.slane %v3149, 2
      %v3456 = vrot.slane %v3152, 2
      %v3457 = vrot.slane %v3155, 2
      %v3458 = vrot.slane %v3158, 2
      %v3459 = vrot.slane %v3161, 2
      %v3460 = vrot.slane %v3164, 2
      %v3461 = vsel %vm848, %v3429, %v3445
      %v3462 = vsel %vm848, %v3430, %v3446
      %v3463 = vsel %vm848, %v3431, %v3447
      %v3464 = vsel %vm848, %v3432, %v3448
      %v3465 = vsel %vm848, %v3433, %v3449
      %v3466 = vsel %vm848, %v3434, %v3450
      %v3467 = vsel %vm848, %v3435, %v3451
      %v3468 = vsel %vm848, %v3436, %v3452
      %v3469 = vsel %vm848, %v3437, %v3453
      %v3470 = vsel %vm848, %v3438, %v3454
      %v3471 = vsel %vm848, %v3439, %v3455
      %v3472 = vsel %vm848, %v3440, %v3456
      %v3473 = vsel %vm848, %v3441, %v3457
      %v3474 = vsel %vm848, %v3442, %v3458
      %v3475 = vsel %vm848, %v3443, %v3459
      %v3476 = vsel %vm848, %v3444, %v3460
      %v3477 = vsel %vm848, %v3413, %v3429
      %v3478 = vsel %vm848, %v3414, %v3430
      %v3479 = vsel %vm848, %v3415, %v3431
      %v3480 = vsel %vm848, %v3416, %v3432
      %v3481 = vsel %vm848, %v3417, %v3433
      %v3482 = vsel %vm848, %v3418, %v3434
      %v3483 = vsel %vm848, %v3419, %v3435
      %v3484 = vsel %vm848, %v3420, %v3436
      %v3485 = vsel %vm848, %v3421, %v3437
      %v3486 = vsel %vm848, %v3422, %v3438
      %v3487 = vsel %vm848, %v3423, %v3439
      %v3488 = vsel %vm848, %v3424, %v3440
      %v3489 = vsel %vm848, %v3425, %v3441
      %v3490 = vsel %vm848, %v3426, %v3442
      %v3491 = vsel %vm848, %v3427, %v3443
      %v3492 = vsel %vm848, %v3428, %v3444
      %v3493 = vsel %vm848, %v3445, %v3413
      %v3494 = vsel %vm848, %v3446, %v3414
      %v3495 = vsel %vm848, %v3447, %v3415
      %v3496 = vsel %vm848, %v3448, %v3416
      %v3497 = vsel %vm848, %v3449, %v3417
      %v3498 = vsel %vm848, %v3450, %v3418
      %v3499 = vsel %vm848, %v3451, %v3419
      %v3500 = vsel %vm848, %v3452, %v3420
      %v3501 = vsel %vm848, %v3453, %v3421
      %v3502 = vsel %vm848, %v3454, %v3422
      %v3503 = vsel %vm848, %v3455, %v3423
      %v3504 = vsel %vm848, %v3456, %v3424
      %v3505 = vsel %vm848, %v3457, %v3425
      %v3506 = vsel %vm848, %v3458, %v3426
      %v3507 = vsel %vm848, %v3459, %v3427
      %v3508 = vsel %vm848, %v3460, %v3428
      %v3509 = vlaneseq
      %v3510 = vshrl.u32 %v3509, 7
      %v3511 = vsub.s32 2, %v3510
      %v3512 = vrot.slane %v404, %v3511
      %v3513 = vmul.f32 %v3512, %v3477
      %v3514 = vmul.f32 %v3512, %v3461
      %v3515 = vmul.f32 %v3512, %v3493
      %v3516 = vmul.f32 %v3512, %v3478
      %v3517 = vmul.f32 %v3512, %v3462
      %v3518 = vmul.f32 %v3512, %v3494
      %v3519 = vmul.f32 %v3512, %v3479
      %v3520 = vmul.f32 %v3512, %v3463
      %v3521 = vmul.f32 %v3512, %v3495
      %v3522 = vmul.f32 %v3512, %v3480
      %v3523 = vmul.f32 %v3512, %v3464
      %v3524 = vmul.f32 %v3512, %v3496
      %v3525 = vmul.f32 %v3512, %v3481
      %v3526 = vmul.f32 %v3512, %v3465
      %v3527 = vmul.f32 %v3512, %v3497
      %v3528 = vmul.f32 %v3512, %v3482
      %v3529 = vmul.f32 %v3512, %v3466
      %v3530 = vmul.f32 %v3512, %v3498
      %v3531 = vmul.f32 %v3512, %v3483
      %v3532 = vmul.f32 %v3512, %v3467
      %v3533 = vmul.f32 %v3512, %v3499
      %v3534 = vmul.f32 %v3512, %v3484
      %v3535 = vmul.f32 %v3512, %v3468
      %v3536 = vmul.f32 %v3512, %v3500
      %v3537 = vmul.f32 %v3512, %v3485
      %v3538 = vmul.f32 %v3512, %v3469
      %v3539 = vmul.f32 %v3512, %v3501
      %v3540 = vmul.f32 %v3512, %v3486
      %v3541 = vmul.f32 %v3512, %v3470
      %v3542 = vmul.f32 %v3512, %v3502
      %v3543 = vmul.f32 %v3512, %v3487
      %v3544 = vmul.f32 %v3512, %v3471
      %v3545 = vmul.f32 %v3512, %v3503
      %v3546 = vmul.f32 %v3512, %v3488
      %v3547 = vmul.f32 %v3512, %v3472
      %v3548 = vmul.f32 %v3512, %v3504
      %v3549 = vmul.f32 %v3512, %v3489
      %v3550 = vmul.f32 %v3512, %v3473
      %v3551 = vmul.f32 %v3512, %v3505
      %v3552 = vmul.f32 %v3512, %v3490
      %v3553 = vmul.f32 %v3512, %v3474
      %v3554 = vmul.f32 %v3512, %v3506
      %v3555 = vmul.f32 %v3512, %v3491
      %v3556 = vmul.f32 %v3512, %v3475
      %v3557 = vmul.f32 %v3512, %v3507
      %v3558 = vmul.f32 %v3512, %v3492
      %v3559 = vmul.f32 %v3512, %v3476
      %v3560 = vmul.f32 %v3512, %v3508
      %v3561 = vadd.f32 %v3365, %v3513
      %v3562 = vadd.f32 %v3366, %v3514
      %v3563 = vadd.f32 %v3367, %v3515
      %v3564 = vadd.f32 %v3368, %v3516
      %v3565 = vadd.f32 %v3369, %v3517
      %v3566 = vadd.f32 %v3370, %v3518
      %v3567 = vadd.f32 %v3371, %v3519
      %v3568 = vadd.f32 %v3372, %v3520
      %v3569 = vadd.f32 %v3373, %v3521
      %v3570 = vadd.f32 %v3374, %v3522
      %v3571 = vadd.f32 %v3375, %v3523
      %v3572 = vadd.f32 %v3376, %v3524
      %v3573 = vadd.f32 %v3377, %v3525
      %v3574 = vadd.f32 %v3378, %v3526
      %v3575 = vadd.f32 %v3379, %v3527
      %v3576 = vadd.f32 %v3380, %v3528
      %v3577 = vadd.f32 %v3381, %v3529
      %v3578 = vadd.f32 %v3382, %v3530
      %v3579 = vadd.f32 %v3383, %v3531
      %v3580 = vadd.f32 %v3384, %v3532
      %v3581 = vadd.f32 %v3385, %v3533
      %v3582 = vadd.f32 %v3386, %v3534
      %v3583 = vadd.f32 %v3387, %v3535
      %v3584 = vadd.f32 %v3388, %v3536
      %v3585 = vadd.f32 %v3389, %v3537
      %v3586 = vadd.f32 %v3390, %v3538
      %v3587 = vadd.f32 %v3391, %v3539
      %v3588 = vadd.f32 %v3392, %v3540
      %v3589 = vadd.f32 %v3393, %v3541
      %v3590 = vadd.f32 %v3394, %v3542
      %v3591 = vadd.f32 %v3395, %v3543
      %v3592 = vadd.f32 %v3396, %v3544
      %v3593 = vadd.f32 %v3397, %v3545
      %v3594 = vadd.f32 %v3398, %v3546
      %v3595 = vadd.f32 %v3399, %v3547
      %v3596 = vadd.f32 %v3400, %v3548
      %v3597 = vadd.f32 %v3401, %v3549
      %v3598 = vadd.f32 %v3402, %v3550
      %v3599 = vadd.f32 %v3403, %v3551
      %v3600 = vadd.f32 %v3404, %v3552
      %v3601 = vadd.f32 %v3405, %v3553
      %v3602 = vadd.f32 %v3406, %v3554
      %v3603 = vadd.f32 %v3407, %v3555
      %v3604 = vadd.f32 %v3408, %v3556
      %v3605 = vadd.f32 %v3409, %v3557
      %v3606 = vadd.f32 %v3410, %v3558
      %v3607 = vadd.f32 %v3411, %v3559
      %v3608 = vadd.f32 %v3412, %v3560
      %v3609 = vadd.f32 %v3561, %v2383
      %v3610 = vadd.f32 %v3562, %v2384
      %v3611 = vadd.f32 %v3563, %v2385
      %v3612 = vadd.f32 %v3564, %v2386
      %v3613 = vadd.f32 %v3565, %v2387
      %v3614 = vadd.f32 %v3566, %v2388
      %v3615 = vadd.f32 %v3567, %v2389
      %v3616 = vadd.f32 %v3568, %v2390
      %v3617 = vadd.f32 %v3569, %v2391
      %v3618 = vadd.f32 %v3570, %v2392
      %v3619 = vadd.f32 %v3571, %v2393
      %v3620 = vadd.f32 %v3572, %v2394
      %v3621 = vadd.f32 %v3573, %v2395
      %v3622 = vadd.f32 %v3574, %v2396
      %v3623 = vadd.f32 %v3575, %v2397
      %v3624 = vadd.f32 %v3576, %v2398
      %v3625 = vadd.f32 %v3577, %v2399
      %v3626 = vadd.f32 %v3578, %v2400
      %v3627 = vadd.f32 %v3579, %v2401
      %v3628 = vadd.f32 %v3580, %v2402
      %v3629 = vadd.f32 %v3581, %v2403
      %v3630 = vadd.f32 %v3582, %v2404
      %v3631 = vadd.f32 %v3583, %v2405
      %v3632 = vadd.f32 %v3584, %v2406
      %v3633 = vadd.f32 %v3585, %v2407
      %v3634 = vadd.f32 %v3586, %v2408
      %v3635 = vadd.f32 %v3587, %v2409
      %v3636 = vadd.f32 %v3588, %v2410
      %v3637 = vadd.f32 %v3589, %v2411
      %v3638 = vadd.f32 %v3590, %v2412
      %v3639 = vadd.f32 %v3591, %v2413
      %v3640 = vadd.f32 %v3592, %v2414
      %v3641 = vadd.f32 %v3593, %v2415
      %v3642 = vadd.f32 %v3594, %v2416
      %v3643 = vadd.f32 %v3595, %v2417
      %v3644 = vadd.f32 %v3596, %v2418
      %v3645 = vadd.f32 %v3597, %v2419
      %v3646 = vadd.f32 %v3598, %v2420
      %v3647 = vadd.f32 %v3599, %v2421
      %v3648 = vadd.f32 %v3600, %v2422
      %v3649 = vadd.f32 %v3601, %v2423
      %v3650 = vadd.f32 %v3602, %v2424
      %v3651 = vadd.f32 %v3603, %v2425
      %v3652 = vadd.f32 %v3604, %v2426
      %v3653 = vadd.f32 %v3605, %v2427
      %v3654 = vadd.f32 %v3606, %v2428
      %v3655 = vadd.f32 %v3607, %v2429
      %v3656 = vadd.f32 %v3608, %v2430
      %v3657 = vrot.slane %v3609, 2
      %v3658 = vrot.slane %v3612, 2
      %v3659 = vrot.slane %v3615, 2
      %v3660 = vrot.slane %v3618, 2
      %v3661 = vrot.slane %v3621, 2
      %v3662 = vrot.slane %v3624, 2
      %v3663 = vrot.slane %v3627, 2
      %v3664 = vrot.slane %v3630, 2
      %v3665 = vrot.slane %v3633, 2
      %v3666 = vrot.slane %v3636, 2
      %v3667 = vrot.slane %v3639, 2
      %v3668 = vrot.slane %v3642, 2
      %v3669 = vrot.slane %v3645, 2
      %v3670 = vrot.slane %v3648, 2
      %v3671 = vrot.slane %v3651, 2
      %v3672 = vrot.slane %v3654, 2
      %v3673 = vrot.slane %v3610, 2
      %v3674 = vrot.slane %v3613, 2
      %v3675 = vrot.slane %v3616, 2
      %v3676 = vrot.slane %v3619, 2
      %v3677 = vrot.slane %v3622, 2
      %v3678 = vrot.slane %v3625, 2
      %v3679 = vrot.slane %v3628, 2
      %v3680 = vrot.slane %v3631, 2
      %v3681 = vrot.slane %v3634, 2
      %v3682 = vrot.slane %v3637, 2
      %v3683 = vrot.slane %v3640, 2
      %v3684 = vrot.slane %v3643, 2
      %v3685 = vrot.slane %v3646, 2
      %v3686 = vrot.slane %v3649, 2
      %v3687 = vrot.slane %v3652, 2
      %v3688 = vrot.slane %v3655, 2
      %v3689 = vrot.slane %v3611, 2
      %v3690 = vrot.slane %v3614, 2
      %v3691 = vrot.slane %v3617, 2
      %v3692 = vrot.slane %v3620, 2
      %v3693 = vrot.slane %v3623, 2
      %v3694 = vrot.slane %v3626, 2
      %v3695 = vrot.slane %v3629, 2
      %v3696 = vrot.slane %v3632, 2
      %v3697 = vrot.slane %v3635, 2
      %v3698 = vrot.slane %v3638, 2
      %v3699 = vrot.slane %v3641, 2
      %v3700 = vrot.slane %v3644, 2
      %v3701 = vrot.slane %v3647, 2
      %v3702 = vrot.slane %v3650, 2
      %v3703 = vrot.slane %v3653, 2
      %v3704 = vrot.slane %v3656, 2
      %v3705 = vsel %vm848, %v3673, %v3689
      %v3706 = vsel %vm848, %v3674, %v3690
      %v3707 = vsel %vm848, %v3675, %v3691
      %v3708 = vsel %vm848, %v3676, %v3692
      %v3709 = vsel %vm848, %v3677, %v3693
      %v3710 = vsel %vm848, %v3678, %v3694
      %v3711 = vsel %vm848, %v3679, %v3695
      %v3712 = vsel %vm848, %v3680, %v3696
      %v3713 = vsel %vm848, %v3681, %v3697
      %v3714 = vsel %vm848, %v3682, %v3698
      %v3715 = vsel %vm848, %v3683, %v3699
      %v3716 = vsel %vm848, %v3684, %v3700
      %v3717 = vsel %vm848, %v3685, %v3701
      %v3718 = vsel %vm848, %v3686, %v3702
      %v3719 = vsel %vm848, %v3687, %v3703
      %v3720 = vsel %vm848, %v3688, %v3704
      %v3721 = vsel %vm848, %v3657, %v3673
      %v3722 = vsel %vm848, %v3658, %v3674
      %v3723 = vsel %vm848, %v3659, %v3675
      %v3724 = vsel %vm848, %v3660, %v3676
      %v3725 = vsel %vm848, %v3661, %v3677
      %v3726 = vsel %vm848, %v3662, %v3678
      %v3727 = vsel %vm848, %v3663, %v3679
      %v3728 = vsel %vm848, %v3664, %v3680
      %v3729 = vsel %vm848, %v3665, %v3681
      %v3730 = vsel %vm848, %v3666, %v3682
      %v3731 = vsel %vm848, %v3667, %v3683
      %v3732 = vsel %vm848, %v3668, %v3684
      %v3733 = vsel %vm848, %v3669, %v3685
      %v3734 = vsel %vm848, %v3670, %v3686
      %v3735 = vsel %vm848, %v3671, %v3687
      %v3736 = vsel %vm848, %v3672, %v3688
      %v3737 = vld [vmem:[%s179] sm:$0xff]
      %v3738 = vld [vmem:[%s179 + $0x8] sm:$0xff]
      %v3739 = vld [vmem:[%s179 + $0x10] sm:$0xff]
      %v3740 = vld [vmem:[%s179 + $0x18] sm:$0xff]
      %v3741 = vld [vmem:[%s179 + $0x20] sm:$0xff]
      %v3742 = vld [vmem:[%s179 + $0x28] sm:$0xff]
      %v3743 = vld [vmem:[%s179 + $0x30] sm:$0xff]
      %v3744 = vld [vmem:[%s179 + $0x38] sm:$0xff]
      %v3745 = vld [vmem:[%s179 + $0x40] sm:$0xff]
      %v3746 = vld [vmem:[%s179 + $0x48] sm:$0xff]
      %v3747 = vld [vmem:[%s179 + $0x50] sm:$0xff]
      %v3748 = vld [vmem:[%s179 + $0x58] sm:$0xff]
      %v3749 = vld [vmem:[%s179 + $0x60] sm:$0xff]
      %v3750 = vld [vmem:[%s179 + $0x68] sm:$0xff]
      %v3751 = vld [vmem:[%s179 + $0x70] sm:$0xff]
      %v3752 = vld [vmem:[%s179 + $0x78] sm:$0xff]
      %v3753 = vld [vmem:[%s179 + $0x80] sm:$0xff]
      %v3754 = vld [vmem:[%s179 + $0x88] sm:$0xff]
      %v3755 = vld [vmem:[%s179 + $0x90] sm:$0xff]
      %v3756 = vld [vmem:[%s179 + $0x98] sm:$0xff]
      %v3757 = vld [vmem:[%s179 + $0xa0] sm:$0xff]
      %v3758 = vld [vmem:[%s179 + $0xa8] sm:$0xff]
      %v3759 = vld [vmem:[%s179 + $0xb0] sm:$0xff]
      %v3760 = vld [vmem:[%s179 + $0xb8] sm:$0xff]
      %v3761 = vld [vmem:[%s179 + $0xc0] sm:$0xff]
      %v3762 = vld [vmem:[%s179 + $0xc8] sm:$0xff]
      %v3763 = vld [vmem:[%s179 + $0xd0] sm:$0xff]
      %v3764 = vld [vmem:[%s179 + $0xd8] sm:$0xff]
      %v3765 = vld [vmem:[%s179 + $0xe0] sm:$0xff]
      %v3766 = vld [vmem:[%s179 + $0xe8] sm:$0xff]
      %v3767 = vld [vmem:[%s179 + $0xf0] sm:$0xff]
      %v3768 = vld [vmem:[%s179 + $0xf8] sm:$0xff]
      %v3769 = vadd.f32 %v3721, %v3737
      %v3770 = vadd.f32 %v3705, %v3738
      %v3771 = vadd.f32 %v3722, %v3739
      %v3772 = vadd.f32 %v3706, %v3740
      %v3773 = vadd.f32 %v3723, %v3741
      %v3774 = vadd.f32 %v3707, %v3742
      %v3775 = vadd.f32 %v3724, %v3743
      %v3776 = vadd.f32 %v3708, %v3744
      %v3777 = vadd.f32 %v3725, %v3745
      %v3778 = vadd.f32 %v3709, %v3746
      %v3779 = vadd.f32 %v3726, %v3747
      %v3780 = vadd.f32 %v3710, %v3748
      %v3781 = vadd.f32 %v3727, %v3749
      %v3782 = vadd.f32 %v3711, %v3750
      %v3783 = vadd.f32 %v3728, %v3751
      %v3784 = vadd.f32 %v3712, %v3752
      %v3785 = vadd.f32 %v3729, %v3753
      %v3786 = vadd.f32 %v3713, %v3754
      %v3787 = vadd.f32 %v3730, %v3755
      %v3788 = vadd.f32 %v3714, %v3756
      %v3789 = vadd.f32 %v3731, %v3757
      %v3790 = vadd.f32 %v3715, %v3758
      %v3791 = vadd.f32 %v3732, %v3759
      %v3792 = vadd.f32 %v3716, %v3760
      %v3793 = vadd.f32 %v3733, %v3761
      %v3794 = vadd.f32 %v3717, %v3762
      %v3795 = vadd.f32 %v3734, %v3763
      %v3796 = vadd.f32 %v3718, %v3764
      %v3797 = vadd.f32 %v3735, %v3765
      %v3798 = vadd.f32 %v3719, %v3766
      %v3799 = vadd.f32 %v3736, %v3767
      %v3800 = vadd.f32 %v3720, %v3768
      %vm3801 = vcmp.gt.f32.partialorder %v3769, 0.0
      %vm3802 = vcmp.gt.f32.partialorder %v3770, 0.0
      %vm3803 = vcmp.gt.f32.partialorder %v3771, 0.0
      %vm3804 = vcmp.gt.f32.partialorder %v3772, 0.0
      %vm3805 = vcmp.gt.f32.partialorder %v3773, 0.0
      %vm3806 = vcmp.gt.f32.partialorder %v3774, 0.0
      %vm3807 = vcmp.gt.f32.partialorder %v3775, 0.0
      %vm3808 = vcmp.gt.f32.partialorder %v3776, 0.0
      %vm3809 = vcmp.gt.f32.partialorder %v3777, 0.0
      %vm3810 = vcmp.gt.f32.partialorder %v3778, 0.0
      %vm3811 = vcmp.gt.f32.partialorder %v3779, 0.0
      %vm3812 = vcmp.gt.f32.partialorder %v3780, 0.0
      %vm3813 = vcmp.gt.f32.partialorder %v3781, 0.0
      %vm3814 = vcmp.gt.f32.partialorder %v3782, 0.0
      %vm3815 = vcmp.gt.f32.partialorder %v3783, 0.0
      %vm3816 = vcmp.gt.f32.partialorder %v3784, 0.0
      %vm3817 = vcmp.gt.f32.partialorder %v3785, 0.0
      %vm3818 = vcmp.gt.f32.partialorder %v3786, 0.0
      %vm3819 = vcmp.gt.f32.partialorder %v3787, 0.0
      %vm3820 = vcmp.gt.f32.partialorder %v3788, 0.0
      %vm3821 = vcmp.gt.f32.partialorder %v3789, 0.0
      %vm3822 = vcmp.gt.f32.partialorder %v3790, 0.0
      %vm3823 = vcmp.gt.f32.partialorder %v3791, 0.0
      %vm3824 = vcmp.gt.f32.partialorder %v3792, 0.0
      %vm3825 = vcmp.gt.f32.partialorder %v3793, 0.0
      %vm3826 = vcmp.gt.f32.partialorder %v3794, 0.0
      %vm3827 = vcmp.gt.f32.partialorder %v3795, 0.0
      %vm3828 = vcmp.gt.f32.partialorder %v3796, 0.0
      %vm3829 = vcmp.gt.f32.partialorder %v3797, 0.0
      %vm3830 = vcmp.gt.f32.partialorder %v3798, 0.0
      %vm3831 = vcmp.gt.f32.partialorder %v3799, 0.0
      %vm3832 = vcmp.gt.f32.partialorder %v3800, 0.0
      %v3833 = vmin.f32 %v3769, 0.0
      %v3834 = vmin.f32 %v3770, 0.0
      %v3835 = vmin.f32 %v3771, 0.0
      %v3836 = vmin.f32 %v3772, 0.0
      %v3837 = vmin.f32 %v3773, 0.0
      %v3838 = vmin.f32 %v3774, 0.0
      %v3839 = vmin.f32 %v3775, 0.0
      %v3840 = vmin.f32 %v3776, 0.0
      %v3841 = vmin.f32 %v3777, 0.0
      %v3842 = vmin.f32 %v3778, 0.0
      %v3843 = vmin.f32 %v3779, 0.0
      %v3844 = vmin.f32 %v3780, 0.0
      %v3845 = vmin.f32 %v3781, 0.0
      %v3846 = vmin.f32 %v3782, 0.0
      %v3847 = vmin.f32 %v3783, 0.0
      %v3848 = vmin.f32 %v3784, 0.0
      %v3849 = vmin.f32 %v3785, 0.0
      %v3850 = vmin.f32 %v3786, 0.0
      %v3851 = vmin.f32 %v3787, 0.0
      %v3852 = vmin.f32 %v3788, 0.0
      %v3853 = vmin.f32 %v3789, 0.0
      %v3854 = vmin.f32 %v3790, 0.0
      %v3855 = vmin.f32 %v3791, 0.0
      %v3856 = vmin.f32 %v3792, 0.0
      %v3857 = vmin.f32 %v3793, 0.0
      %v3858 = vmin.f32 %v3794, 0.0
      %v3859 = vmin.f32 %v3795, 0.0
      %v3860 = vmin.f32 %v3796, 0.0
      %v3861 = vmin.f32 %v3797, 0.0
      %v3862 = vmin.f32 %v3798, 0.0
      %v3863 = vmin.f32 %v3799, 0.0
      %v3864 = vmin.f32 %v3800, 0.0
      %v3865 = vmul.f32 %v3833, 1.442695
      %v3866 = vpow.pop %v3865
      %v3867 = vmul.f32 %v3834, 1.442695
      %v3868 = vpow.pop %v3867
      %v3869 = vmul.f32 %v3835, 1.442695
      %v3870 = vpow.pop %v3869
      %v3871 = vmul.f32 %v3836, 1.442695
      %v3872 = vpow.pop %v3871
      %v3873 = vmul.f32 %v3837, 1.442695
      %v3874 = vpow.pop %v3873
      %v3875 = vmul.f32 %v3838, 1.442695
      %v3876 = vpow.pop %v3875
      %v3877 = vmul.f32 %v3839, 1.442695
      %v3878 = vpow.pop %v3877
      %v3879 = vmul.f32 %v3840, 1.442695
      %v3880 = vpow.pop %v3879
      %v3881 = vmul.f32 %v3841, 1.442695
      %v3882 = vpow.pop %v3881
      %v3883 = vmul.f32 %v3842, 1.442695
      %v3884 = vpow.pop %v3883
      %v3885 = vmul.f32 %v3843, 1.442695
      %v3886 = vpow.pop %v3885
      %v3887 = vmul.f32 %v3844, 1.442695
      %v3888 = vpow.pop %v3887
      %v3889 = vmul.f32 %v3845, 1.442695
      %v3890 = vpow.pop %v3889
      %v3891 = vmul.f32 %v3846, 1.442695
      %v3892 = vpow.pop %v3891
      %v3893 = vmul.f32 %v3847, 1.442695
      %v3894 = vpow.pop %v3893
      %v3895 = vmul.f32 %v3848, 1.442695
      %v3896 = vpow.pop %v3895
      %v3897 = vmul.f32 %v3849, 1.442695
      %v3898 = vpow.pop %v3897
      %v3899 = vmul.f32 %v3850, 1.442695
      %v3900 = vpow.pop %v3899
      %v3901 = vmul.f32 %v3851, 1.442695
      %v3902 = vpow.pop %v3901
      %v3903 = vmul.f32 %v3852, 1.442695
      %v3904 = vpow.pop %v3903
      %v3905 = vmul.f32 %v3853, 1.442695
      %v3906 = vpow.pop %v3905
      %v3907 = vmul.f32 %v3854, 1.442695
      %v3908 = vpow.pop %v3907
      %v3909 = vmul.f32 %v3855, 1.442695
      %v3910 = vpow.pop %v3909
      %v3911 = vmul.f32 %v3856, 1.442695
      %v3912 = vpow.pop %v3911
      %v3913 = vmul.f32 %v3857, 1.442695
      %v3914 = vpow.pop %v3913
      %v3915 = vmul.f32 %v3858, 1.442695
      %v3916 = vpow.pop %v3915
      %v3917 = vmul.f32 %v3859, 1.442695
      %v3918 = vpow.pop %v3917
      %v3919 = vmul.f32 %v3860, 1.442695
      %v3920 = vpow.pop %v3919
      %v3921 = vmul.f32 %v3861, 1.442695
      %v3922 = vpow.pop %v3921
      %v3923 = vmul.f32 %v3862, 1.442695
      %v3924 = vpow.pop %v3923
      %v3925 = vmul.f32 %v3863, 1.442695
      %v3926 = vpow.pop %v3925
      %v3927 = vmul.f32 %v3864, 1.442695
      %v3928 = vpow.pop %v3927
      %v3929 = vsub.f32 %v3866, 1.0
      %v3930 = vsub.f32 %v3868, 1.0
      %v3931 = vsub.f32 %v3870, 1.0
      %v3932 = vsub.f32 %v3872, 1.0
      %v3933 = vsub.f32 %v3874, 1.0
      %v3934 = vsub.f32 %v3876, 1.0
      %v3935 = vsub.f32 %v3878, 1.0
      %v3936 = vsub.f32 %v3880, 1.0
      %v3937 = vsub.f32 %v3882, 1.0
      %v3938 = vsub.f32 %v3884, 1.0
      %v3939 = vsub.f32 %v3886, 1.0
      %v3940 = vsub.f32 %v3888, 1.0
      %v3941 = vsub.f32 %v3890, 1.0
      %v3942 = vsub.f32 %v3892, 1.0
      %v3943 = vsub.f32 %v3894, 1.0
      %v3944 = vsub.f32 %v3896, 1.0
      %v3945 = vsub.f32 %v3898, 1.0
      %v3946 = vsub.f32 %v3900, 1.0
      %v3947 = vsub.f32 %v3902, 1.0
      %v3948 = vsub.f32 %v3904, 1.0
      %v3949 = vsub.f32 %v3906, 1.0
      %v3950 = vsub.f32 %v3908, 1.0
      %v3951 = vsub.f32 %v3910, 1.0
      %v3952 = vsub.f32 %v3912, 1.0
      %v3953 = vsub.f32 %v3914, 1.0
      %v3954 = vsub.f32 %v3916, 1.0
      %v3955 = vsub.f32 %v3918, 1.0
      %v3956 = vsub.f32 %v3920, 1.0
      %v3957 = vsub.f32 %v3922, 1.0
      %v3958 = vsub.f32 %v3924, 1.0
      %v3959 = vsub.f32 %v3926, 1.0
      %v3960 = vsub.f32 %v3928, 1.0
      %v3961 = vmul.f32 %v3929, 1.6732632
      %v3962 = vmul.f32 %v3930, 1.6732632
      %v3963 = vmul.f32 %v3931, 1.6732632
      %v3964 = vmul.f32 %v3932, 1.6732632
      %v3965 = vmul.f32 %v3933, 1.6732632
      %v3966 = vmul.f32 %v3934, 1.6732632
      %v3967 = vmul.f32 %v3935, 1.6732632
      %v3968 = vmul.f32 %v3936, 1.6732632
      %v3969 = vmul.f32 %v3937, 1.6732632
      %v3970 = vmul.f32 %v3938, 1.6732632
      %v3971 = vmul.f32 %v3939, 1.6732632
      %v3972 = vmul.f32 %v3940, 1.6732632
      %v3973 = vmul.f32 %v3941, 1.6732632
      %v3974 = vmul.f32 %v3942, 1.6732632
      %v3975 = vmul.f32 %v3943, 1.6732632
      %v3976 = vmul.f32 %v3944, 1.6732632
      %v3977 = vmul.f32 %v3945, 1.6732632
      %v3978 = vmul.f32 %v3946, 1.6732632
      %v3979 = vmul.f32 %v3947, 1.6732632
      %v3980 = vmul.f32 %v3948, 1.6732632
      %v3981 = vmul.f32 %v3949, 1.6732632
      %v3982 = vmul.f32 %v3950, 1.6732632
      %v3983 = vmul.f32 %v3951, 1.6732632
      %v3984 = vmul.f32 %v3952, 1.6732632
      %v3985 = vmul.f32 %v3953, 1.6732632
      %v3986 = vmul.f32 %v3954, 1.6732632
      %v3987 = vmul.f32 %v3955, 1.6732632
      %v3988 = vmul.f32 %v3956, 1.6732632
      %v3989 = vmul.f32 %v3957, 1.6732632
      %v3990 = vmul.f32 %v3958, 1.6732632
      %v3991 = vmul.f32 %v3959, 1.6732632
      %v3992 = vmul.f32 %v3960, 1.6732632
      %v3993 = vsel %vm3801, %v3769, %v3961
      %v3994 = vsel %vm3802, %v3770, %v3962
      %v3995 = vsel %vm3803, %v3771, %v3963
      %v3996 = vsel %vm3804, %v3772, %v3964
      %v3997 = vsel %vm3805, %v3773, %v3965
      %v3998 = vsel %vm3806, %v3774, %v3966
      %v3999 = vsel %vm3807, %v3775, %v3967
      %v4000 = vsel %vm3808, %v3776, %v3968
      %v4001 = vsel %vm3809, %v3777, %v3969
      %v4002 = vsel %vm3810, %v3778, %v3970
      %v4003 = vsel %vm3811, %v3779, %v3971
      %v4004 = vsel %vm3812, %v3780, %v3972
      %v4005 = vsel %vm3813, %v3781, %v3973
      %v4006 = vsel %vm3814, %v3782, %v3974
      %v4007 = vsel %vm3815, %v3783, %v3975
      %v4008 = vsel %vm3816, %v3784, %v3976
      %v4009 = vsel %vm3817, %v3785, %v3977
      %v4010 = vsel %vm3818, %v3786, %v3978
      %v4011 = vsel %vm3819, %v3787, %v3979
      %v4012 = vsel %vm3820, %v3788, %v3980
      %v4013 = vsel %vm3821, %v3789, %v3981
      %v4014 = vsel %vm3822, %v3790, %v3982
      %v4015 = vsel %vm3823, %v3791, %v3983
      %v4016 = vsel %vm3824, %v3792, %v3984
      %v4017 = vsel %vm3825, %v3793, %v3985
      %v4018 = vsel %vm3826, %v3794, %v3986
      %v4019 = vsel %vm3827, %v3795, %v3987
      %v4020 = vsel %vm3828, %v3796, %v3988
      %v4021 = vsel %vm3829, %v3797, %v3989
      %v4022 = vsel %vm3830, %v3798, %v3990
      %v4023 = vsel %vm3831, %v3799, %v3991
      %v4024 = vsel %vm3832, %v3800, %v3992
      %v4025 = vmul.f32 %v3993, 1.050701
      %v4026 = vmul.f32 %v3994, 1.050701
      %v4027 = vmul.f32 %v3995, 1.050701
      %v4028 = vmul.f32 %v3996, 1.050701
      %v4029 = vmul.f32 %v3997, 1.050701
      %v4030 = vmul.f32 %v3998, 1.050701
      %v4031 = vmul.f32 %v3999, 1.050701
      %v4032 = vmul.f32 %v4000, 1.050701
      %v4033 = vmul.f32 %v4001, 1.050701
      %v4034 = vmul.f32 %v4002, 1.050701
      %v4035 = vmul.f32 %v4003, 1.050701
      %v4036 = vmul.f32 %v4004, 1.050701
      %v4037 = vmul.f32 %v4005, 1.050701
      %v4038 = vmul.f32 %v4006, 1.050701
      %v4039 = vmul.f32 %v4007, 1.050701
      %v4040 = vmul.f32 %v4008, 1.050701
      %v4041 = vmul.f32 %v4009, 1.050701
      %v4042 = vmul.f32 %v4010, 1.050701
      %v4043 = vmul.f32 %v4011, 1.050701
      %v4044 = vmul.f32 %v4012, 1.050701
      %v4045 = vmul.f32 %v4013, 1.050701
      %v4046 = vmul.f32 %v4014, 1.050701
      %v4047 = vmul.f32 %v4015, 1.050701
      %v4048 = vmul.f32 %v4016, 1.050701
      %v4049 = vmul.f32 %v4017, 1.050701
      %v4050 = vmul.f32 %v4018, 1.050701
      %v4051 = vmul.f32 %v4019, 1.050701
      %v4052 = vmul.f32 %v4020, 1.050701
      %v4053 = vmul.f32 %v4021, 1.050701
      %v4054 = vmul.f32 %v4022, 1.050701
      %v4055 = vmul.f32 %v4023, 1.050701
      %v4056 = vmul.f32 %v4024, 1.050701
      %4057 = vst [vmem:[%s191] sm:$0xff] %v4025
      %4058 = vst [vmem:[%s191 + $0x8] sm:$0xff] %v4026
      %4059 = vst [vmem:[%s191 + $0x10] sm:$0xff] %v4027
      %4060 = vst [vmem:[%s191 + $0x18] sm:$0xff] %v4028
      %4061 = vst [vmem:[%s191 + $0x20] sm:$0xff] %v4029
      %4062 = vst [vmem:[%s191 + $0x28] sm:$0xff] %v4030
      %4063 = vst [vmem:[%s191 + $0x30] sm:$0xff] %v4031
      %4064 = vst [vmem:[%s191 + $0x38] sm:$0xff] %v4032
      %4065 = vst [vmem:[%s191 + $0x40] sm:$0xff] %v4033
      %4066 = vst [vmem:[%s191 + $0x48] sm:$0xff] %v4034
      %4067 = vst [vmem:[%s191 + $0x50] sm:$0xff] %v4035
      %4068 = vst [vmem:[%s191 + $0x58] sm:$0xff] %v4036
      %4069 = vst [vmem:[%s191 + $0x60] sm:$0xff] %v4037
      %4070 = vst [vmem:[%s191 + $0x68] sm:$0xff] %v4038
      %4071 = vst [vmem:[%s191 + $0x70] sm:$0xff] %v4039
      %4072 = vst [vmem:[%s191 + $0x78] sm:$0xff] %v4040
      %4073 = vst [vmem:[%s191 + $0x80] sm:$0xff] %v4041
      %4074 = vst [vmem:[%s191 + $0x88] sm:$0xff] %v4042
      %4075 = vst [vmem:[%s191 + $0x90] sm:$0xff] %v4043
      %4076 = vst [vmem:[%s191 + $0x98] sm:$0xff] %v4044
      %4077 = vst [vmem:[%s191 + $0xa0] sm:$0xff] %v4045
      %4078 = vst [vmem:[%s191 + $0xa8] sm:$0xff] %v4046
      %4079 = vst [vmem:[%s191 + $0xb0] sm:$0xff] %v4047
      %4080 = vst [vmem:[%s191 + $0xb8] sm:$0xff] %v4048
      %4081 = vst [vmem:[%s191 + $0xc0] sm:$0xff] %v4049
      %4082 = vst [vmem:[%s191 + $0xc8] sm:$0xff] %v4050
      %4083 = vst [vmem:[%s191 + $0xd0] sm:$0xff] %v4051
      %4084 = vst [vmem:[%s191 + $0xd8] sm:$0xff] %v4052
      %4085 = vst [vmem:[%s191 + $0xe0] sm:$0xff] %v4053
      %4086 = vst [vmem:[%s191 + $0xe8] sm:$0xff] %v4054
      %4087 = vst [vmem:[%s191 + $0xf0] sm:$0xff] %v4055
      %4088 = vst [vmem:[%s191 + $0xf8] sm:$0xff] %v4056
      %p4089 = scmp.lt.s32.totalorder %s17, 1
      %s4090 = scalar_select %p4089, %s17, 1
      %p4091 = scmp.lt.s32.totalorder %s18, 0
      %s4092 = scalar_select %p4091, %s18, 0
      %s4093 = smul.addr %s4090, 32
      %s4094 = sadd.s32 %s4092, %s4093
      %s4095 = smul.addr %s4094, 8
      %s4096 = scalar_lea.vmem %s2, %s4095
      // Predicated region
      $region29: #{conv_module_forward.1} parent=27 // pred_check
        %p4097 = pneg %p99
      $region30: #{conv_module_forward.1} parent=27 // pred_check_branch
        %4099 = sbr.rel (%p4097) target = $region32
      $region31: #{conv_module_forward.1} parent=27 // pred_region
        _
      $region32: #{conv_module_forward.1} parent=27 // pred_fallthru
        _
    $region28: #{conv_module_forward.1} parent=5 // pred_fallthru
      _
    %p4100 = scmp.le.s32.totalorder 2, %s8
    // Predicated region
    $region33: #{conv_module_forward.1} parent=5 // pred_check
      %p4101 = pneg %p4100
    $region34: #{conv_module_forward.1} parent=5 // pred_check_branch
      %4103 = sbr.rel (%p4101) target = $region36
    $region35: #{conv_module_forward.1} parent=5 // pred_region
      %s4104 = ssub.s32 %s8, 2
      // Predicated region
      $region37: #{conv_module_forward.1} parent=35 // pred_check
        %p4105 = pneg %p105
      $region38: #{conv_module_forward.1} parent=35 // pred_check_branch
        %4107 = sbr.rel (%p4105) target = $region40
      $region39: #{conv_module_forward.1} parent=35 // pred_region
        %p4108 = scmp.lt.s32.totalorder %s19, 1
        %s4109 = scalar_select %p4108, %s19, 1
        %p4110 = scmp.lt.s32.totalorder %s20, 0
        %s4111 = scalar_select %p4110, %s20, 0
        %s4112 = smul.addr %s4109, 32
        %s4113 = sadd.s32 %s4111, %s4112
        %s4114 = smul.addr %s4113, 8
        %s4115 = scalar_lea.vmem %s2, %s4114
      $region40: #{conv_module_forward.1} parent=35 // pred_fallthru
        _
    $region36: #{conv_module_forward.1} parent=5 // pred_fallthru
      _
  $region6: #{conv_module_forward.1} parent=0 // loop_footer
    %s12 = sadd.s32 1, %s8
  $region7: #{conv_module_forward.1} parent=0 // loop_footer_branch
    %7 = sbr.rel target = $region3
  $region8: #{conv_module_forward.1} parent=0 // loop_exit
    _

</llo_original>
